<compile_context>
chip_gen: v5e
topology: v5e:2x2
jax: 0.10.0
libtpu: 0.0.40
codegen_flags: <defaults>
</compile_context>

<pallas_src>
import functools

import jax
import jax.numpy as jnp
from jax.experimental import pallas as pl
from jax.experimental.pallas import tpu as pltpu

EPS = 1e-5                       # nn.BatchNorm2d default eps
LANE = 128                       # lane width -> channel padding target
_VMEM_LIMIT = 32 * 1024 * 1024   # explicit scoped-VMEM cap (safe on v5e/v6e/v7x)
_TILE_BUDGET = 20 * 1024 * 1024  # per-grid-step buffer budget (double-buffered)


def _round_up(v, m):
    return ((v + m - 1) // m) * m


# ----------------------------- Pallas kernels ------------------------------ #

def _conv_stats_kernel(x_ref, w_ref, y_ref, s_ref, *, stride, tb, ho, wo):
    """3x3 conv for one batch tile as 9 accumulated MXU matmuls over shifted
    NHWC windows (bf16 operands, f32 accumulation into the output block), plus
    per-channel sum / sum-of-squares partials for the two-pass BatchNorm."""
    rows = tb * ho * wo
    for t in range(9):
        kh, kw = t // 3, t % 3
        p = (kh % stride) * stride + (kw % stride)        # phase (stride 2) / 0
        oa, ob = kh // stride, kw // stride               # in-phase offset
        patch = x_ref[p, :, oa:oa + ho, ob:ob + wo, :]    # (tb, ho, wo, Cin_p)
        patch = patch.reshape(rows, patch.shape[-1])
        contrib = jnp.dot(patch, w_ref[t], preferred_element_type=jnp.float32)
        if t == 0:
            y_ref[...] = contrib
        else:
            y_ref[...] += contrib
    y = y_ref[...]
    s_ref[...] = jnp.concatenate(
        [jnp.sum(y, axis=0, keepdims=True),
         jnp.sum(y * y, axis=0, keepdims=True)], axis=0)[None]


def _bn_act_kernel(y_ref, a_ref, b_ref, o_ref, *, relu):
    """Row-tiled BatchNorm apply with folded scale/shift: out = [relu](y*a + b)."""
    z = y_ref[...] * a_ref[...] + b_ref[...]
    if relu:
        z = jnp.maximum(z, 0.0)
    o_ref[...] = z.astype(o_ref.dtype)


def _bn_residual_relu_kernel(y_ref, a_ref, b_ref, s_ref, o_ref):
    """Row-tiled BatchNorm apply + residual add + ReLU (fused epilogue)."""
    z = y_ref[...] * a_ref[...] + b_ref[...] + s_ref[...]
    o_ref[...] = jnp.maximum(z, 0.0).astype(o_ref.dtype)


# ------------------------------ call wrappers ------------------------------ #

def _pick_batch_tile(n, p, hs, ws, cin_p, ho, wo, cout_p):
    """Largest batch tile that divides N, keeps per-step rows modest and fits
    the (double-buffered) VMEM budget."""
    w_bytes = 9 * cin_p * cout_p * 2

    def fits(tb):
        in_b = p * tb * hs * ws * cin_p * 2          # bf16 input block
        out_b = tb * ho * wo * cout_p * 4            # f32 conv-output block
        stat_b = 2 * cout_p * 4
        return 2 * (in_b + out_b + w_bytes + stat_b) <= _TILE_BUDGET

    divisors = [d for d in range(n, 0, -1) if n % d == 0]
    for tb in divisors:
        if fits(tb) and tb * ho * wo <= 4096:
            return tb
    for tb in divisors:
        if fits(tb):
            return tb
    return 1


def _pick_row_tile(rows):
    for t in (1024, 512, 256, 128, 64, 32, 16, 8):
        if rows % t == 0:
            return t
    return rows


def _conv_stats(src, w_mat, n, ho, wo, stride):
    """src: (phases, N, Hs, Ws, Cin_p) bf16; w_mat: (9, Cin_p, Cout_p) bf16.
    Returns (N*Ho*Wo, Cout_p) f32 conv output and (nb, 2, Cout_p) stat partials."""
    p, _, hs, ws, cin_p = src.shape
    cout_p = w_mat.shape[-1]
    tb = _pick_batch_tile(n, p, hs, ws, cin_p, ho, wo, cout_p)
    nb = n // tb
    rows_b = tb * ho * wo
    kern = functools.partial(_conv_stats_kernel, stride=stride, tb=tb, ho=ho, wo=wo)
    return pl.pallas_call(
        kern,
        out_shape=(jax.ShapeDtypeStruct((n * ho * wo, cout_p), jnp.float32),
                   jax.ShapeDtypeStruct((nb, 2, cout_p), jnp.float32)),
        grid=(nb,),
        in_specs=[
            pl.BlockSpec((p, tb, hs, ws, cin_p), lambda b: (0, b, 0, 0, 0)),
            pl.BlockSpec((9, cin_p, cout_p), lambda b: (0, 0, 0)),   # resident
        ],
        out_specs=(
            pl.BlockSpec((rows_b, cout_p), lambda b: (b, 0)),
            pl.BlockSpec((1, 2, cout_p), lambda b: (b, 0, 0)),
        ),
        compiler_params=pltpu.CompilerParams(
            dimension_semantics=("parallel",),
            vmem_limit_bytes=_VMEM_LIMIT),
    )(src, w_mat)


def _bn_apply(y, a, b, shortcut=None, relu=True, out_dtype=jnp.float32):
    """Row-tiled affine apply: out = [relu](y*a + b [+ shortcut])."""
    rows, c = y.shape
    tr = _pick_row_tile(rows)
    row_spec = pl.BlockSpec((tr, c), lambda i: (i, 0))
    vec_spec = pl.BlockSpec((1, c), lambda i: (0, 0))
    if shortcut is None:
        kern = functools.partial(_bn_act_kernel, relu=relu)
        in_specs = [row_spec, vec_spec, vec_spec]
        args = (y, a, b)
    else:
        kern = _bn_residual_relu_kernel
        in_specs = [row_spec, vec_spec, vec_spec, row_spec]
        args = (y, a, b, shortcut)
    return pl.pallas_call(
        kern,
        out_shape=jax.ShapeDtypeStruct((rows, c), out_dtype),
        grid=(rows // tr,),
        in_specs=in_specs,
        out_specs=row_spec,
        compiler_params=pltpu.CompilerParams(
            dimension_semantics=("parallel",),
            vmem_limit_bytes=_VMEM_LIMIT),
    )(*args)


# ------------------------------ JAX-side glue ------------------------------ #

def _phase_src(x_nhwc, stride, cin_pad):
    """Zero-pad spatially (pad=1) and channel-pad to cin_pad; for stride=2 build
    the 2x2 phase decomposition (same total bytes as the input, no 9x im2col)."""
    n, h, w, c = x_nhwc.shape
    ho = (h - 1) // stride + 1
    wo = (w - 1) // stride + 1
    xp = jnp.pad(x_nhwc.astype(jnp.bfloat16),
                 ((0, 0), (1, 1), (1, 1), (0, cin_pad - c)))
    if stride == 1:
        src = xp[None]
    else:
        assert stride == 2 and h % 2 == 0 and w % 2 == 0
        src = jnp.stack([xp[:, a::2, b::2, :] for a in (0, 1) for b in (0, 1)],
                        axis=0)
    return src, ho, wo


def _prep_weight(w_oihw, cin_pad, cout_pad):
    cout, cin = w_oihw.shape[0], w_oihw.shape[1]
    wm = jnp.transpose(w_oihw, (2, 3, 1, 0)).reshape(9, cin, cout)
    wm = jnp.pad(wm, ((0, 0), (0, cin_pad - cin), (0, cout_pad - cout)))
    return wm.astype(jnp.bfloat16)


def _fold_bn(stats, n_rows, gamma, beta, cout_pad):
    """Fold batch stats + (gamma, beta) into per-channel scale/shift (f32)."""
    s = jnp.sum(stats, axis=0)                                   # (2, Cout_p)
    mean = s[0] / n_rows
    var = jnp.maximum(s[1] / n_rows - mean * mean, 0.0)
    g = jnp.pad(gamma.astype(jnp.float32), (0, cout_pad - gamma.shape[0]))
    b = jnp.pad(beta.astype(jnp.float32), (0, cout_pad - beta.shape[0]))
    a = g * jax.lax.rsqrt(var + EPS)
    return a.reshape(1, -1), (b - mean * a).reshape(1, -1)


@functools.partial(jax.jit, static_argnames=("stride",))
def basic_block_forward(x_nchw, params, stride):
    x = jnp.transpose(x_nchw, (0, 2, 3, 1)).astype(jnp.float32)   # NHWC, f32
    n, h, w, cin = x.shape
    cout = params["w1"].shape[0]
    cin_p = _round_up(cin, LANE)
    cout_p = _round_up(cout, LANE)

    # ---- conv1 + bn1 + relu -------------------------------------------------
    src1, ho, wo = _phase_src(x, stride, cin_p)
    w1m = _prep_weight(params["w1"], cin_p, cout_p)
    y1, s1 = _conv_stats(src1, w1m, n, ho, wo, stride)            # (R, Cout_p) f32
    rows = n * ho * wo
    a1, b1 = _fold_bn(s1, rows, params["g1"], params["b1"], cout_p)
    act1 = _bn_apply(y1, a1, b1, relu=True, out_dtype=jnp.bfloat16)

    # ---- conv2 + bn2 --------------------------------------------------------
    act1_nhwc = act1.reshape(n, ho, wo, cout_p)                   # bf16, lane-padded
    src2, _, _ = _phase_src(act1_nhwc, 1, cout_p)
    w2m = _prep_weight(params["w2"], cout_p, cout_p)
    y2, s2 = _conv_stats(src2, w2m, n, ho, wo, 1)
    a2, b2 = _fold_bn(s2, rows, params["g2"], params["b2"], cout_p)

    # ---- shortcut (AvgPool2d(2) + torch.cat zero-pad, folded into lane pad) --
    if stride != 1 or cin != cout:
        sc = x.reshape(n, h // 2, 2, w // 2, 2, cin).mean(axis=(2, 4))
    else:
        sc = x
    sc = jnp.pad(sc, ((0, 0), (0, 0), (0, 0), (0, cout_p - sc.shape[-1])))
    sc_flat = sc.reshape(rows, cout_p)

    # ---- bn2 apply + residual + relu (fused, row-tiled) ----------------------
    out = _bn_apply(y2, a2, b2, shortcut=sc_flat)                 # (R, Cout_p) f32
    out = out.reshape(n, ho, wo, cout_p)[..., :cout]
    return jnp.transpose(out, (0, 3, 1, 2))                       # NCHW


# ------------------------------ reference ---------------------------------- #

def reference_forward(x, params, stride, mxu_dtype=jnp.float32):
    """Pure-JAX BasicBlock forward.  mxu_dtype=bf16 mimics the kernel's bf16
    MXU operands (f32 accumulation) for a tight numerical comparison."""
    def conv(v, w, s):
        return jax.lax.conv_general_dilated(
            v.astype(mxu_dtype), w.astype(mxu_dtype),
            window_strides=(s, s), padding=((1, 1), (1, 1)),
            dimension_numbers=("NCHW", "OIHW", "NCHW"),
            preferred_element_type=jnp.float32,
            precision=jax.lax.Precision.HIGHEST)

    def bn(v, g, b):
        mean = v.mean(axis=(0, 2, 3), keepdims=True)
        var = jnp.square(v - mean).mean(axis=(0, 2, 3), keepdims=True)
        return (v - mean) * jax.lax.rsqrt(var + EPS) * g.reshape(1, -1, 1, 1) \
            + b.reshape(1, -1, 1, 1)

    cin, cout = x.shape[1], params["w1"].shape[0]
    out = jax.nn.relu(bn(conv(x, params["w1"], stride), params["g1"], params["b1"]))
    out = bn(conv(out, params["w2"], 1), params["g2"], params["b2"])
    if stride != 1 or cin != cout:
        sc = x.reshape(x.shape[0], cin, x.shape[2] // 2, 2,
                       x.shape[3] // 2, 2).mean(axis=(3, 5))
        if cin != cout:
            sc = jnp.concatenate([sc, jnp.zeros_like(sc)], axis=1)
    else:
        sc = x
    return jax.nn.relu(out + sc)


def make_params(key, in_planes, planes):
    k1, k2, k3, k4 = jax.random.split(key, 4)
    return {
        "w1": 0.1 * jax.random.normal(k1, (planes, in_planes, 3, 3), jnp.float32),
        "w2": 0.1 * jax.random.normal(k2, (planes, planes, 3, 3), jnp.float32),
        "g1": 1.0 + 0.1 * jax.random.normal(k3, (planes,), jnp.float32),
        "b1": 0.1 * jax.random.normal(k4, (planes,), jnp.float32),
        "g2": jnp.ones((planes,), jnp.float32),
        "b2": jnp.zeros((planes,), jnp.float32),
    }


if __name__ == "__main__":
    key = jax.random.PRNGKey(0)
    kx, kp1, kp2 = jax.random.split(key, 3)

    x = jax.random.normal(kx, (2, 4, 16, 16), jnp.float32)

    # Case 1: downsampling block (stride=2, 4 -> 8 planes):
    #         AvgPool2d(2) shortcut + channel zero-padding.
    params_a = make_params(kp1, 4, 8)
    out_a = jax.block_until_ready(basic_block_forward(x, params_a, stride=2))
    assert out_a.shape == (2, 8, 8, 8)
    ref_a_bf16 = reference_forward(x, params_a, 2, mxu_dtype=jnp.bfloat16)
    ref_a_f32 = reference_forward(x, params_a, 2)
    assert jnp.allclose(out_a, ref_a_bf16, atol=5e-3, rtol=5e-3)   # tight (same math)
    assert jnp.allclose(out_a, ref_a_f32, atol=1e-1, rtol=1e-1)    # bf16-vs-f32 sanity
    assert float(jnp.mean(jnp.abs(out_a - ref_a_f32))) < 2e-2

    # Case 2: identity-shortcut block (stride=1, 4 -> 4 planes).
    params_b = make_params(kp2, 4, 4)
    out_b = jax.block_until_ready(basic_block_forward(x, params_b, stride=1))
    assert out_b.shape == (2, 4, 16, 16)
    ref_b_bf16 = reference_forward(x, params_b, 1, mxu_dtype=jnp.bfloat16)
    ref_b_f32 = reference_forward(x, params_b, 1)
    assert jnp.allclose(out_b, ref_b_bf16, atol=5e-3, rtol=5e-3)
    assert jnp.allclose(out_b, ref_b_f32, atol=1e-1, rtol=1e-1)
    assert float(jnp.mean(jnp.abs(out_b - ref_b_f32))) < 2e-2

    print("KERNEL_OK")
</pallas_src>

<mosaic_0001>
module attributes {stable_mosaic.version = 11 : i64} {
  func.func @_bn_act_kernel(%arg0: i32, %arg1: memref<128x128xf32, #tpu.memory_space<vmem>>, %arg2: memref<1x128xf32, #tpu.memory_space<vmem>>, %arg3: memref<1x128xf32, #tpu.memory_space<vmem>>, %arg4: memref<128x128xbf16, #tpu.memory_space<vmem>>) attributes {dimension_semantics = [#tpu.dimension_semantics<parallel>], iteration_bounds = array<i64: 1>, scalar_prefetch = 0 : i64, scratch_operands = 0 : i64, tpu.core_type = #tpu.core_type<tc>, window_params = [{transform_indices = @transform_0, window_bounds = array<i64: 128, 128>}, {pipeline_mode = #tpu.pipeline_mode<synchronous>, transform_indices = @transform_1, window_bounds = array<i64: 1, 128>}, {pipeline_mode = #tpu.pipeline_mode<synchronous>, transform_indices = @transform_2, window_bounds = array<i64: 1, 128>}, {transform_indices = @transform_3, window_bounds = array<i64: 128, 128>}]} {
    %c0 = arith.constant 0 : index
    %c0_0 = arith.constant 0 : index
    %0 = vector.load %arg1[%c0, %c0_0] : memref<128x128xf32, #tpu.memory_space<vmem>>, vector<128x128xf32>
    %c0_1 = arith.constant 0 : index
    %c0_2 = arith.constant 0 : index
    %1 = vector.load %arg2[%c0_1, %c0_2] : memref<1x128xf32, #tpu.memory_space<vmem>>, vector<1x128xf32>
    %2 = vector.broadcast %1 : vector<1x128xf32> to vector<128x128xf32>
    %3 = arith.mulf %0, %2 : vector<128x128xf32>
    %c0_3 = arith.constant 0 : index
    %c0_4 = arith.constant 0 : index
    %4 = vector.load %arg3[%c0_3, %c0_4] : memref<1x128xf32, #tpu.memory_space<vmem>>, vector<1x128xf32>
    %5 = vector.broadcast %4 : vector<1x128xf32> to vector<128x128xf32>
    %6 = arith.addf %3, %5 : vector<128x128xf32>
    %cst = arith.constant 0.000000e+00 : f32
    %7 = vector.broadcast %cst : f32 to vector<128x128xf32>
    %8 = arith.maximumf %6, %7 : vector<128x128xf32>
    %9 = arith.truncf %8 : vector<128x128xf32> to vector<128x128xbf16>
    %c0_5 = arith.constant 0 : index
    %c0_6 = arith.constant 0 : index
    %10 = vector.load %arg4[%c0_5, %c0_6] : memref<128x128xbf16, #tpu.memory_space<vmem>>, vector<128x128xbf16>
    tpu.vector_store %arg4[%c0_5, %c0_6], %9 {strides = array<i32>} : memref<128x128xbf16, #tpu.memory_space<vmem>>, vector<128x128xbf16>,
    return
  }
  func.func @transform_0(%arg0: i32) -> (i32, i32) {
    %c0_i32 = arith.constant 0 : i32
    %c0_i32_0 = arith.constant 0 : i32
    return %arg0, %c0_i32 : i32, i32
  }
  func.func @transform_1(%arg0: i32) -> (i32, i32) {
    %c0_i32 = arith.constant 0 : i32
    %c0_i32_0 = arith.constant 0 : i32
    %c0_i32_1 = arith.constant 0 : i32
    return %c0_i32, %c0_i32_0 : i32, i32
  }
  func.func @transform_2(%arg0: i32) -> (i32, i32) {
    %c0_i32 = arith.constant 0 : i32
    %c0_i32_0 = arith.constant 0 : i32
    %c0_i32_1 = arith.constant 0 : i32
    return %c0_i32, %c0_i32_0 : i32, i32
  }
  func.func @transform_3(%arg0: i32) -> (i32, i32) {
    %c0_i32 = arith.constant 0 : i32
    %c0_i32_0 = arith.constant 0 : i32
    return %arg0, %c0_i32 : i32, i32
  }
}

module attributes {stable_mosaic.version = 11 : i64} {
  func.func @_conv_stats_kernel(%arg0: i32, %arg1: memref<4x2x9x9x128xbf16, #tpu.memory_space<vmem>>, %arg2: memref<9x128x128xbf16, #tpu.memory_space<vmem>>, %arg3: memref<128x128xf32, #tpu.memory_space<vmem>>, %arg4: memref<1x2x128xf32, #tpu.memory_space<vmem>>) attributes {dimension_semantics = [#tpu.dimension_semantics<parallel>], iteration_bounds = array<i64: 1>, scalar_prefetch = 0 : i64, scratch_operands = 0 : i64, tpu.core_type = #tpu.core_type<tc>, window_params = [{transform_indices = @transform_0, window_bounds = array<i64: 4, 2, 9, 9, 128>}, {pipeline_mode = #tpu.pipeline_mode<synchronous>, transform_indices = @transform_1, window_bounds = array<i64: 9, 128, 128>}, {transform_indices = @transform_2, window_bounds = array<i64: 128, 128>}, {transform_indices = @transform_3, window_bounds = array<i64: 1, 2, 128>}]} {
    %c0 = arith.constant 0 : index
    %c0_0 = arith.constant 0 : index
    %c0_1 = arith.constant 0 : index
    %c0_2 = arith.constant 0 : index
    %c0_3 = arith.constant 0 : index
    %0 = vector.load %arg1[%c0, %c0_0, %c0_1, %c0_2, %c0_3] : memref<4x2x9x9x128xbf16, #tpu.memory_space<vmem>>, vector<1x2x8x8x128xbf16>
    %1 = vector.shape_cast %0 : vector<1x2x8x8x128xbf16> to vector<2x8x8x128xbf16>
    %2 = vector.shape_cast %1 : vector<2x8x8x128xbf16> to vector<128x128xbf16>
    %c0_4 = arith.constant 0 : index
    %c0_5 = arith.constant 0 : index
    %c0_6 = arith.constant 0 : index
    %3 = vector.load %arg2[%c0_4, %c0_5, %c0_6] : memref<9x128x128xbf16, #tpu.memory_space<vmem>>, vector<1x128x128xbf16>
    %4 = vector.shape_cast %3 : vector<1x128x128xbf16> to vector<128x128xbf16>
    %cst = arith.constant dense<0.000000e+00> : vector<128x128xf32>
    %5 = tpu.matmul %2, %4, %cst {dimension_numbers = #tpu.dot_dimension_numbers<[1], [0], [0], [1], [0, 0, 1, 1], [], []>} : vector<128x128xbf16>, vector<128x128xbf16>, vector<128x128xf32> -> vector<128x128xf32>
    %c0_7 = arith.constant 0 : index
    %c0_8 = arith.constant 0 : index
    %6 = vector.load %arg3[%c0_7, %c0_8] : memref<128x128xf32, #tpu.memory_space<vmem>>, vector<128x128xf32>
    tpu.vector_store %arg3[%c0_7, %c0_8], %5 {strides = array<i32>} : memref<128x128xf32, #tpu.memory_space<vmem>>, vector<128x128xf32>,
    %c1 = arith.constant 1 : index
    %c0_9 = arith.constant 0 : index
    %c0_10 = arith.constant 0 : index
    %c0_11 = arith.constant 0 : index
    %c0_12 = arith.constant 0 : index
    %7 = vector.load %arg1[%c1, %c0_9, %c0_10, %c0_11, %c0_12] : memref<4x2x9x9x128xbf16, #tpu.memory_space<vmem>>, vector<1x2x8x8x128xbf16>
    %8 = vector.shape_cast %7 : vector<1x2x8x8x128xbf16> to vector<2x8x8x128xbf16>
    %9 = vector.shape_cast %8 : vector<2x8x8x128xbf16> to vector<128x128xbf16>
    %c1_13 = arith.constant 1 : index
    %c0_14 = arith.constant 0 : index
    %c0_15 = arith.constant 0 : index
    %10 = vector.load %arg2[%c1_13, %c0_14, %c0_15] : memref<9x128x128xbf16, #tpu.memory_space<vmem>>, vector<1x128x128xbf16>
    %11 = vector.shape_cast %10 : vector<1x128x128xbf16> to vector<128x128xbf16>
    %cst_16 = arith.constant dense<0.000000e+00> : vector<128x128xf32>
    %12 = tpu.matmul %9, %11, %cst_16 {dimension_numbers = #tpu.dot_dimension_numbers<[1], [0], [0], [1], [0, 0, 1, 1], [], []>} : vector<128x128xbf16>, vector<128x128xbf16>, vector<128x128xf32> -> vector<128x128xf32>
    %c0_17 = arith.constant 0 : index
    %c0_18 = arith.constant 0 : index
    %13 = vector.load %arg3[%c0_17, %c0_18] : memref<128x128xf32, #tpu.memory_space<vmem>>, vector<128x128xf32>
    %14 = arith.addf %13, %12 : vector<128x128xf32>
    %c0_19 = arith.constant 0 : index
    %c0_20 = arith.constant 0 : index
    %15 = vector.load %arg3[%c0_19, %c0_20] : memref<128x128xf32, #tpu.memory_space<vmem>>, vector<128x128xf32>
    tpu.vector_store %arg3[%c0_19, %c0_20], %14 {strides = array<i32>} : memref<128x128xf32, #tpu.memory_space<vmem>>, vector<128x128xf32>,
    %c0_21 = arith.constant 0 : index
    %c0_22 = arith.constant 0 : index
    %c0_23 = arith.constant 0 : index
    %c1_24 = arith.constant 1 : index
    %c0_25 = arith.constant 0 : index
    %16 = vector.load %arg1[%c0_21, %c0_22, %c0_23, %c1_24, %c0_25] : memref<4x2x9x9x128xbf16, #tpu.memory_space<vmem>>, vector<1x2x8x8x128xbf16>
    %17 = vector.shape_cast %16 : vector<1x2x8x8x128xbf16> to vector<2x8x8x128xbf16>
    %18 = vector.shape_cast %17 : vector<2x8x8x128xbf16> to vector<128x128xbf16>
    %c2 = arith.constant 2 : index
    %c0_26 = arith.constant 0 : index
    %c0_27 = arith.constant 0 : index
    %19 = vector.load %arg2[%c2, %c0_26, %c0_27] : memref<9x128x128xbf16, #tpu.memory_space<vmem>>, vector<1x128x128xbf16>
    %20 = vector.shape_cast %19 : vector<1x128x128xbf16> to vector<128x128xbf16>
    %cst_28 = arith.constant dense<0.000000e+00> : vector<128x128xf32>
    %21 = tpu.matmul %18, %20, %cst_28 {dimension_numbers = #tpu.dot_dimension_numbers<[1], [0], [0], [1], [0, 0, 1, 1], [], []>} : vector<128x128xbf16>, vector<128x128xbf16>, vector<128x128xf32> -> vector<128x128xf32>
    %c0_29 = arith.constant 0 : index
    %c0_30 = arith.constant 0 : index
    %22 = vector.load %arg3[%c0_29, %c0_30] : memref<128x128xf32, #tpu.memory_space<vmem>>, vector<128x128xf32>
    %23 = arith.addf %22, %21 : vector<128x128xf32>
    %c0_31 = arith.constant 0 : index
    %c0_32 = arith.constant 0 : index
    %24 = vector.load %arg3[%c0_31, %c0_32] : memref<128x128xf32, #tpu.memory_space<vmem>>, vector<128x128xf32>
    tpu.vector_store %arg3[%c0_31, %c0_32], %23 {strides = array<i32>} : memref<128x128xf32, #tpu.memory_space<vmem>>, vector<128x128xf32>,
    %c2_33 = arith.constant 2 : index
    %c0_34 = arith.constant 0 : index
    %c0_35 = arith.constant 0 : index
    %c0_36 = arith.constant 0 : index
    %c0_37 = arith.constant 0 : index
    %25 = vector.load %arg1[%c2_33, %c0_34, %c0_35, %c0_36, %c0_37] : memref<4x2x9x9x128xbf16, #tpu.memory_space<vmem>>, vector<1x2x8x8x128xbf16>
    %26 = vector.shape_cast %25 : vector<1x2x8x8x128xbf16> to vector<2x8x8x128xbf16>
    %27 = vector.shape_cast %26 : vector<2x8x8x128xbf16> to vector<128x128xbf16>
    %c3 = arith.constant 3 : index
    %c0_38 = arith.constant 0 : index
    %c0_39 = arith.constant 0 : index
    %28 = vector.load %arg2[%c3, %c0_38, %c0_39] : memref<9x128x128xbf16, #tpu.memory_space<vmem>>, vector<1x128x128xbf16>
    %29 = vector.shape_cast %28 : vector<1x128x128xbf16> to vector<128x128xbf16>
    %cst_40 = arith.constant dense<0.000000e+00> : vector<128x128xf32>
    %30 = tpu.matmul %27, %29, %cst_40 {dimension_numbers = #tpu.dot_dimension_numbers<[1], [0], [0], [1], [0, 0, 1, 1], [], []>} : vector<128x128xbf16>, vector<128x128xbf16>, vector<128x128xf32> -> vector<128x128xf32>
    %c0_41 = arith.constant 0 : index
    %c0_42 = arith.constant 0 : index
    %31 = vector.load %arg3[%c0_41, %c0_42] : memref<128x128xf32, #tpu.memory_space<vmem>>, vector<128x128xf32>
    %32 = arith.addf %31, %30 : vector<128x128xf32>
    %c0_43 = arith.constant 0 : index
    %c0_44 = arith.constant 0 : index
    %33 = vector.load %arg3[%c0_43, %c0_44] : memref<128x128xf32, #tpu.memory_space<vmem>>, vector<128x128xf32>
    tpu.vector_store %arg3[%c0_43, %c0_44], %32 {strides = array<i32>} : memref<128x128xf32, #tpu.memory_space<vmem>>, vector<128x128xf32>,
    %c3_45 = arith.constant 3 : index
    %c0_46 = arith.constant 0 : index
    %c0_47 = arith.constant 0 : index
    %c0_48 = arith.constant 0 : index
    %c0_49 = arith.constant 0 : index
    %34 = vector.load %arg1[%c3_45, %c0_46, %c0_47, %c0_48, %c0_49] : memref<4x2x9x9x128xbf16, #tpu.memory_space<vmem>>, vector<1x2x8x8x128xbf16>
    %35 = vector.shape_cast %34 : vector<1x2x8x8x128xbf16> to vector<2x8x8x128xbf16>
    %36 = vector.shape_cast %35 : vector<2x8x8x128xbf16> to vector<128x128xbf16>
    %c4 = arith.constant 4 : index
    %c0_50 = arith.constant 0 : index
    %c0_51 = arith.constant 0 : index
    %37 = vector.load %arg2[%c4, %c0_50, %c0_51] : memref<9x128x128xbf16, #tpu.memory_space<vmem>>, vector<1x128x128xbf16>
    %38 = vector.shape_cast %37 : vector<1x128x128xbf16> to vector<128x128xbf16>
    %cst_52 = arith.constant dense<0.000000e+00> : vector<128x128xf32>
    %39 = tpu.matmul %36, %38, %cst_52 {dimension_numbers = #tpu.dot_dimension_numbers<[1], [0], [0], [1], [0, 0, 1, 1], [], []>} : vector<128x128xbf16>, vector<128x128xbf16>, vector<128x128xf32> -> vector<128x128xf32>
    %c0_53 = arith.constant 0 : index
    %c0_54 = arith.constant 0 : index
    %40 = vector.load %arg3[%c0_53, %c0_54] : memref<128x128xf32, #tpu.memory_space<vmem>>, vector<128x128xf32>
    %41 = arith.addf %40, %39 : vector<128x128xf32>
    %c0_55 = arith.constant 0 : index
    %c0_56 = arith.constant 0 : index
    %42 = vector.load %arg3[%c0_55, %c0_56] : memref<128x128xf32, #tpu.memory_space<vmem>>, vector<128x128xf32>
    tpu.vector_store %arg3[%c0_55, %c0_56], %41 {strides = array<i32>} : memref<128x128xf32, #tpu.memory_space<vmem>>, vector<128x128xf32>,
    %c2_57 = arith.constant 2 : index
    %c0_58 = arith.constant 0 : index
    %c0_59 = arith.constant 0 : index
    %c1_60 = arith.constant 1 : index
    %c0_61 = arith.constant 0 : index
    %43 = vector.load %arg1[%c2_57, %c0_58, %c0_59, %c1_60, %c0_61] : memref<4x2x9x9x128xbf16, #tpu.memory_space<vmem>>, vector<1x2x8x8x128xbf16>
    %44 = vector.shape_cast %43 : vector<1x2x8x8x128xbf16> to vector<2x8x8x128xbf16>
    %45 = vector.shape_cast %44 : vector<2x8x8x128xbf16> to vector<128x128xbf16>
    %c5 = arith.constant 5 : index
    %c0_62 = arith.constant 0 : index
    %c0_63 = arith.constant 0 : index
    %46 = vector.load %arg2[%c5, %c0_62, %c0_63] : memref<9x128x128xbf16, #tpu.memory_space<vmem>>, vector<1x128x128xbf16>
    %47 = vector.shape_cast %46 : vector<1x128x128xbf16> to vector<128x128xbf16>
    %cst_64 = arith.constant dense<0.000000e+00> : vector<128x128xf32>
    %48 = tpu.matmul %45, %47, %cst_64 {dimension_numbers = #tpu.dot_dimension_numbers<[1], [0], [0], [1], [0, 0, 1, 1], [], []>} : vector<128x128xbf16>, vector<128x128xbf16>, vector<128x128xf32> -> vector<128x128xf32>
    %c0_65 = arith.constant 0 : index
    %c0_66 = arith.constant 0 : index
    %49 = vector.load %arg3[%c0_65, %c0_66] : memref<128x128xf32, #tpu.memory_space<vmem>>, vector<128x128xf32>
    %50 = arith.addf %49, %48 : vector<128x128xf32>
    %c0_67 = arith.constant 0 : index
    %c0_68 = arith.constant 0 : index
    %51 = vector.load %arg3[%c0_67, %c0_68] : memref<128x128xf32, #tpu.memory_space<vmem>>, vector<128x128xf32>
    tpu.vector_store %arg3[%c0_67, %c0_68], %50 {strides = array<i32>} : memref<128x128xf32, #tpu.memory_space<vmem>>, vector<128x128xf32>,
    %c0_69 = arith.constant 0 : index
    %c0_70 = arith.constant 0 : index
    %c1_71 = arith.constant 1 : index
    %c0_72 = arith.constant 0 : index
    %c0_73 = arith.constant 0 : index
    %52 = vector.load %arg1[%c0_69, %c0_70, %c1_71, %c0_72, %c0_73] : memref<4x2x9x9x128xbf16, #tpu.memory_space<vmem>>, vector<1x2x8x8x128xbf16>
    %53 = vector.shape_cast %52 : vector<1x2x8x8x128xbf16> to vector<2x8x8x128xbf16>
    %54 = vector.shape_cast %53 : vector<2x8x8x128xbf16> to vector<128x128xbf16>
    %c6 = arith.constant 6 : index
    %c0_74 = arith.constant 0 : index
    %c0_75 = arith.constant 0 : index
    %55 = vector.load %arg2[%c6, %c0_74, %c0_75] : memref<9x128x128xbf16, #tpu.memory_space<vmem>>, vector<1x128x128xbf16>
    %56 = vector.shape_cast %55 : vector<1x128x128xbf16> to vector<128x128xbf16>
    %cst_76 = arith.constant dense<0.000000e+00> : vector<128x128xf32>
    %57 = tpu.matmul %54, %56, %cst_76 {dimension_numbers = #tpu.dot_dimension_numbers<[1], [0], [0], [1], [0, 0, 1, 1], [], []>} : vector<128x128xbf16>, vector<128x128xbf16>, vector<128x128xf32> -> vector<128x128xf32>
    %c0_77 = arith.constant 0 : index
    %c0_78 = arith.constant 0 : index
    %58 = vector.load %arg3[%c0_77, %c0_78] : memref<128x128xf32, #tpu.memory_space<vmem>>, vector<128x128xf32>
    %59 = arith.addf %58, %57 : vector<128x128xf32>
    %c0_79 = arith.constant 0 : index
    %c0_80 = arith.constant 0 : index
    %60 = vector.load %arg3[%c0_79, %c0_80] : memref<128x128xf32, #tpu.memory_space<vmem>>, vector<128x128xf32>
    tpu.vector_store %arg3[%c0_79, %c0_80], %59 {strides = array<i32>} : memref<128x128xf32, #tpu.memory_space<vmem>>, vector<128x128xf32>,
    %c1_81 = arith.constant 1 : index
    %c0_82 = arith.constant 0 : index
    %c1_83 = arith.constant 1 : index
    %c0_84 = arith.constant 0 : index
    %c0_85 = arith.constant 0 : index
    %61 = vector.load %arg1[%c1_81, %c0_82, %c1_83, %c0_84, %c0_85] : memref<4x2x9x9x128xbf16, #tpu.memory_space<vmem>>, vector<1x2x8x8x128xbf16>
    %62 = vector.shape_cast %61 : vector<1x2x8x8x128xbf16> to vector<2x8x8x128xbf16>
    %63 = vector.shape_cast %62 : vector<2x8x8x128xbf16> to vector<128x128xbf16>
    %c7 = arith.constant 7 : index
    %c0_86 = arith.constant 0 : index
    %c0_87 = arith.constant 0 : index
    %64 = vector.load %arg2[%c7, %c0_86, %c0_87] : memref<9x128x128xbf16, #tpu.memory_space<vmem>>, vector<1x128x128xbf16>
    %65 = vector.shape_cast %64 : vector<1x128x128xbf16> to vector<128x128xbf16>
    %cst_88 = arith.constant dense<0.000000e+00> : vector<128x128xf32>
    %66 = tpu.matmul %63, %65, %cst_88 {dimension_numbers = #tpu.dot_dimension_numbers<[1], [0], [0], [1], [0, 0, 1, 1], [], []>} : vector<128x128xbf16>, vector<128x128xbf16>, vector<128x128xf32> -> vector<128x128xf32>
    %c0_89 = arith.constant 0 : index
    %c0_90 = arith.constant 0 : index
    %67 = vector.load %arg3[%c0_89, %c0_90] : memref<128x128xf32, #tpu.memory_space<vmem>>, vector<128x128xf32>
    %68 = arith.addf %67, %66 : vector<128x128xf32>
    %c0_91 = arith.constant 0 : index
    %c0_92 = arith.constant 0 : index
    %69 = vector.load %arg3[%c0_91, %c0_92] : memref<128x128xf32, #tpu.memory_space<vmem>>, vector<128x128xf32>
    tpu.vector_store %arg3[%c0_91, %c0_92], %68 {strides = array<i32>} : memref<128x128xf32, #tpu.memory_space<vmem>>, vector<128x128xf32>,
    %c0_93 = arith.constant 0 : index
    %c0_94 = arith.constant 0 : index
    %c1_95 = arith.constant 1 : index
    %c1_96 = arith.constant 1 : index
    %c0_97 = arith.constant 0 : index
    %70 = vector.load %arg1[%c0_93, %c0_94, %c1_95, %c1_96, %c0_97] : memref<4x2x9x9x128xbf16, #tpu.memory_space<vmem>>, vector<1x2x8x8x128xbf16>
    %71 = vector.shape_cast %70 : vector<1x2x8x8x128xbf16> to vector<2x8x8x128xbf16>
    %72 = vector.shape_cast %71 : vector<2x8x8x128xbf16> to vector<128x128xbf16>
    %c8 = arith.constant 8 : index
    %c0_98 = arith.constant 0 : index
    %c0_99 = arith.constant 0 : index
    %73 = vector.load %arg2[%c8, %c0_98, %c0_99] : memref<9x128x128xbf16, #tpu.memory_space<vmem>>, vector<1x128x128xbf16>
    %74 = vector.shape_cast %73 : vector<1x128x128xbf16> to vector<128x128xbf16>
    %cst_100 = arith.constant dense<0.000000e+00> : vector<128x128xf32>
    %75 = tpu.matmul %72, %74, %cst_100 {dimension_numbers = #tpu.dot_dimension_numbers<[1], [0], [0], [1], [0, 0, 1, 1], [], []>} : vector<128x128xbf16>, vector<128x128xbf16>, vector<128x128xf32> -> vector<128x128xf32>
    %c0_101 = arith.constant 0 : index
    %c0_102 = arith.constant 0 : index
    %76 = vector.load %arg3[%c0_101, %c0_102] : memref<128x128xf32, #tpu.memory_space<vmem>>, vector<128x128xf32>
    %77 = arith.addf %76, %75 : vector<128x128xf32>
    %c0_103 = arith.constant 0 : index
    %c0_104 = arith.constant 0 : index
    %78 = vector.load %arg3[%c0_103, %c0_104] : memref<128x128xf32, #tpu.memory_space<vmem>>, vector<128x128xf32>
    tpu.vector_store %arg3[%c0_103, %c0_104], %77 {strides = array<i32>} : memref<128x128xf32, #tpu.memory_space<vmem>>, vector<128x128xf32>,
    %c0_105 = arith.constant 0 : index
    %c0_106 = arith.constant 0 : index
    %79 = vector.load %arg3[%c0_105, %c0_106] : memref<128x128xf32, #tpu.memory_space<vmem>>, vector<128x128xf32>
    %cst_107 = arith.constant dense<0.000000e+00> : vector<128xf32>
    %80 = vector.multi_reduction <add>, %79, %cst_107 [0] : vector<128x128xf32> to vector<128xf32>
    %81 = vector.shape_cast %80 : vector<128xf32> to vector<1x128xf32>
    %82 = arith.mulf %79, %79 : vector<128x128xf32>
    %cst_108 = arith.constant dense<0.000000e+00> : vector<128xf32>
    %83 = vector.multi_reduction <add>, %82, %cst_108 [0] : vector<128x128xf32> to vector<128xf32>
    %84 = vector.shape_cast %83 : vector<128xf32> to vector<1x128xf32>
    %85 = tpu.concatenate %81, %84 in 0 : vector<1x128xf32>, vector<1x128xf32> -> vector<2x128xf32>
    %86 = vector.shape_cast %85 : vector<2x128xf32> to vector<1x2x128xf32>
    %c0_109 = arith.constant 0 : index
    %c0_110 = arith.constant 0 : index
    %c0_111 = arith.constant 0 : index
    %87 = vector.load %arg4[%c0_109, %c0_110, %c0_111] : memref<1x2x128xf32, #tpu.memory_space<vmem>>, vector<1x2x128xf32>
    tpu.vector_store %arg4[%c0_109, %c0_110, %c0_111], %86 {strides = array<i32>} : memref<1x2x128xf32, #tpu.memory_space<vmem>>, vector<1x2x128xf32>,
    return
  }
  func.func @transform_0(%arg0: i32) -> (i32, i32, i32, i32, i32) {
    %c0_i32 = arith.constant 0 : i32
    %c0_i32_0 = arith.constant 0 : i32
    %c0_i32_1 = arith.constant 0 : i32
    %c0_i32_2 = arith.constant 0 : i32
    %c0_i32_3 = arith.constant 0 : i32
    return %c0_i32, %arg0, %c0_i32_0, %c0_i32_1, %c0_i32_2 : i32, i32, i32, i32, i32
  }
  func.func @transform_1(%arg0: i32) -> (i32, i32, i32) {
    %c0_i32 = arith.constant 0 : i32
    %c0_i32_0 = arith.constant 0 : i32
    %c0_i32_1 = arith.constant 0 : i32
    %c0_i32_2 = arith.constant 0 : i32
    return %c0_i32, %c0_i32_0, %c0_i32_1 : i32, i32, i32
  }
  func.func @transform_2(%arg0: i32) -> (i32, i32) {
    %c0_i32 = arith.constant 0 : i32
    %c0_i32_0 = arith.constant 0 : i32
    return %arg0, %c0_i32 : i32, i32
  }
  func.func @transform_3(%arg0: i32) -> (i32, i32, i32) {
    %c0_i32 = arith.constant 0 : i32
    %c0_i32_0 = arith.constant 0 : i32
    %c0_i32_1 = arith.constant 0 : i32
    return %arg0, %c0_i32, %c0_i32_0 : i32, i32, i32
  }
}

module attributes {stable_mosaic.version = 11 : i64} {
  func.func @_conv_stats_kernel(%arg0: i32, %arg1: memref<1x2x10x10x128xbf16, #tpu.memory_space<vmem>>, %arg2: memref<9x128x128xbf16, #tpu.memory_space<vmem>>, %arg3: memref<128x128xf32, #tpu.memory_space<vmem>>, %arg4: memref<1x2x128xf32, #tpu.memory_space<vmem>>) attributes {dimension_semantics = [#tpu.dimension_semantics<parallel>], iteration_bounds = array<i64: 1>, scalar_prefetch = 0 : i64, scratch_operands = 0 : i64, tpu.core_type = #tpu.core_type<tc>, window_params = [{transform_indices = @transform_0, window_bounds = array<i64: 1, 2, 10, 10, 128>}, {pipeline_mode = #tpu.pipeline_mode<synchronous>, transform_indices = @transform_1, window_bounds = array<i64: 9, 128, 128>}, {transform_indices = @transform_2, window_bounds = array<i64: 128, 128>}, {transform_indices = @transform_3, window_bounds = array<i64: 1, 2, 128>}]} {
    %c0 = arith.constant 0 : index
    %c0_0 = arith.constant 0 : index
    %c0_1 = arith.constant 0 : index
    %c0_2 = arith.constant 0 : index
    %c0_3 = arith.constant 0 : index
    %0 = vector.load %arg1[%c0, %c0_0, %c0_1, %c0_2, %c0_3] : memref<1x2x10x10x128xbf16, #tpu.memory_space<vmem>>, vector<1x2x8x8x128xbf16>
    %1 = vector.shape_cast %0 : vector<1x2x8x8x128xbf16> to vector<2x8x8x128xbf16>
    %2 = vector.shape_cast %1 : vector<2x8x8x128xbf16> to vector<128x128xbf16>
    %c0_4 = arith.constant 0 : index
    %c0_5 = arith.constant 0 : index
    %c0_6 = arith.constant 0 : index
    %3 = vector.load %arg2[%c0_4, %c0_5, %c0_6] : memref<9x128x128xbf16, #tpu.memory_space<vmem>>, vector<1x128x128xbf16>
    %4 = vector.shape_cast %3 : vector<1x128x128xbf16> to vector<128x128xbf16>
    %cst = arith.constant dense<0.000000e+00> : vector<128x128xf32>
    %5 = tpu.matmul %2, %4, %cst {dimension_numbers = #tpu.dot_dimension_numbers<[1], [0], [0], [1], [0, 0, 1, 1], [], []>} : vector<128x128xbf16>, vector<128x128xbf16>, vector<128x128xf32> -> vector<128x128xf32>
    %c0_7 = arith.constant 0 : index
    %c0_8 = arith.constant 0 : index
    %6 = vector.load %arg3[%c0_7, %c0_8] : memref<128x128xf32, #tpu.memory_space<vmem>>, vector<128x128xf32>
    tpu.vector_store %arg3[%c0_7, %c0_8], %5 {strides = array<i32>} : memref<128x128xf32, #tpu.memory_space<vmem>>, vector<128x128xf32>,
    %c0_9 = arith.constant 0 : index
    %c0_10 = arith.constant 0 : index
    %c0_11 = arith.constant 0 : index
    %c1 = arith.constant 1 : index
    %c0_12 = arith.constant 0 : index
    %7 = vector.load %arg1[%c0_9, %c0_10, %c0_11, %c1, %c0_12] : memref<1x2x10x10x128xbf16, #tpu.memory_space<vmem>>, vector<1x2x8x8x128xbf16>
    %8 = vector.shape_cast %7 : vector<1x2x8x8x128xbf16> to vector<2x8x8x128xbf16>
    %9 = vector.shape_cast %8 : vector<2x8x8x128xbf16> to vector<128x128xbf16>
    %c1_13 = arith.constant 1 : index
    %c0_14 = arith.constant 0 : index
    %c0_15 = arith.constant 0 : index
    %10 = vector.load %arg2[%c1_13, %c0_14, %c0_15] : memref<9x128x128xbf16, #tpu.memory_space<vmem>>, vector<1x128x128xbf16>
    %11 = vector.shape_cast %10 : vector<1x128x128xbf16> to vector<128x128xbf16>
    %cst_16 = arith.constant dense<0.000000e+00> : vector<128x128xf32>
    %12 = tpu.matmul %9, %11, %cst_16 {dimension_numbers = #tpu.dot_dimension_numbers<[1], [0], [0], [1], [0, 0, 1, 1], [], []>} : vector<128x128xbf16>, vector<128x128xbf16>, vector<128x128xf32> -> vector<128x128xf32>
    %c0_17 = arith.constant 0 : index
    %c0_18 = arith.constant 0 : index
    %13 = vector.load %arg3[%c0_17, %c0_18] : memref<128x128xf32, #tpu.memory_space<vmem>>, vector<128x128xf32>
    %14 = arith.addf %13, %12 : vector<128x128xf32>
    %c0_19 = arith.constant 0 : index
    %c0_20 = arith.constant 0 : index
    %15 = vector.load %arg3[%c0_19, %c0_20] : memref<128x128xf32, #tpu.memory_space<vmem>>, vector<128x128xf32>
    tpu.vector_store %arg3[%c0_19, %c0_20], %14 {strides = array<i32>} : memref<128x128xf32, #tpu.memory_space<vmem>>, vector<128x128xf32>,
    %c0_21 = arith.constant 0 : index
    %c0_22 = arith.constant 0 : index
    %c0_23 = arith.constant 0 : index
    %c2 = arith.constant 2 : index
    %c0_24 = arith.constant 0 : index
    %16 = vector.load %arg1[%c0_21, %c0_22, %c0_23, %c2, %c0_24] : memref<1x2x10x10x128xbf16, #tpu.memory_space<vmem>>, vector<1x2x8x8x128xbf16>
    %17 = vector.shape_cast %16 : vector<1x2x8x8x128xbf16> to vector<2x8x8x128xbf16>
    %18 = vector.shape_cast %17 : vector<2x8x8x128xbf16> to vector<128x128xbf16>
    %c2_25 = arith.constant 2 : index
    %c0_26 = arith.constant 0 : index
    %c0_27 = arith.constant 0 : index
    %19 = vector.load %arg2[%c2_25, %c0_26, %c0_27] : memref<9x128x128xbf16, #tpu.memory_space<vmem>>, vector<1x128x128xbf16>
    %20 = vector.shape_cast %19 : vector<1x128x128xbf16> to vector<128x128xbf16>
    %cst_28 = arith.constant dense<0.000000e+00> : vector<128x128xf32>
    %21 = tpu.matmul %18, %20, %cst_28 {dimension_numbers = #tpu.dot_dimension_numbers<[1], [0], [0], [1], [0, 0, 1, 1], [], []>} : vector<128x128xbf16>, vector<128x128xbf16>, vector<128x128xf32> -> vector<128x128xf32>
    %c0_29 = arith.constant 0 : index
    %c0_30 = arith.constant 0 : index
    %22 = vector.load %arg3[%c0_29, %c0_30] : memref<128x128xf32, #tpu.memory_space<vmem>>, vector<128x128xf32>
    %23 = arith.addf %22, %21 : vector<128x128xf32>
    %c0_31 = arith.constant 0 : index
    %c0_32 = arith.constant 0 : index
    %24 = vector.load %arg3[%c0_31, %c0_32] : memref<128x128xf32, #tpu.memory_space<vmem>>, vector<128x128xf32>
    tpu.vector_store %arg3[%c0_31, %c0_32], %23 {strides = array<i32>} : memref<128x128xf32, #tpu.memory_space<vmem>>, vector<128x128xf32>,
    %c0_33 = arith.constant 0 : index
    %c0_34 = arith.constant 0 : index
    %c1_35 = arith.constant 1 : index
    %c0_36 = arith.constant 0 : index
    %c0_37 = arith.constant 0 : index
    %25 = vector.load %arg1[%c0_33, %c0_34, %c1_35, %c0_36, %c0_37] : memref<1x2x10x10x128xbf16, #tpu.memory_space<vmem>>, vector<1x2x8x8x128xbf16>
    %26 = vector.shape_cast %25 : vector<1x2x8x8x128xbf16> to vector<2x8x8x128xbf16>
    %27 = vector.shape_cast %26 : vector<2x8x8x128xbf16> to vector<128x128xbf16>
    %c3 = arith.constant 3 : index
    %c0_38 = arith.constant 0 : index
    %c0_39 = arith.constant 0 : index
    %28 = vector.load %arg2[%c3, %c0_38, %c0_39] : memref<9x128x128xbf16, #tpu.memory_space<vmem>>, vector<1x128x128xbf16>
    %29 = vector.shape_cast %28 : vector<1x128x128xbf16> to vector<128x128xbf16>
    %cst_40 = arith.constant dense<0.000000e+00> : vector<128x128xf32>
    %30 = tpu.matmul %27, %29, %cst_40 {dimension_numbers = #tpu.dot_dimension_numbers<[1], [0], [0], [1], [0, 0, 1, 1], [], []>} : vector<128x128xbf16>, vector<128x128xbf16>, vector<128x128xf32> -> vector<128x128xf32>
    %c0_41 = arith.constant 0 : index
    %c0_42 = arith.constant 0 : index
    %31 = vector.load %arg3[%c0_41, %c0_42] : memref<128x128xf32, #tpu.memory_space<vmem>>, vector<128x128xf32>
    %32 = arith.addf %31, %30 : vector<128x128xf32>
    %c0_43 = arith.constant 0 : index
    %c0_44 = arith.constant 0 : index
    %33 = vector.load %arg3[%c0_43, %c0_44] : memref<128x128xf32, #tpu.memory_space<vmem>>, vector<128x128xf32>
    tpu.vector_store %arg3[%c0_43, %c0_44], %32 {strides = array<i32>} : memref<128x128xf32, #tpu.memory_space<vmem>>, vector<128x128xf32>,
    %c0_45 = arith.constant 0 : index
    %c0_46 = arith.constant 0 : index
    %c1_47 = arith.constant 1 : index
    %c1_48 = arith.constant 1 : index
    %c0_49 = arith.constant 0 : index
    %34 = vector.load %arg1[%c0_45, %c0_46, %c1_47, %c1_48, %c0_49] : memref<1x2x10x10x128xbf16, #tpu.memory_space<vmem>>, vector<1x2x8x8x128xbf16>
    %35 = vector.shape_cast %34 : vector<1x2x8x8x128xbf16> to vector<2x8x8x128xbf16>
    %36 = vector.shape_cast %35 : vector<2x8x8x128xbf16> to vector<128x128xbf16>
    %c4 = arith.constant 4 : index
    %c0_50 = arith.constant 0 : index
    %c0_51 = arith.constant 0 : index
    %37 = vector.load %arg2[%c4, %c0_50, %c0_51] : memref<9x128x128xbf16, #tpu.memory_space<vmem>>, vector<1x128x128xbf16>
    %38 = vector.shape_cast %37 : vector<1x128x128xbf16> to vector<128x128xbf16>
    %cst_52 = arith.constant dense<0.000000e+00> : vector<128x128xf32>
    %39 = tpu.matmul %36, %38, %cst_52 {dimension_numbers = #tpu.dot_dimension_numbers<[1], [0], [0], [1], [0, 0, 1, 1], [], []>} : vector<128x128xbf16>, vector<128x128xbf16>, vector<128x128xf32> -> vector<128x128xf32>
    %c0_53 = arith.constant 0 : index
    %c0_54 = arith.constant 0 : index
    %40 = vector.load %arg3[%c0_53, %c0_54] : memref<128x128xf32, #tpu.memory_space<vmem>>, vector<128x128xf32>
    %41 = arith.addf %40, %39 : vector<128x128xf32>
    %c0_55 = arith.constant 0 : index
    %c0_56 = arith.constant 0 : index
    %42 = vector.load %arg3[%c0_55, %c0_56] : memref<128x128xf32, #tpu.memory_space<vmem>>, vector<128x128xf32>
    tpu.vector_store %arg3[%c0_55, %c0_56], %41 {strides = array<i32>} : memref<128x128xf32, #tpu.memory_space<vmem>>, vector<128x128xf32>,
    %c0_57 = arith.constant 0 : index
    %c0_58 = arith.constant 0 : index
    %c1_59 = arith.constant 1 : index
    %c2_60 = arith.constant 2 : index
    %c0_61 = arith.constant 0 : index
    %43 = vector.load %arg1[%c0_57, %c0_58, %c1_59, %c2_60, %c0_61] : memref<1x2x10x10x128xbf16, #tpu.memory_space<vmem>>, vector<1x2x8x8x128xbf16>
    %44 = vector.shape_cast %43 : vector<1x2x8x8x128xbf16> to vector<2x8x8x128xbf16>
    %45 = vector.shape_cast %44 : vector<2x8x8x128xbf16> to vector<128x128xbf16>
    %c5 = arith.constant 5 : index
    %c0_62 = arith.constant 0 : index
    %c0_63 = arith.constant 0 : index
    %46 = vector.load %arg2[%c5, %c0_62, %c0_63] : memref<9x128x128xbf16, #tpu.memory_space<vmem>>, vector<1x128x128xbf16>
    %47 = vector.shape_cast %46 : vector<1x128x128xbf16> to vector<128x128xbf16>
    %cst_64 = arith.constant dense<0.000000e+00> : vector<128x128xf32>
    %48 = tpu.matmul %45, %47, %cst_64 {dimension_numbers = #tpu.dot_dimension_numbers<[1], [0], [0], [1], [0, 0, 1, 1], [], []>} : vector<128x128xbf16>, vector<128x128xbf16>, vector<128x128xf32> -> vector<128x128xf32>
    %c0_65 = arith.constant 0 : index
    %c0_66 = arith.constant 0 : index
    %49 = vector.load %arg3[%c0_65, %c0_66] : memref<128x128xf32, #tpu.memory_space<vmem>>, vector<128x128xf32>
    %50 = arith.addf %49, %48 : vector<128x128xf32>
    %c0_67 = arith.constant 0 : index
    %c0_68 = arith.constant 0 : index
    %51 = vector.load %arg3[%c0_67, %c0_68] : memref<128x128xf32, #tpu.memory_space<vmem>>, vector<128x128xf32>
    tpu.vector_store %arg3[%c0_67, %c0_68], %50 {strides = array<i32>} : memref<128x128xf32, #tpu.memory_space<vmem>>, vector<128x128xf32>,
    %c0_69 = arith.constant 0 : index
    %c0_70 = arith.constant 0 : index
    %c2_71 = arith.constant 2 : index
    %c0_72 = arith.constant 0 : index
    %c0_73 = arith.constant 0 : index
    %52 = vector.load %arg1[%c0_69, %c0_70, %c2_71, %c0_72, %c0_73] : memref<1x2x10x10x128xbf16, #tpu.memory_space<vmem>>, vector<1x2x8x8x128xbf16>
    %53 = vector.shape_cast %52 : vector<1x2x8x8x128xbf16> to vector<2x8x8x128xbf16>
    %54 = vector.shape_cast %53 : vector<2x8x8x128xbf16> to vector<128x128xbf16>
    %c6 = arith.constant 6 : index
    %c0_74 = arith.constant 0 : index
    %c0_75 = arith.constant 0 : index
    %55 = vector.load %arg2[%c6, %c0_74, %c0_75] : memref<9x128x128xbf16, #tpu.memory_space<vmem>>, vector<1x128x128xbf16>
    %56 = vector.shape_cast %55 : vector<1x128x128xbf16> to vector<128x128xbf16>
    %cst_76 = arith.constant dense<0.000000e+00> : vector<128x128xf32>
    %57 = tpu.matmul %54, %56, %cst_76 {dimension_numbers = #tpu.dot_dimension_numbers<[1], [0], [0], [1], [0, 0, 1, 1], [], []>} : vector<128x128xbf16>, vector<128x128xbf16>, vector<128x128xf32> -> vector<128x128xf32>
    %c0_77 = arith.constant 0 : index
    %c0_78 = arith.constant 0 : index
    %58 = vector.load %arg3[%c0_77, %c0_78] : memref<128x128xf32, #tpu.memory_space<vmem>>, vector<128x128xf32>
    %59 = arith.addf %58, %57 : vector<128x128xf32>
    %c0_79 = arith.constant 0 : index
    %c0_80 = arith.constant 0 : index
    %60 = vector.load %arg3[%c0_79, %c0_80] : memref<128x128xf32, #tpu.memory_space<vmem>>, vector<128x128xf32>
    tpu.vector_store %arg3[%c0_79, %c0_80], %59 {strides = array<i32>} : memref<128x128xf32, #tpu.memory_space<vmem>>, vector<128x128xf32>,
    %c0_81 = arith.constant 0 : index
    %c0_82 = arith.constant 0 : index
    %c2_83 = arith.constant 2 : index
    %c1_84 = arith.constant 1 : index
    %c0_85 = arith.constant 0 : index
    %61 = vector.load %arg1[%c0_81, %c0_82, %c2_83, %c1_84, %c0_85] : memref<1x2x10x10x128xbf16, #tpu.memory_space<vmem>>, vector<1x2x8x8x128xbf16>
    %62 = vector.shape_cast %61 : vector<1x2x8x8x128xbf16> to vector<2x8x8x128xbf16>
    %63 = vector.shape_cast %62 : vector<2x8x8x128xbf16> to vector<128x128xbf16>
    %c7 = arith.constant 7 : index
    %c0_86 = arith.constant 0 : index
    %c0_87 = arith.constant 0 : index
    %64 = vector.load %arg2[%c7, %c0_86, %c0_87] : memref<9x128x128xbf16, #tpu.memory_space<vmem>>, vector<1x128x128xbf16>
    %65 = vector.shape_cast %64 : vector<1x128x128xbf16> to vector<128x128xbf16>
    %cst_88 = arith.constant dense<0.000000e+00> : vector<128x128xf32>
    %66 = tpu.matmul %63, %65, %cst_88 {dimension_numbers = #tpu.dot_dimension_numbers<[1], [0], [0], [1], [0, 0, 1, 1], [], []>} : vector<128x128xbf16>, vector<128x128xbf16>, vector<128x128xf32> -> vector<128x128xf32>
    %c0_89 = arith.constant 0 : index
    %c0_90 = arith.constant 0 : index
    %67 = vector.load %arg3[%c0_89, %c0_90] : memref<128x128xf32, #tpu.memory_space<vmem>>, vector<128x128xf32>
    %68 = arith.addf %67, %66 : vector<128x128xf32>
    %c0_91 = arith.constant 0 : index
    %c0_92 = arith.constant 0 : index
    %69 = vector.load %arg3[%c0_91, %c0_92] : memref<128x128xf32, #tpu.memory_space<vmem>>, vector<128x128xf32>
    tpu.vector_store %arg3[%c0_91, %c0_92], %68 {strides = array<i32>} : memref<128x128xf32, #tpu.memory_space<vmem>>, vector<128x128xf32>,
    %c0_93 = arith.constant 0 : index
    %c0_94 = arith.constant 0 : index
    %c2_95 = arith.constant 2 : index
    %c2_96 = arith.constant 2 : index
    %c0_97 = arith.constant 0 : index
    %70 = vector.load %arg1[%c0_93, %c0_94, %c2_95, %c2_96, %c0_97] : memref<1x2x10x10x128xbf16, #tpu.memory_space<vmem>>, vector<1x2x8x8x128xbf16>
    %71 = vector.shape_cast %70 : vector<1x2x8x8x128xbf16> to vector<2x8x8x128xbf16>
    %72 = vector.shape_cast %71 : vector<2x8x8x128xbf16> to vector<128x128xbf16>
    %c8 = arith.constant 8 : index
    %c0_98 = arith.constant 0 : index
    %c0_99 = arith.constant 0 : index
    %73 = vector.load %arg2[%c8, %c0_98, %c0_99] : memref<9x128x128xbf16, #tpu.memory_space<vmem>>, vector<1x128x128xbf16>
    %74 = vector.shape_cast %73 : vector<1x128x128xbf16> to vector<128x128xbf16>
    %cst_100 = arith.constant dense<0.000000e+00> : vector<128x128xf32>
    %75 = tpu.matmul %72, %74, %cst_100 {dimension_numbers = #tpu.dot_dimension_numbers<[1], [0], [0], [1], [0, 0, 1, 1], [], []>} : vector<128x128xbf16>, vector<128x128xbf16>, vector<128x128xf32> -> vector<128x128xf32>
    %c0_101 = arith.constant 0 : index
    %c0_102 = arith.constant 0 : index
    %76 = vector.load %arg3[%c0_101, %c0_102] : memref<128x128xf32, #tpu.memory_space<vmem>>, vector<128x128xf32>
    %77 = arith.addf %76, %75 : vector<128x128xf32>
    %c0_103 = arith.constant 0 : index
    %c0_104 = arith.constant 0 : index
    %78 = vector.load %arg3[%c0_103, %c0_104] : memref<128x128xf32, #tpu.memory_space<vmem>>, vector<128x128xf32>
    tpu.vector_store %arg3[%c0_103, %c0_104], %77 {strides = array<i32>} : memref<128x128xf32, #tpu.memory_space<vmem>>, vector<128x128xf32>,
    %c0_105 = arith.constant 0 : index
    %c0_106 = arith.constant 0 : index
    %79 = vector.load %arg3[%c0_105, %c0_106] : memref<128x128xf32, #tpu.memory_space<vmem>>, vector<128x128xf32>
    %cst_107 = arith.constant dense<0.000000e+00> : vector<128xf32>
    %80 = vector.multi_reduction <add>, %79, %cst_107 [0] : vector<128x128xf32> to vector<128xf32>
    %81 = vector.shape_cast %80 : vector<128xf32> to vector<1x128xf32>
    %82 = arith.mulf %79, %79 : vector<128x128xf32>
    %cst_108 = arith.constant dense<0.000000e+00> : vector<128xf32>
    %83 = vector.multi_reduction <add>, %82, %cst_108 [0] : vector<128x128xf32> to vector<128xf32>
    %84 = vector.shape_cast %83 : vector<128xf32> to vector<1x128xf32>
    %85 = tpu.concatenate %81, %84 in 0 : vector<1x128xf32>, vector<1x128xf32> -> vector<2x128xf32>
    %86 = vector.shape_cast %85 : vector<2x128xf32> to vector<1x2x128xf32>
    %c0_109 = arith.constant 0 : index
    %c0_110 = arith.constant 0 : index
    %c0_111 = arith.constant 0 : index
    %87 = vector.load %arg4[%c0_109, %c0_110, %c0_111] : memref<1x2x128xf32, #tpu.memory_space<vmem>>, vector<1x2x128xf32>
    tpu.vector_store %arg4[%c0_109, %c0_110, %c0_111], %86 {strides = array<i32>} : memref<1x2x128xf32, #tpu.memory_space<vmem>>, vector<1x2x128xf32>,
    return
  }
  func.func @transform_0(%arg0: i32) -> (i32, i32, i32, i32, i32) {
    %c0_i32 = arith.constant 0 : i32
    %c0_i32_0 = arith.constant 0 : i32
    %c0_i32_1 = arith.constant 0 : i32
    %c0_i32_2 = arith.constant 0 : i32
    %c0_i32_3 = arith.constant 0 : i32
    return %c0_i32, %arg0, %c0_i32_0, %c0_i32_1, %c0_i32_2 : i32, i32, i32, i32, i32
  }
  func.func @transform_1(%arg0: i32) -> (i32, i32, i32) {
    %c0_i32 = arith.constant 0 : i32
    %c0_i32_0 = arith.constant 0 : i32
    %c0_i32_1 = arith.constant 0 : i32
    %c0_i32_2 = arith.constant 0 : i32
    return %c0_i32, %c0_i32_0, %c0_i32_1 : i32, i32, i32
  }
  func.func @transform_2(%arg0: i32) -> (i32, i32) {
    %c0_i32 = arith.constant 0 : i32
    %c0_i32_0 = arith.constant 0 : i32
    return %arg0, %c0_i32 : i32, i32
  }
  func.func @transform_3(%arg0: i32) -> (i32, i32, i32) {
    %c0_i32 = arith.constant 0 : i32
    %c0_i32_0 = arith.constant 0 : i32
    %c0_i32_1 = arith.constant 0 : i32
    return %arg0, %c0_i32, %c0_i32_0 : i32, i32, i32
  }
}

module attributes {stable_mosaic.version = 11 : i64} {
  func.func @_bn_residual_relu_kernel(%arg0: i32, %arg1: memref<128x128xf32, #tpu.memory_space<vmem>>, %arg2: memref<1x128xf32, #tpu.memory_space<vmem>>, %arg3: memref<1x128xf32, #tpu.memory_space<vmem>>, %arg4: memref<128x128xf32, #tpu.memory_space<vmem>>, %arg5: memref<128x128xf32, #tpu.memory_space<vmem>>) attributes {dimension_semantics = [#tpu.dimension_semantics<parallel>], iteration_bounds = array<i64: 1>, scalar_prefetch = 0 : i64, scratch_operands = 0 : i64, tpu.core_type = #tpu.core_type<tc>, window_params = [{transform_indices = @transform_0, window_bounds = array<i64: 128, 128>}, {pipeline_mode = #tpu.pipeline_mode<synchronous>, transform_indices = @transform_1, window_bounds = array<i64: 1, 128>}, {pipeline_mode = #tpu.pipeline_mode<synchronous>, transform_indices = @transform_2, window_bounds = array<i64: 1, 128>}, {transform_indices = @transform_3, window_bounds = array<i64: 128, 128>}, {transform_indices = @transform_4, window_bounds = array<i64: 128, 128>}]} {
    %c0 = arith.constant 0 : index
    %c0_0 = arith.constant 0 : index
    %0 = vector.load %arg1[%c0, %c0_0] : memref<128x128xf32, #tpu.memory_space<vmem>>, vector<128x128xf32>
    %c0_1 = arith.constant 0 : index
    %c0_2 = arith.constant 0 : index
    %1 = vector.load %arg2[%c0_1, %c0_2] : memref<1x128xf32, #tpu.memory_space<vmem>>, vector<1x128xf32>
    %2 = vector.broadcast %1 : vector<1x128xf32> to vector<128x128xf32>
    %3 = arith.mulf %0, %2 : vector<128x128xf32>
    %c0_3 = arith.constant 0 : index
    %c0_4 = arith.constant 0 : index
    %4 = vector.load %arg3[%c0_3, %c0_4] : memref<1x128xf32, #tpu.memory_space<vmem>>, vector<1x128xf32>
    %5 = vector.broadcast %4 : vector<1x128xf32> to vector<128x128xf32>
    %6 = arith.addf %3, %5 : vector<128x128xf32>
    %c0_5 = arith.constant 0 : index
    %c0_6 = arith.constant 0 : index
    %7 = vector.load %arg4[%c0_5, %c0_6] : memref<128x128xf32, #tpu.memory_space<vmem>>, vector<128x128xf32>
    %8 = arith.addf %6, %7 : vector<128x128xf32>
    %cst = arith.constant 0.000000e+00 : f32
    %9 = vector.broadcast %cst : f32 to vector<128x128xf32>
    %10 = arith.maximumf %8, %9 : vector<128x128xf32>
    %c0_7 = arith.constant 0 : index
    %c0_8 = arith.constant 0 : index
    %11 = vector.load %arg5[%c0_7, %c0_8] : memref<128x128xf32, #tpu.memory_space<vmem>>, vector<128x128xf32>
    tpu.vector_store %arg5[%c0_7, %c0_8], %10 {strides = array<i32>} : memref<128x128xf32, #tpu.memory_space<vmem>>, vector<128x128xf32>,
    return
  }
  func.func @transform_0(%arg0: i32) -> (i32, i32) {
    %c0_i32 = arith.constant 0 : i32
    %c0_i32_0 = arith.constant 0 : i32
    return %arg0, %c0_i32 : i32, i32
  }
  func.func @transform_1(%arg0: i32) -> (i32, i32) {
    %c0_i32 = arith.constant 0 : i32
    %c0_i32_0 = arith.constant 0 : i32
    %c0_i32_1 = arith.constant 0 : i32
    return %c0_i32, %c0_i32_0 : i32, i32
  }
  func.func @transform_2(%arg0: i32) -> (i32, i32) {
    %c0_i32 = arith.constant 0 : i32
    %c0_i32_0 = arith.constant 0 : i32
    %c0_i32_1 = arith.constant 0 : i32
    return %c0_i32, %c0_i32_0 : i32, i32
  }
  func.func @transform_3(%arg0: i32) -> (i32, i32) {
    %c0_i32 = arith.constant 0 : i32
    %c0_i32_0 = arith.constant 0 : i32
    return %arg0, %c0_i32 : i32, i32
  }
  func.func @transform_4(%arg0: i32) -> (i32, i32) {
    %c0_i32 = arith.constant 0 : i32
    %c0_i32_0 = arith.constant 0 : i32
    return %arg0, %c0_i32 : i32, i32
  }
}

</mosaic_0001>

<llo_original>
// kernel: basic_block_forward.5
$region0: #{basic_block_forward.5}
  #allocation0 [shape = 'u32[]', space=smem, size = 0x4, offset = 0x4, fixed_abs, tag = 'smem constant byte address 0x4 - core index']
  #allocation1 [shape = 'u32[72,128]{1,0:T(1,128)}', space=vmem, size = 0x9000, scoped, tag = 'internal scratch']
  %s0 = inlined_call_operand.vmem [shape: f32[128,128], index: 0, kind: input, shape index: {}]
  %s1 = inlined_call_operand.vmem [shape: f32[1,128], index: 1, kind: input, shape index: {}]
  %s2 = inlined_call_operand.vmem [shape: f32[1,128], index: 2, kind: input, shape index: {}]
  %s3 = inlined_call_operand.vmem [shape: bf16[128,128], index: 3, kind: output, shape index: {}]
  %s4 = sld [smem:[#allocation0]]
  $region22: #{basic_block_forward.5} parent=0
    _
  %s6 = ssub.s32 1, %s4
  %s7 = scalar_select 0, %s6, %s4
  // Predicated region
  $region2: #{basic_block_forward.5} parent=0 // pred_check
    _
  $region3: #{basic_block_forward.5} parent=0 // pred_check_branch
    %9 = sbr.rel (0) target = $region5
  $region4: #{basic_block_forward.5} parent=0 // pred_region
    _
  $region5: #{basic_block_forward.5} parent=0 // pred_fallthru
    _
  // Predicated region
  $region6: #{basic_block_forward.5} parent=0 // pred_check
    _
  $region7: #{basic_block_forward.5} parent=0 // pred_check_branch
    %11 = sbr.rel (0) target = $region9
  $region8: #{basic_block_forward.5} parent=0 // pred_region
    _
  $region9: #{basic_block_forward.5} parent=0 // pred_fallthru
    _
  // Predicated region
  $region10: #{basic_block_forward.5} parent=0 // pred_check
    _
  $region11: #{basic_block_forward.5} parent=0 // pred_check_branch
    %13 = sbr.rel (0) target = $region13
  $region12: #{basic_block_forward.5} parent=0 // pred_region
    _
  $region13: #{basic_block_forward.5} parent=0 // pred_fallthru
    _
  %v14 = vld [vmem:[%s0] sm:$0xff]
  %v15 = vld [vmem:[%s0 + $0x8] sm:$0xff]
  %v16 = vld [vmem:[%s0 + $0x10] sm:$0xff]
  %v17 = vld [vmem:[%s0 + $0x18] sm:$0xff]
  %v18 = vld [vmem:[%s0 + $0x20] sm:$0xff]
  %v19 = vld [vmem:[%s0 + $0x28] sm:$0xff]
  %v20 = vld [vmem:[%s0 + $0x30] sm:$0xff]
  %v21 = vld [vmem:[%s0 + $0x38] sm:$0xff]
  %v22 = vld [vmem:[%s0 + $0x40] sm:$0xff]
  %v23 = vld [vmem:[%s0 + $0x48] sm:$0xff]
  %v24 = vld [vmem:[%s0 + $0x50] sm:$0xff]
  %v25 = vld [vmem:[%s0 + $0x58] sm:$0xff]
  %v26 = vld [vmem:[%s0 + $0x60] sm:$0xff]
  %v27 = vld [vmem:[%s0 + $0x68] sm:$0xff]
  %v28 = vld [vmem:[%s0 + $0x70] sm:$0xff]
  %v29 = vld [vmem:[%s0 + $0x78] sm:$0xff]
  %v30 = vld [vmem:[%s1] sm:$0x1]
  %v32 = vperm.slane %v30, 0
  %v34 = vmul.f32 %v14, %v32
  %v35 = vmul.f32 %v15, %v32
  %v36 = vmul.f32 %v16, %v32
  %v37 = vmul.f32 %v17, %v32
  %v38 = vmul.f32 %v18, %v32
  %v39 = vmul.f32 %v19, %v32
  %v40 = vmul.f32 %v20, %v32
  %v41 = vmul.f32 %v21, %v32
  %v42 = vmul.f32 %v22, %v32
  %v43 = vmul.f32 %v23, %v32
  %v44 = vmul.f32 %v24, %v32
  %v45 = vmul.f32 %v25, %v32
  %v46 = vmul.f32 %v26, %v32
  %v47 = vmul.f32 %v27, %v32
  %v48 = vmul.f32 %v28, %v32
  %v49 = vmul.f32 %v29, %v32
  %v50 = vld [vmem:[%s2] sm:$0x1]
  %v52 = vperm.slane %v50, 0
  %v54 = vadd.f32 %v34, %v52
  %v55 = vadd.f32 %v35, %v52
  %v56 = vadd.f32 %v36, %v52
  %v57 = vadd.f32 %v37, %v52
  %v58 = vadd.f32 %v38, %v52
  %v59 = vadd.f32 %v39, %v52
  %v60 = vadd.f32 %v40, %v52
  %v61 = vadd.f32 %v41, %v52
  %v62 = vadd.f32 %v42, %v52
  %v63 = vadd.f32 %v43, %v52
  %v64 = vadd.f32 %v44, %v52
  %v65 = vadd.f32 %v45, %v52
  %v66 = vadd.f32 %v46, %v52
  %v67 = vadd.f32 %v47, %v52
  %v68 = vadd.f32 %v48, %v52
  %v69 = vadd.f32 %v49, %v52
  %v70 = vmax.f32 %v54, 0.0
  %v71 = vmax.f32 %v55, 0.0
  %v72 = vmax.f32 %v56, 0.0
  %v73 = vmax.f32 %v57, 0.0
  %v74 = vmax.f32 %v58, 0.0
  %v75 = vmax.f32 %v59, 0.0
  %v76 = vmax.f32 %v60, 0.0
  %v77 = vmax.f32 %v61, 0.0
  %v78 = vmax.f32 %v62, 0.0
  %v79 = vmax.f32 %v63, 0.0
  %v80 = vmax.f32 %v64, 0.0
  %v81 = vmax.f32 %v65, 0.0
  %v82 = vmax.f32 %v66, 0.0
  %v83 = vmax.f32 %v67, 0.0
  %v84 = vmax.f32 %v68, 0.0
  %v85 = vmax.f32 %v69, 0.0
  %v86 = vpack.c.bf16 %v70, %v70
  %v87 = vpack.c.bf16 %v71, %v71
  %v88 = vpack.c.bf16 %v72, %v72
  %v89 = vpack.c.bf16 %v73, %v73
  %v90 = vpack.c.bf16 %v74, %v74
  %v91 = vpack.c.bf16 %v75, %v75
  %v92 = vpack.c.bf16 %v76, %v76
  %v93 = vpack.c.bf16 %v77, %v77
  %v94 = vpack.c.bf16 %v78, %v78
  %v95 = vpack.c.bf16 %v79, %v79
  %v96 = vpack.c.bf16 %v80, %v80
  %v97 = vpack.c.bf16 %v81, %v81
  %v98 = vpack.c.bf16 %v82, %v82
  %v99 = vpack.c.bf16 %v83, %v83
  %v100 = vpack.c.bf16 %v84, %v84
  %v101 = vpack.c.bf16 %v85, %v85
  %102 = vst [vmem:[%s3] sm:$0xf] %v86
  %103 = vst [vmem:[%s3 + $0x4] sm:$0xf] %v87
  %104 = vst [vmem:[%s3 + $0x8] sm:$0xf] %v88
  %105 = vst [vmem:[%s3 + $0xc] sm:$0xf] %v89
  %106 = vst [vmem:[%s3 + $0x10] sm:$0xf] %v90
  %107 = vst [vmem:[%s3 + $0x14] sm:$0xf] %v91
  %108 = vst [vmem:[%s3 + $0x18] sm:$0xf] %v92
  %109 = vst [vmem:[%s3 + $0x1c] sm:$0xf] %v93
  %110 = vst [vmem:[%s3 + $0x20] sm:$0xf] %v94
  %111 = vst [vmem:[%s3 + $0x24] sm:$0xf] %v95
  %112 = vst [vmem:[%s3 + $0x28] sm:$0xf] %v96
  %113 = vst [vmem:[%s3 + $0x2c] sm:$0xf] %v97
  %114 = vst [vmem:[%s3 + $0x30] sm:$0xf] %v98
  %115 = vst [vmem:[%s3 + $0x34] sm:$0xf] %v99
  %116 = vst [vmem:[%s3 + $0x38] sm:$0xf] %v100
  %117 = vst [vmem:[%s3 + $0x3c] sm:$0xf] %v101
  // Predicated region
  $region14: #{basic_block_forward.5} parent=0 // pred_check
    _
  $region15: #{basic_block_forward.5} parent=0 // pred_check_branch
    %119 = sbr.rel (0) target = $region17
  $region16: #{basic_block_forward.5} parent=0 // pred_region
    _
  $region17: #{basic_block_forward.5} parent=0 // pred_fallthru
    _
  // Predicated region
  $region18: #{basic_block_forward.5} parent=0 // pred_check
    _
  $region19: #{basic_block_forward.5} parent=0 // pred_check_branch
    %121 = sbr.rel (0) target = $region21
  $region20: #{basic_block_forward.5} parent=0 // pred_region
    _
  $region21: #{basic_block_forward.5} parent=0 // pred_fallthru
    _

// kernel: basic_block_forward.7
$region0: #{basic_block_forward.7}
  #allocation0 [shape = 'u32[]', space=smem, size = 0x4, offset = 0x4, fixed_abs, tag = 'smem constant byte address 0x4 - core index']
  #allocation1 [shape = 'u32[72,128]{1,0:T(1,128)}', space=vmem, size = 0x9000, scoped, tag = 'internal scratch']
  %s0 = inlined_call_operand.vmem [shape: f32[128,128], index: 0, kind: input, shape index: {}]
  %s1 = inlined_call_operand.vmem [shape: f32[1,128], index: 1, kind: input, shape index: {}]
  %s2 = inlined_call_operand.vmem [shape: f32[1,128], index: 2, kind: input, shape index: {}]
  %s3 = inlined_call_operand.vmem [shape: f32[128,128], index: 3, kind: input, shape index: {}]
  %s4 = inlined_call_operand.vmem [shape: f32[128,128], index: 4, kind: output, shape index: {}]
  %s5 = sld [smem:[#allocation0]]
  $region26: #{basic_block_forward.7} parent=0
    _
  %s7 = ssub.s32 1, %s5
  %s8 = scalar_select 0, %s7, %s5
  // Predicated region
  $region2: #{basic_block_forward.7} parent=0 // pred_check
    _
  $region3: #{basic_block_forward.7} parent=0 // pred_check_branch
    %10 = sbr.rel (0) target = $region5
  $region4: #{basic_block_forward.7} parent=0 // pred_region
    _
  $region5: #{basic_block_forward.7} parent=0 // pred_fallthru
    _
  // Predicated region
  $region6: #{basic_block_forward.7} parent=0 // pred_check
    _
  $region7: #{basic_block_forward.7} parent=0 // pred_check_branch
    %12 = sbr.rel (0) target = $region9
  $region8: #{basic_block_forward.7} parent=0 // pred_region
    _
  $region9: #{basic_block_forward.7} parent=0 // pred_fallthru
    _
  // Predicated region
  $region10: #{basic_block_forward.7} parent=0 // pred_check
    _
  $region11: #{basic_block_forward.7} parent=0 // pred_check_branch
    %14 = sbr.rel (0) target = $region13
  $region12: #{basic_block_forward.7} parent=0 // pred_region
    _
  $region13: #{basic_block_forward.7} parent=0 // pred_fallthru
    _
  // Predicated region
  $region14: #{basic_block_forward.7} parent=0 // pred_check
    _
  $region15: #{basic_block_forward.7} parent=0 // pred_check_branch
    %16 = sbr.rel (0) target = $region17
  $region16: #{basic_block_forward.7} parent=0 // pred_region
    _
  $region17: #{basic_block_forward.7} parent=0 // pred_fallthru
    _
  %v17 = vld [vmem:[%s0] sm:$0xff]
  %v18 = vld [vmem:[%s0 + $0x8] sm:$0xff]
  %v19 = vld [vmem:[%s0 + $0x10] sm:$0xff]
  %v20 = vld [vmem:[%s0 + $0x18] sm:$0xff]
  %v21 = vld [vmem:[%s0 + $0x20] sm:$0xff]
  %v22 = vld [vmem:[%s0 + $0x28] sm:$0xff]
  %v23 = vld [vmem:[%s0 + $0x30] sm:$0xff]
  %v24 = vld [vmem:[%s0 + $0x38] sm:$0xff]
  %v25 = vld [vmem:[%s0 + $0x40] sm:$0xff]
  %v26 = vld [vmem:[%s0 + $0x48] sm:$0xff]
  %v27 = vld [vmem:[%s0 + $0x50] sm:$0xff]
  %v28 = vld [vmem:[%s0 + $0x58] sm:$0xff]
  %v29 = vld [vmem:[%s0 + $0x60] sm:$0xff]
  %v30 = vld [vmem:[%s0 + $0x68] sm:$0xff]
  %v31 = vld [vmem:[%s0 + $0x70] sm:$0xff]
  %v32 = vld [vmem:[%s0 + $0x78] sm:$0xff]
  %v33 = vld [vmem:[%s1] sm:$0x1]
  %v35 = vperm.slane %v33, 0
  %v37 = vmul.f32 %v17, %v35
  %v38 = vmul.f32 %v18, %v35
  %v39 = vmul.f32 %v19, %v35
  %v40 = vmul.f32 %v20, %v35
  %v41 = vmul.f32 %v21, %v35
  %v42 = vmul.f32 %v22, %v35
  %v43 = vmul.f32 %v23, %v35
  %v44 = vmul.f32 %v24, %v35
  %v45 = vmul.f32 %v25, %v35
  %v46 = vmul.f32 %v26, %v35
  %v47 = vmul.f32 %v27, %v35
  %v48 = vmul.f32 %v28, %v35
  %v49 = vmul.f32 %v29, %v35
  %v50 = vmul.f32 %v30, %v35
  %v51 = vmul.f32 %v31, %v35
  %v52 = vmul.f32 %v32, %v35
  %v53 = vld [vmem:[%s2] sm:$0x1]
  %v55 = vperm.slane %v53, 0
  %v57 = vadd.f32 %v37, %v55
  %v58 = vadd.f32 %v38, %v55
  %v59 = vadd.f32 %v39, %v55
  %v60 = vadd.f32 %v40, %v55
  %v61 = vadd.f32 %v41, %v55
  %v62 = vadd.f32 %v42, %v55
  %v63 = vadd.f32 %v43, %v55
  %v64 = vadd.f32 %v44, %v55
  %v65 = vadd.f32 %v45, %v55
  %v66 = vadd.f32 %v46, %v55
  %v67 = vadd.f32 %v47, %v55
  %v68 = vadd.f32 %v48, %v55
  %v69 = vadd.f32 %v49, %v55
  %v70 = vadd.f32 %v50, %v55
  %v71 = vadd.f32 %v51, %v55
  %v72 = vadd.f32 %v52, %v55
  %v73 = vld [vmem:[%s3] sm:$0xff]
  %v74 = vld [vmem:[%s3 + $0x8] sm:$0xff]
  %v75 = vld [vmem:[%s3 + $0x10] sm:$0xff]
  %v76 = vld [vmem:[%s3 + $0x18] sm:$0xff]
  %v77 = vld [vmem:[%s3 + $0x20] sm:$0xff]
  %v78 = vld [vmem:[%s3 + $0x28] sm:$0xff]
  %v79 = vld [vmem:[%s3 + $0x30] sm:$0xff]
  %v80 = vld [vmem:[%s3 + $0x38] sm:$0xff]
  %v81 = vld [vmem:[%s3 + $0x40] sm:$0xff]
  %v82 = vld [vmem:[%s3 + $0x48] sm:$0xff]
  %v83 = vld [vmem:[%s3 + $0x50] sm:$0xff]
  %v84 = vld [vmem:[%s3 + $0x58] sm:$0xff]
  %v85 = vld [vmem:[%s3 + $0x60] sm:$0xff]
  %v86 = vld [vmem:[%s3 + $0x68] sm:$0xff]
  %v87 = vld [vmem:[%s3 + $0x70] sm:$0xff]
  %v88 = vld [vmem:[%s3 + $0x78] sm:$0xff]
  %v89 = vadd.f32 %v57, %v73
  %v90 = vadd.f32 %v58, %v74
  %v91 = vadd.f32 %v59, %v75
  %v92 = vadd.f32 %v60, %v76
  %v93 = vadd.f32 %v61, %v77
  %v94 = vadd.f32 %v62, %v78
  %v95 = vadd.f32 %v63, %v79
  %v96 = vadd.f32 %v64, %v80
  %v97 = vadd.f32 %v65, %v81
  %v98 = vadd.f32 %v66, %v82
  %v99 = vadd.f32 %v67, %v83
  %v100 = vadd.f32 %v68, %v84
  %v101 = vadd.f32 %v69, %v85
  %v102 = vadd.f32 %v70, %v86
  %v103 = vadd.f32 %v71, %v87
  %v104 = vadd.f32 %v72, %v88
  %v105 = vmax.f32 %v89, 0.0
  %v106 = vmax.f32 %v90, 0.0
  %v107 = vmax.f32 %v91, 0.0
  %v108 = vmax.f32 %v92, 0.0
  %v109 = vmax.f32 %v93, 0.0
  %v110 = vmax.f32 %v94, 0.0
  %v111 = vmax.f32 %v95, 0.0
  %v112 = vmax.f32 %v96, 0.0
  %v113 = vmax.f32 %v97, 0.0
  %v114 = vmax.f32 %v98, 0.0
  %v115 = vmax.f32 %v99, 0.0
  %v116 = vmax.f32 %v100, 0.0
  %v117 = vmax.f32 %v101, 0.0
  %v118 = vmax.f32 %v102, 0.0
  %v119 = vmax.f32 %v103, 0.0
  %v120 = vmax.f32 %v104, 0.0
  %121 = vst [vmem:[%s4] sm:$0xff] %v105
  %122 = vst [vmem:[%s4 + $0x8] sm:$0xff] %v106
  %123 = vst [vmem:[%s4 + $0x10] sm:$0xff] %v107
  %124 = vst [vmem:[%s4 + $0x18] sm:$0xff] %v108
  %125 = vst [vmem:[%s4 + $0x20] sm:$0xff] %v109
  %126 = vst [vmem:[%s4 + $0x28] sm:$0xff] %v110
  %127 = vst [vmem:[%s4 + $0x30] sm:$0xff] %v111
  %128 = vst [vmem:[%s4 + $0x38] sm:$0xff] %v112
  %129 = vst [vmem:[%s4 + $0x40] sm:$0xff] %v113
  %130 = vst [vmem:[%s4 + $0x48] sm:$0xff] %v114
  %131 = vst [vmem:[%s4 + $0x50] sm:$0xff] %v115
  %132 = vst [vmem:[%s4 + $0x58] sm:$0xff] %v116
  %133 = vst [vmem:[%s4 + $0x60] sm:$0xff] %v117
  %134 = vst [vmem:[%s4 + $0x68] sm:$0xff] %v118
  %135 = vst [vmem:[%s4 + $0x70] sm:$0xff] %v119
  %136 = vst [vmem:[%s4 + $0x78] sm:$0xff] %v120
  // Predicated region
  $region18: #{basic_block_forward.7} parent=0 // pred_check
    _
  $region19: #{basic_block_forward.7} parent=0 // pred_check_branch
    %138 = sbr.rel (0) target = $region21
  $region20: #{basic_block_forward.7} parent=0 // pred_region
    _
  $region21: #{basic_block_forward.7} parent=0 // pred_fallthru
    _
  // Predicated region
  $region22: #{basic_block_forward.7} parent=0 // pred_check
    _
  $region23: #{basic_block_forward.7} parent=0 // pred_check_branch
    %140 = sbr.rel (0) target = $region25
  $region24: #{basic_block_forward.7} parent=0 // pred_region
    _
  $region25: #{basic_block_forward.7} parent=0 // pred_fallthru
    _

// kernel: basic_block_forward.4
$region0: #{basic_block_forward.4}
  #allocation0 [shape = 'u32[]', space=smem, size = 0x4, offset = 0x4, fixed_abs, tag = 'smem constant byte address 0x4 - core index']
  #allocation1 [shape = 'u32[72,128]{1,0:T(1,128)}', space=vmem, size = 0x9000, scoped, tag = 'internal scratch']
  %s0 = inlined_call_operand.vmem [shape: bf16[4,2,9,9,128], index: 0, kind: input, shape index: {}]
  %s1 = inlined_call_operand.vmem [shape: bf16[9,128,128], index: 1, kind: input, shape index: {}]
  %s2 = inlined_call_operand.vmem [shape: f32[128,128], index: 2, kind: output, shape index: {0}]
  %s3 = inlined_call_operand.vmem [shape: f32[1,2,128], index: 3, kind: output, shape index: {1}]
  %4 = xla_tuple %s2, %s3
  %s5 = sld [smem:[#allocation0]]
  $region26: #{basic_block_forward.4} parent=0
    _
  %s7 = ssub.s32 1, %s5
  %s8 = scalar_select 0, %s7, %s5
  // Predicated region
  $region2: #{basic_block_forward.4} parent=0 // pred_check
    _
  $region3: #{basic_block_forward.4} parent=0 // pred_check_branch
    %10 = sbr.rel (0) target = $region5
  $region4: #{basic_block_forward.4} parent=0 // pred_region
    _
  $region5: #{basic_block_forward.4} parent=0 // pred_fallthru
    _
  // Predicated region
  $region6: #{basic_block_forward.4} parent=0 // pred_check
    _
  $region7: #{basic_block_forward.4} parent=0 // pred_check_branch
    %12 = sbr.rel (0) target = $region9
  $region8: #{basic_block_forward.4} parent=0 // pred_region
    _
  $region9: #{basic_block_forward.4} parent=0 // pred_fallthru
    _
  %v13 = vld [vmem:[%s0] sm:$0xf]
  %v14 = vld [vmem:[%s0 + $0x8] sm:$0xf]
  %v15 = vld [vmem:[%s0 + $0x10] sm:$0xf]
  %v16 = vld [vmem:[%s0 + $0x18] sm:$0xf]
  %v17 = vld [vmem:[%s0 + $0x20] sm:$0xf]
  %v18 = vld [vmem:[%s0 + $0x28] sm:$0xf]
  %v19 = vld [vmem:[%s0 + $0x30] sm:$0xf]
  %v20 = vld [vmem:[%s0 + $0x38] sm:$0xf]
  %v21 = vld [vmem:[%s0 + $0x48] sm:$0xf]
  %v22 = vld [vmem:[%s0 + $0x50] sm:$0xf]
  %v23 = vld [vmem:[%s0 + $0x58] sm:$0xf]
  %v24 = vld [vmem:[%s0 + $0x60] sm:$0xf]
  %v25 = vld [vmem:[%s0 + $0x68] sm:$0xf]
  %v26 = vld [vmem:[%s0 + $0x70] sm:$0xf]
  %v27 = vld [vmem:[%s0 + $0x78] sm:$0xf]
  %v28 = vld [vmem:[%s0 + $0x80] sm:$0xf]
  %v29 = vld [vmem:[%s1] sm:$0xf]
  %v30 = vld [vmem:[%s1 + $0x4] sm:$0xf]
  %v31 = vld [vmem:[%s1 + $0x8] sm:$0xf]
  %v32 = vld [vmem:[%s1 + $0xc] sm:$0xf]
  %v33 = vld [vmem:[%s1 + $0x10] sm:$0xf]
  %v34 = vld [vmem:[%s1 + $0x14] sm:$0xf]
  %v35 = vld [vmem:[%s1 + $0x18] sm:$0xf]
  %v36 = vld [vmem:[%s1 + $0x1c] sm:$0xf]
  %v37 = vld [vmem:[%s1 + $0x20] sm:$0xf]
  %v38 = vld [vmem:[%s1 + $0x24] sm:$0xf]
  %v39 = vld [vmem:[%s1 + $0x28] sm:$0xf]
  %v40 = vld [vmem:[%s1 + $0x2c] sm:$0xf]
  %v41 = vld [vmem:[%s1 + $0x30] sm:$0xf]
  %v42 = vld [vmem:[%s1 + $0x34] sm:$0xf]
  %v43 = vld [vmem:[%s1 + $0x38] sm:$0xf]
  %v44 = vld [vmem:[%s1 + $0x3c] sm:$0xf]
  %v61 = vunpack.c.l.b16 %v13
  %v62 = vunpack.c.l.b16 %v14
  %v63 = vunpack.c.l.b16 %v15
  %v64 = vunpack.c.l.b16 %v16
  %v65 = vunpack.c.l.b16 %v17
  %v66 = vunpack.c.l.b16 %v18
  %v67 = vunpack.c.l.b16 %v19
  %v68 = vunpack.c.l.b16 %v20
  %v69 = vunpack.c.l.b16 %v21
  %v70 = vunpack.c.l.b16 %v22
  %v71 = vunpack.c.l.b16 %v23
  %v72 = vunpack.c.l.b16 %v24
  %v73 = vunpack.c.l.b16 %v25
  %v74 = vunpack.c.l.b16 %v26
  %v75 = vunpack.c.l.b16 %v27
  %v76 = vunpack.c.l.b16 %v28
  %v77 = vpack.c.b16 %v62, %v61
  %v78 = vpack.c.b16 %v64, %v63
  %v79 = vpack.c.b16 %v66, %v65
  %v80 = vpack.c.b16 %v68, %v67
  %v81 = vpack.c.b16 %v70, %v69
  %v82 = vpack.c.b16 %v72, %v71
  %v83 = vpack.c.b16 %v74, %v73
  %v84 = vpack.c.b16 %v76, %v75
  %v109 = vunpack.c.l.b16 %v29
  %v110 = vunpack.c.l.b16 %v30
  %v111 = vunpack.c.l.b16 %v31
  %v112 = vunpack.c.l.b16 %v32
  %v113 = vunpack.c.l.b16 %v33
  %v114 = vunpack.c.l.b16 %v34
  %v115 = vunpack.c.l.b16 %v35
  %v116 = vunpack.c.l.b16 %v36
  %v117 = vunpack.c.l.b16 %v37
  %v118 = vunpack.c.l.b16 %v38
  %v119 = vunpack.c.l.b16 %v39
  %v120 = vunpack.c.l.b16 %v40
  %v121 = vunpack.c.l.b16 %v41
  %v122 = vunpack.c.l.b16 %v42
  %v123 = vunpack.c.l.b16 %v43
  %v124 = vunpack.c.l.b16 %v44
  %v125 = vpack.c.b16 %v110, %v109
  %v126 = vpack.c.b16 %v112, %v111
  %v127 = vpack.c.b16 %v114, %v113
  %v128 = vpack.c.b16 %v116, %v115
  %v129 = vpack.c.b16 %v118, %v117
  %v130 = vpack.c.b16 %v120, %v119
  %v131 = vpack.c.b16 %v122, %v121
  %v132 = vpack.c.b16 %v124, %v123
  %141 = vmatpush.bf16.msra.mxu0 %v132
  %142 = vmatpush.bf16.msra.mxu0 %v131
  %143 = vmatpush.bf16.msra.mxu0 %v130
  %144 = vmatpush.bf16.msra.mxu0 %v129
  %145 = vmatpush.bf16.msra.mxu0 %v128
  %146 = vmatpush.bf16.msra.mxu0 %v127
  %147 = vmatpush.bf16.msra.mxu0 %v126
  %148 = vmatpush.bf16.msra.mxu0 %v125
  %149 = vmatmul.bf16.gmra.mxu0 %v77
  %v150 = vpop.f32.mrf.mxu0
  %v151 = vadd.f32 0.0, %v150
  %v152 = vpop.f32.mrf.mxu0
  %v153 = vadd.f32 0.0, %v152
  %154 = vmatmul.bf16.gmra.mxu0 %v78
  %v155 = vpop.f32.mrf.mxu0
  %v156 = vadd.f32 0.0, %v155
  %v157 = vpop.f32.mrf.mxu0
  %v158 = vadd.f32 0.0, %v157
  %159 = vmatmul.bf16.gmra.mxu0 %v79
  %v160 = vpop.f32.mrf.mxu0
  %v161 = vadd.f32 0.0, %v160
  %v162 = vpop.f32.mrf.mxu0
  %v163 = vadd.f32 0.0, %v162
  %164 = vmatmul.bf16.gmra.mxu0 %v80
  %v165 = vpop.f32.mrf.mxu0
  %v166 = vadd.f32 0.0, %v165
  %v167 = vpop.f32.mrf.mxu0
  %v168 = vadd.f32 0.0, %v167
  %169 = vmatmul.bf16.gmra.mxu0 %v81
  %v170 = vpop.f32.mrf.mxu0
  %v171 = vadd.f32 0.0, %v170
  %v172 = vpop.f32.mrf.mxu0
  %v173 = vadd.f32 0.0, %v172
  %174 = vmatmul.bf16.gmra.mxu0 %v82
  %v175 = vpop.f32.mrf.mxu0
  %v176 = vadd.f32 0.0, %v175
  %v177 = vpop.f32.mrf.mxu0
  %v178 = vadd.f32 0.0, %v177
  %179 = vmatmul.bf16.gmra.mxu0 %v83
  %v180 = vpop.f32.mrf.mxu0
  %v181 = vadd.f32 0.0, %v180
  %v182 = vpop.f32.mrf.mxu0
  %v183 = vadd.f32 0.0, %v182
  %184 = vmatmul.bf16.gmra.mxu0 %v84
  %v185 = vpop.f32.mrf.mxu0
  %v186 = vadd.f32 0.0, %v185
  %v187 = vpop.f32.mrf.mxu0
  %v188 = vadd.f32 0.0, %v187
  %189 = vdwg.mxu0
  %190 = vst [vmem:[%s2] sm:$0xff] %v151
  %191 = vst [vmem:[%s2 + $0x8] sm:$0xff] %v153
  %192 = vst [vmem:[%s2 + $0x10] sm:$0xff] %v156
  %193 = vst [vmem:[%s2 + $0x18] sm:$0xff] %v158
  %194 = vst [vmem:[%s2 + $0x20] sm:$0xff] %v161
  %195 = vst [vmem:[%s2 + $0x28] sm:$0xff] %v163
  %196 = vst [vmem:[%s2 + $0x30] sm:$0xff] %v166
  %197 = vst [vmem:[%s2 + $0x38] sm:$0xff] %v168
  %198 = vst [vmem:[%s2 + $0x40] sm:$0xff] %v171
  %199 = vst [vmem:[%s2 + $0x48] sm:$0xff] %v173
  %200 = vst [vmem:[%s2 + $0x50] sm:$0xff] %v176
  %201 = vst [vmem:[%s2 + $0x58] sm:$0xff] %v178
  %202 = vst [vmem:[%s2 + $0x60] sm:$0xff] %v181
  %203 = vst [vmem:[%s2 + $0x68] sm:$0xff] %v183
  %204 = vst [vmem:[%s2 + $0x70] sm:$0xff] %v186
  %205 = vst [vmem:[%s2 + $0x78] sm:$0xff] %v188
  %s206 = scalar_lea.vmem %s0, 144
  %v207 = vld [vmem:[%s206] sm:$0xf]
  %v208 = vld [vmem:[%s206 + $0x8] sm:$0xf]
  %v209 = vld [vmem:[%s206 + $0x10] sm:$0xf]
  %v210 = vld [vmem:[%s206 + $0x18] sm:$0xf]
  %v211 = vld [vmem:[%s206 + $0x20] sm:$0xf]
  %v212 = vld [vmem:[%s206 + $0x28] sm:$0xf]
  %v213 = vld [vmem:[%s206 + $0x30] sm:$0xf]
  %v214 = vld [vmem:[%s206 + $0x38] sm:$0xf]
  %v215 = vld [vmem:[%s206 + $0x48] sm:$0xf]
  %v216 = vld [vmem:[%s206 + $0x50] sm:$0xf]
  %v217 = vld [vmem:[%s206 + $0x58] sm:$0xf]
  %v218 = vld [vmem:[%s206 + $0x60] sm:$0xf]
  %v219 = vld [vmem:[%s206 + $0x68] sm:$0xf]
  %v220 = vld [vmem:[%s206 + $0x70] sm:$0xf]
  %v221 = vld [vmem:[%s206 + $0x78] sm:$0xf]
  %v222 = vld [vmem:[%s206 + $0x80] sm:$0xf]
  %s223 = scalar_lea.vmem %s1, 64
  %v224 = vld [vmem:[%s223] sm:$0xf]
  %v225 = vld [vmem:[%s223 + $0x4] sm:$0xf]
  %v226 = vld [vmem:[%s223 + $0x8] sm:$0xf]
  %v227 = vld [vmem:[%s223 + $0xc] sm:$0xf]
  %v228 = vld [vmem:[%s223 + $0x10] sm:$0xf]
  %v229 = vld [vmem:[%s223 + $0x14] sm:$0xf]
  %v230 = vld [vmem:[%s223 + $0x18] sm:$0xf]
  %v231 = vld [vmem:[%s223 + $0x1c] sm:$0xf]
  %v232 = vld [vmem:[%s223 + $0x20] sm:$0xf]
  %v233 = vld [vmem:[%s223 + $0x24] sm:$0xf]
  %v234 = vld [vmem:[%s223 + $0x28] sm:$0xf]
  %v235 = vld [vmem:[%s223 + $0x2c] sm:$0xf]
  %v236 = vld [vmem:[%s223 + $0x30] sm:$0xf]
  %v237 = vld [vmem:[%s223 + $0x34] sm:$0xf]
  %v238 = vld [vmem:[%s223 + $0x38] sm:$0xf]
  %v239 = vld [vmem:[%s223 + $0x3c] sm:$0xf]
  %v256 = vunpack.c.l.b16 %v207
  %v257 = vunpack.c.l.b16 %v208
  %v258 = vunpack.c.l.b16 %v209
  %v259 = vunpack.c.l.b16 %v210
  %v260 = vunpack.c.l.b16 %v211
  %v261 = vunpack.c.l.b16 %v212
  %v262 = vunpack.c.l.b16 %v213
  %v263 = vunpack.c.l.b16 %v214
  %v264 = vunpack.c.l.b16 %v215
  %v265 = vunpack.c.l.b16 %v216
  %v266 = vunpack.c.l.b16 %v217
  %v267 = vunpack.c.l.b16 %v218
  %v268 = vunpack.c.l.b16 %v219
  %v269 = vunpack.c.l.b16 %v220
  %v270 = vunpack.c.l.b16 %v221
  %v271 = vunpack.c.l.b16 %v222
  %v272 = vpack.c.b16 %v257, %v256
  %v273 = vpack.c.b16 %v259, %v258
  %v274 = vpack.c.b16 %v261, %v260
  %v275 = vpack.c.b16 %v263, %v262
  %v276 = vpack.c.b16 %v265, %v264
  %v277 = vpack.c.b16 %v267, %v266
  %v278 = vpack.c.b16 %v269, %v268
  %v279 = vpack.c.b16 %v271, %v270
  %v304 = vunpack.c.l.b16 %v224
  %v305 = vunpack.c.l.b16 %v225
  %v306 = vunpack.c.l.b16 %v226
  %v307 = vunpack.c.l.b16 %v227
  %v308 = vunpack.c.l.b16 %v228
  %v309 = vunpack.c.l.b16 %v229
  %v310 = vunpack.c.l.b16 %v230
  %v311 = vunpack.c.l.b16 %v231
  %v312 = vunpack.c.l.b16 %v232
  %v313 = vunpack.c.l.b16 %v233
  %v314 = vunpack.c.l.b16 %v234
  %v315 = vunpack.c.l.b16 %v235
  %v316 = vunpack.c.l.b16 %v236
  %v317 = vunpack.c.l.b16 %v237
  %v318 = vunpack.c.l.b16 %v238
  %v319 = vunpack.c.l.b16 %v239
  %v320 = vpack.c.b16 %v305, %v304
  %v321 = vpack.c.b16 %v307, %v306
  %v322 = vpack.c.b16 %v309, %v308
  %v323 = vpack.c.b16 %v311, %v310
  %v324 = vpack.c.b16 %v313, %v312
  %v325 = vpack.c.b16 %v315, %v314
  %v326 = vpack.c.b16 %v317, %v316
  %v327 = vpack.c.b16 %v319, %v318
  %336 = vmatpush.bf16.msra.mxu0 %v327
  %337 = vmatpush.bf16.msra.mxu0 %v326
  %338 = vmatpush.bf16.msra.mxu0 %v325
  %339 = vmatpush.bf16.msra.mxu0 %v324
  %340 = vmatpush.bf16.msra.mxu0 %v323
  %341 = vmatpush.bf16.msra.mxu0 %v322
  %342 = vmatpush.bf16.msra.mxu0 %v321
  %343 = vmatpush.bf16.msra.mxu0 %v320
  %344 = vmatmul.bf16.gmra.mxu0 %v272
  %v345 = vpop.f32.mrf.mxu0
  %v346 = vadd.f32 0.0, %v345
  %v347 = vpop.f32.mrf.mxu0
  %v348 = vadd.f32 0.0, %v347
  %349 = vmatmul.bf16.gmra.mxu0 %v273
  %v350 = vpop.f32.mrf.mxu0
  %v351 = vadd.f32 0.0, %v350
  %v352 = vpop.f32.mrf.mxu0
  %v353 = vadd.f32 0.0, %v352
  %354 = vmatmul.bf16.gmra.mxu0 %v274
  %v355 = vpop.f32.mrf.mxu0
  %v356 = vadd.f32 0.0, %v355
  %v357 = vpop.f32.mrf.mxu0
  %v358 = vadd.f32 0.0, %v357
  %359 = vmatmul.bf16.gmra.mxu0 %v275
  %v360 = vpop.f32.mrf.mxu0
  %v361 = vadd.f32 0.0, %v360
  %v362 = vpop.f32.mrf.mxu0
  %v363 = vadd.f32 0.0, %v362
  %364 = vmatmul.bf16.gmra.mxu0 %v276
  %v365 = vpop.f32.mrf.mxu0
  %v366 = vadd.f32 0.0, %v365
  %v367 = vpop.f32.mrf.mxu0
  %v368 = vadd.f32 0.0, %v367
  %369 = vmatmul.bf16.gmra.mxu0 %v277
  %v370 = vpop.f32.mrf.mxu0
  %v371 = vadd.f32 0.0, %v370
  %v372 = vpop.f32.mrf.mxu0
  %v373 = vadd.f32 0.0, %v372
  %374 = vmatmul.bf16.gmra.mxu0 %v278
  %v375 = vpop.f32.mrf.mxu0
  %v376 = vadd.f32 0.0, %v375
  %v377 = vpop.f32.mrf.mxu0
  %v378 = vadd.f32 0.0, %v377
  %379 = vmatmul.bf16.gmra.mxu0 %v279
  %v380 = vpop.f32.mrf.mxu0
  %v381 = vadd.f32 0.0, %v380
  %v382 = vpop.f32.mrf.mxu0
  %v383 = vadd.f32 0.0, %v382
  %384 = vdwg.mxu0
  %v385 = vld [vmem:[%s2] sm:$0xff]
  %v386 = vld [vmem:[%s2 + $0x8] sm:$0xff]
  %v387 = vld [vmem:[%s2 + $0x10] sm:$0xff]
  %v388 = vld [vmem:[%s2 + $0x18] sm:$0xff]
  %v389 = vld [vmem:[%s2 + $0x20] sm:$0xff]
  %v390 = vld [vmem:[%s2 + $0x28] sm:$0xff]
  %v391 = vld [vmem:[%s2 + $0x30] sm:$0xff]
  %v392 = vld [vmem:[%s2 + $0x38] sm:$0xff]
  %v393 = vld [vmem:[%s2 + $0x40] sm:$0xff]
  %v394 = vld [vmem:[%s2 + $0x48] sm:$0xff]
  %v395 = vld [vmem:[%s2 + $0x50] sm:$0xff]
  %v396 = vld [vmem:[%s2 + $0x58] sm:$0xff]
  %v397 = vld [vmem:[%s2 + $0x60] sm:$0xff]
  %v398 = vld [vmem:[%s2 + $0x68] sm:$0xff]
  %v399 = vld [vmem:[%s2 + $0x70] sm:$0xff]
  %v400 = vld [vmem:[%s2 + $0x78] sm:$0xff]
  %v401 = vadd.f32 %v385, %v346
  %v402 = vadd.f32 %v386, %v348
  %v403 = vadd.f32 %v387, %v351
  %v404 = vadd.f32 %v388, %v353
  %v405 = vadd.f32 %v389, %v356
  %v406 = vadd.f32 %v390, %v358
  %v407 = vadd.f32 %v391, %v361
  %v408 = vadd.f32 %v392, %v363
  %v409 = vadd.f32 %v393, %v366
  %v410 = vadd.f32 %v394, %v368
  %v411 = vadd.f32 %v395, %v371
  %v412 = vadd.f32 %v396, %v373
  %v413 = vadd.f32 %v397, %v376
  %v414 = vadd.f32 %v398, %v378
  %v415 = vadd.f32 %v399, %v381
  %v416 = vadd.f32 %v400, %v383
  %417 = vst [vmem:[%s2] sm:$0xff] %v401
  %418 = vst [vmem:[%s2 + $0x8] sm:$0xff] %v402
  %419 = vst [vmem:[%s2 + $0x10] sm:$0xff] %v403
  %420 = vst [vmem:[%s2 + $0x18] sm:$0xff] %v404
  %421 = vst [vmem:[%s2 + $0x20] sm:$0xff] %v405
  %422 = vst [vmem:[%s2 + $0x28] sm:$0xff] %v406
  %423 = vst [vmem:[%s2 + $0x30] sm:$0xff] %v407
  %424 = vst [vmem:[%s2 + $0x38] sm:$0xff] %v408
  %425 = vst [vmem:[%s2 + $0x40] sm:$0xff] %v409
  %426 = vst [vmem:[%s2 + $0x48] sm:$0xff] %v410
  %427 = vst [vmem:[%s2 + $0x50] sm:$0xff] %v411
  %428 = vst [vmem:[%s2 + $0x58] sm:$0xff] %v412
  %429 = vst [vmem:[%s2 + $0x60] sm:$0xff] %v413
  %430 = vst [vmem:[%s2 + $0x68] sm:$0xff] %v414
  %431 = vst [vmem:[%s2 + $0x70] sm:$0xff] %v415
  %432 = vst [vmem:[%s2 + $0x78] sm:$0xff] %v416
  %v433 = vld [vmem:[%s0] sm:$0xf]
  %v434 = vld [vmem:[%s0 + $0x4] sm:$0x1]
  %v435 = vld [vmem:[%s0 + $0x8] sm:$0xf]
  %v436 = vld [vmem:[%s0 + $0xc] sm:$0x1]
  %v437 = vld [vmem:[%s0 + $0x10] sm:$0xf]
  %v438 = vld [vmem:[%s0 + $0x14] sm:$0x1]
  %v439 = vld [vmem:[%s0 + $0x18] sm:$0xf]
  %v440 = vld [vmem:[%s0 + $0x1c] sm:$0x1]
  %v441 = vld [vmem:[%s0 + $0x20] sm:$0xf]
  %v442 = vld [vmem:[%s0 + $0x24] sm:$0x1]
  %v443 = vld [vmem:[%s0 + $0x28] sm:$0xf]
  %v444 = vld [vmem:[%s0 + $0x2c] sm:$0x1]
  %v445 = vld [vmem:[%s0 + $0x30] sm:$0xf]
  %v446 = vld [vmem:[%s0 + $0x34] sm:$0x1]
  %v447 = vld [vmem:[%s0 + $0x38] sm:$0xf]
  %v448 = vld [vmem:[%s0 + $0x3c] sm:$0x1]
  %v449 = vld [vmem:[%s0 + $0x48] sm:$0xf]
  %v450 = vld [vmem:[%s0 + $0x4c] sm:$0x1]
  %v451 = vld [vmem:[%s0 + $0x50] sm:$0xf]
  %v452 = vld [vmem:[%s0 + $0x54] sm:$0x1]
  %v453 = vld [vmem:[%s0 + $0x58] sm:$0xf]
  %v454 = vld [vmem:[%s0 + $0x5c] sm:$0x1]
  %v455 = vld [vmem:[%s0 + $0x60] sm:$0xf]
  %v456 = vld [vmem:[%s0 + $0x64] sm:$0x1]
  %v457 = vld [vmem:[%s0 + $0x68] sm:$0xf]
  %v458 = vld [vmem:[%s0 + $0x6c] sm:$0x1]
  %v459 = vld [vmem:[%s0 + $0x70] sm:$0xf]
  %v460 = vld [vmem:[%s0 + $0x74] sm:$0x1]
  %v461 = vld [vmem:[%s0 + $0x78] sm:$0xf]
  %v462 = vld [vmem:[%s0 + $0x7c] sm:$0x1]
  %v463 = vld [vmem:[%s0 + $0x80] sm:$0xf]
  %v464 = vld [vmem:[%s0 + $0x84] sm:$0x1]
  %vm465 = vsmask.f32 3328
  %vm466 = vsmask.f32 7440
  %vm467 = vmor %vm465, %vm466
  %v469 = vshrl.u32 %v433, 16
  %v471 = vrot.slane %v469, 4
  %v472 = vshll.u32 %v433, 16
  %v474 = vrot.slane %v472, 5
  %v475 = vor.u32 %v471, %v474
  %v476 = vrot.slane %v475, 4
  %v478 = vshll.u32 %v434, 16
  %v480 = vrot.slane %v478, 5
  %v481 = vsel %vm467, %v476, %v480
  %v483 = vshrl.u32 %v435, 16
  %v485 = vrot.slane %v483, 4
  %v486 = vshll.u32 %v435, 16
  %v488 = vrot.slane %v486, 5
  %v489 = vor.u32 %v485, %v488
  %v490 = vrot.slane %v489, 4
  %v492 = vshll.u32 %v436, 16
  %v494 = vrot.slane %v492, 5
  %v495 = vsel %vm467, %v490, %v494
  %v497 = vshrl.u32 %v437, 16
  %v499 = vrot.slane %v497, 4
  %v500 = vshll.u32 %v437, 16
  %v502 = vrot.slane %v500, 5
  %v503 = vor.u32 %v499, %v502
  %v504 = vrot.slane %v503, 4
  %v506 = vshll.u32 %v438, 16
  %v508 = vrot.slane %v506, 5
  %v509 = vsel %vm467, %v504, %v508
  %v511 = vshrl.u32 %v439, 16
  %v513 = vrot.slane %v511, 4
  %v514 = vshll.u32 %v439, 16
  %v516 = vrot.slane %v514, 5
  %v517 = vor.u32 %v513, %v516
  %v518 = vrot.slane %v517, 4
  %v520 = vshll.u32 %v440, 16
  %v522 = vrot.slane %v520, 5
  %v523 = vsel %vm467, %v518, %v522
  %v525 = vshrl.u32 %v441, 16
  %v527 = vrot.slane %v525, 4
  %v528 = vshll.u32 %v441, 16
  %v530 = vrot.slane %v528, 5
  %v531 = vor.u32 %v527, %v530
  %v532 = vrot.slane %v531, 4
  %v534 = vshll.u32 %v442, 16
  %v536 = vrot.slane %v534, 5
  %v537 = vsel %vm467, %v532, %v536
  %v539 = vshrl.u32 %v443, 16
  %v541 = vrot.slane %v539, 4
  %v542 = vshll.u32 %v443, 16
  %v544 = vrot.slane %v542, 5
  %v545 = vor.u32 %v541, %v544
  %v546 = vrot.slane %v545, 4
  %v548 = vshll.u32 %v444, 16
  %v550 = vrot.slane %v548, 5
  %v551 = vsel %vm467, %v546, %v550
  %v553 = vshrl.u32 %v445, 16
  %v555 = vrot.slane %v553, 4
  %v556 = vshll.u32 %v445, 16
  %v558 = vrot.slane %v556, 5
  %v559 = vor.u32 %v555, %v558
  %v560 = vrot.slane %v559, 4
  %v562 = vshll.u32 %v446, 16
  %v564 = vrot.slane %v562, 5
  %v565 = vsel %vm467, %v560, %v564
  %v567 = vshrl.u32 %v447, 16
  %v569 = vrot.slane %v567, 4
  %v570 = vshll.u32 %v447, 16
  %v572 = vrot.slane %v570, 5
  %v573 = vor.u32 %v569, %v572
  %v574 = vrot.slane %v573, 4
  %v576 = vshll.u32 %v448, 16
  %v578 = vrot.slane %v576, 5
  %v579 = vsel %vm467, %v574, %v578
  %v581 = vshrl.u32 %v449, 16
  %v583 = vrot.slane %v581, 4
  %v584 = vshll.u32 %v449, 16
  %v586 = vrot.slane %v584, 5
  %v587 = vor.u32 %v583, %v586
  %v588 = vrot.slane %v587, 4
  %v590 = vshll.u32 %v450, 16
  %v592 = vrot.slane %v590, 5
  %v593 = vsel %vm467, %v588, %v592
  %v595 = vshrl.u32 %v451, 16
  %v597 = vrot.slane %v595, 4
  %v598 = vshll.u32 %v451, 16
  %v600 = vrot.slane %v598, 5
  %v601 = vor.u32 %v597, %v600
  %v602 = vrot.slane %v601, 4
  %v604 = vshll.u32 %v452, 16
  %v606 = vrot.slane %v604, 5
  %v607 = vsel %vm467, %v602, %v606
  %v609 = vshrl.u32 %v453, 16
  %v611 = vrot.slane %v609, 4
  %v612 = vshll.u32 %v453, 16
  %v614 = vrot.slane %v612, 5
  %v615 = vor.u32 %v611, %v614
  %v616 = vrot.slane %v615, 4
  %v618 = vshll.u32 %v454, 16
  %v620 = vrot.slane %v618, 5
  %v621 = vsel %vm467, %v616, %v620
  %v623 = vshrl.u32 %v455, 16
  %v625 = vrot.slane %v623, 4
  %v626 = vshll.u32 %v455, 16
  %v628 = vrot.slane %v626, 5
  %v629 = vor.u32 %v625, %v628
  %v630 = vrot.slane %v629, 4
  %v632 = vshll.u32 %v456, 16
  %v634 = vrot.slane %v632, 5
  %v635 = vsel %vm467, %v630, %v634
  %v637 = vshrl.u32 %v457, 16
  %v639 = vrot.slane %v637, 4
  %v640 = vshll.u32 %v457, 16
  %v642 = vrot.slane %v640, 5
  %v643 = vor.u32 %v639, %v642
  %v644 = vrot.slane %v643, 4
  %v646 = vshll.u32 %v458, 16
  %v648 = vrot.slane %v646, 5
  %v649 = vsel %vm467, %v644, %v648
  %v651 = vshrl.u32 %v459, 16
  %v653 = vrot.slane %v651, 4
  %v654 = vshll.u32 %v459, 16
  %v656 = vrot.slane %v654, 5
  %v657 = vor.u32 %v653, %v656
  %v658 = vrot.slane %v657, 4
  %v660 = vshll.u32 %v460, 16
  %v662 = vrot.slane %v660, 5
  %v663 = vsel %vm467, %v658, %v662
  %v665 = vshrl.u32 %v461, 16
  %v667 = vrot.slane %v665, 4
  %v668 = vshll.u32 %v461, 16
  %v670 = vrot.slane %v668, 5
  %v671 = vor.u32 %v667, %v670
  %v672 = vrot.slane %v671, 4
  %v674 = vshll.u32 %v462, 16
  %v676 = vrot.slane %v674, 5
  %v677 = vsel %vm467, %v672, %v676
  %v679 = vshrl.u32 %v463, 16
  %v681 = vrot.slane %v679, 4
  %v682 = vshll.u32 %v463, 16
  %v684 = vrot.slane %v682, 5
  %v685 = vor.u32 %v681, %v684
  %v686 = vrot.slane %v685, 4
  %v688 = vshll.u32 %v464, 16
  %v690 = vrot.slane %v688, 5
  %v691 = vsel %vm467, %v686, %v690
  %s692 = scalar_lea.vmem %s1, 128
  %v693 = vld [vmem:[%s692] sm:$0xf]
  %v694 = vld [vmem:[%s692 + $0x4] sm:$0xf]
  %v695 = vld [vmem:[%s692 + $0x8] sm:$0xf]
  %v696 = vld [vmem:[%s692 + $0xc] sm:$0xf]
  %v697 = vld [vmem:[%s692 + $0x10] sm:$0xf]
  %v698 = vld [vmem:[%s692 + $0x14] sm:$0xf]
  %v699 = vld [vmem:[%s692 + $0x18] sm:$0xf]
  %v700 = vld [vmem:[%s692 + $0x1c] sm:$0xf]
  %v701 = vld [vmem:[%s692 + $0x20] sm:$0xf]
  %v702 = vld [vmem:[%s692 + $0x24] sm:$0xf]
  %v703 = vld [vmem:[%s692 + $0x28] sm:$0xf]
  %v704 = vld [vmem:[%s692 + $0x2c] sm:$0xf]
  %v705 = vld [vmem:[%s692 + $0x30] sm:$0xf]
  %v706 = vld [vmem:[%s692 + $0x34] sm:$0xf]
  %v707 = vld [vmem:[%s692 + $0x38] sm:$0xf]
  %v708 = vld [vmem:[%s692 + $0x3c] sm:$0xf]
  %v709 = vunpack.c.l.b16 %v481
  %v710 = vunpack.c.l.b16 %v495
  %v711 = vunpack.c.l.b16 %v509
  %v712 = vunpack.c.l.b16 %v523
  %v713 = vunpack.c.l.b16 %v537
  %v714 = vunpack.c.l.b16 %v551
  %v715 = vunpack.c.l.b16 %v565
  %v716 = vunpack.c.l.b16 %v579
  %v717 = vunpack.c.l.b16 %v593
  %v718 = vunpack.c.l.b16 %v607
  %v719 = vunpack.c.l.b16 %v621
  %v720 = vunpack.c.l.b16 %v635
  %v721 = vunpack.c.l.b16 %v649
  %v722 = vunpack.c.l.b16 %v663
  %v723 = vunpack.c.l.b16 %v677
  %v724 = vunpack.c.l.b16 %v691
  %v725 = vpack.c.b16 %v710, %v709
  %v726 = vpack.c.b16 %v712, %v711
  %v727 = vpack.c.b16 %v714, %v713
  %v728 = vpack.c.b16 %v716, %v715
  %v729 = vpack.c.b16 %v718, %v717
  %v730 = vpack.c.b16 %v720, %v719
  %v731 = vpack.c.b16 %v722, %v721
  %v732 = vpack.c.b16 %v724, %v723
  %v757 = vunpack.c.l.b16 %v693
  %v758 = vunpack.c.l.b16 %v694
  %v759 = vunpack.c.l.b16 %v695
  %v760 = vunpack.c.l.b16 %v696
  %v761 = vunpack.c.l.b16 %v697
  %v762 = vunpack.c.l.b16 %v698
  %v763 = vunpack.c.l.b16 %v699
  %v764 = vunpack.c.l.b16 %v700
  %v765 = vunpack.c.l.b16 %v701
  %v766 = vunpack.c.l.b16 %v702
  %v767 = vunpack.c.l.b16 %v703
  %v768 = vunpack.c.l.b16 %v704
  %v769 = vunpack.c.l.b16 %v705
  %v770 = vunpack.c.l.b16 %v706
  %v771 = vunpack.c.l.b16 %v707
  %v772 = vunpack.c.l.b16 %v708
  %v773 = vpack.c.b16 %v758, %v757
  %v774 = vpack.c.b16 %v760, %v759
  %v775 = vpack.c.b16 %v762, %v761
  %v776 = vpack.c.b16 %v764, %v763
  %v777 = vpack.c.b16 %v766, %v765
  %v778 = vpack.c.b16 %v768, %v767
  %v779 = vpack.c.b16 %v770, %v769
  %v780 = vpack.c.b16 %v772, %v771
  %789 = vmatpush.bf16.msra.mxu0 %v780
  %790 = vmatpush.bf16.msra.mxu0 %v779
  %791 = vmatpush.bf16.msra.mxu0 %v778
  %792 = vmatpush.bf16.msra.mxu0 %v777
  %793 = vmatpush.bf16.msra.mxu0 %v776
  %794 = vmatpush.bf16.msra.mxu0 %v775
  %795 = vmatpush.bf16.msra.mxu0 %v774
  %796 = vmatpush.bf16.msra.mxu0 %v773
  %797 = vmatmul.bf16.gmra.mxu0 %v725
  %v798 = vpop.f32.mrf.mxu0
  %v799 = vadd.f32 0.0, %v798
  %v800 = vpop.f32.mrf.mxu0
  %v801 = vadd.f32 0.0, %v800
  %802 = vmatmul.bf16.gmra.mxu0 %v726
  %v803 = vpop.f32.mrf.mxu0
  %v804 = vadd.f32 0.0, %v803
  %v805 = vpop.f32.mrf.mxu0
  %v806 = vadd.f32 0.0, %v805
  %807 = vmatmul.bf16.gmra.mxu0 %v727
  %v808 = vpop.f32.mrf.mxu0
  %v809 = vadd.f32 0.0, %v808
  %v810 = vpop.f32.mrf.mxu0
  %v811 = vadd.f32 0.0, %v810
  %812 = vmatmul.bf16.gmra.mxu0 %v728
  %v813 = vpop.f32.mrf.mxu0
  %v814 = vadd.f32 0.0, %v813
  %v815 = vpop.f32.mrf.mxu0
  %v816 = vadd.f32 0.0, %v815
  %817 = vmatmul.bf16.gmra.mxu0 %v729
  %v818 = vpop.f32.mrf.mxu0
  %v819 = vadd.f32 0.0, %v818
  %v820 = vpop.f32.mrf.mxu0
  %v821 = vadd.f32 0.0, %v820
  %822 = vmatmul.bf16.gmra.mxu0 %v730
  %v823 = vpop.f32.mrf.mxu0
  %v824 = vadd.f32 0.0, %v823
  %v825 = vpop.f32.mrf.mxu0
  %v826 = vadd.f32 0.0, %v825
  %827 = vmatmul.bf16.gmra.mxu0 %v731
  %v828 = vpop.f32.mrf.mxu0
  %v829 = vadd.f32 0.0, %v828
  %v830 = vpop.f32.mrf.mxu0
  %v831 = vadd.f32 0.0, %v830
  %832 = vmatmul.bf16.gmra.mxu0 %v732
  %v833 = vpop.f32.mrf.mxu0
  %v834 = vadd.f32 0.0, %v833
  %v835 = vpop.f32.mrf.mxu0
  %v836 = vadd.f32 0.0, %v835
  %837 = vdwg.mxu0
  %v838 = vld [vmem:[%s2] sm:$0xff]
  %v839 = vld [vmem:[%s2 + $0x8] sm:$0xff]
  %v840 = vld [vmem:[%s2 + $0x10] sm:$0xff]
  %v841 = vld [vmem:[%s2 + $0x18] sm:$0xff]
  %v842 = vld [vmem:[%s2 + $0x20] sm:$0xff]
  %v843 = vld [vmem:[%s2 + $0x28] sm:$0xff]
  %v844 = vld [vmem:[%s2 + $0x30] sm:$0xff]
  %v845 = vld [vmem:[%s2 + $0x38] sm:$0xff]
  %v846 = vld [vmem:[%s2 + $0x40] sm:$0xff]
  %v847 = vld [vmem:[%s2 + $0x48] sm:$0xff]
  %v848 = vld [vmem:[%s2 + $0x50] sm:$0xff]
  %v849 = vld [vmem:[%s2 + $0x58] sm:$0xff]
  %v850 = vld [vmem:[%s2 + $0x60] sm:$0xff]
  %v851 = vld [vmem:[%s2 + $0x68] sm:$0xff]
  %v852 = vld [vmem:[%s2 + $0x70] sm:$0xff]
  %v853 = vld [vmem:[%s2 + $0x78] sm:$0xff]
  %v854 = vadd.f32 %v838, %v799
  %v855 = vadd.f32 %v839, %v801
  %v856 = vadd.f32 %v840, %v804
  %v857 = vadd.f32 %v841, %v806
  %v858 = vadd.f32 %v842, %v809
  %v859 = vadd.f32 %v843, %v811
  %v860 = vadd.f32 %v844, %v814
  %v861 = vadd.f32 %v845, %v816
  %v862 = vadd.f32 %v846, %v819
  %v863 = vadd.f32 %v847, %v821
  %v864 = vadd.f32 %v848, %v824
  %v865 = vadd.f32 %v849, %v826
  %v866 = vadd.f32 %v850, %v829
  %v867 = vadd.f32 %v851, %v831
  %v868 = vadd.f32 %v852, %v834
  %v869 = vadd.f32 %v853, %v836
  %870 = vst [vmem:[%s2] sm:$0xff] %v854
  %871 = vst [vmem:[%s2 + $0x8] sm:$0xff] %v855
  %872 = vst [vmem:[%s2 + $0x10] sm:$0xff] %v856
  %873 = vst [vmem:[%s2 + $0x18] sm:$0xff] %v857
  %874 = vst [vmem:[%s2 + $0x20] sm:$0xff] %v858
  %875 = vst [vmem:[%s2 + $0x28] sm:$0xff] %v859
  %876 = vst [vmem:[%s2 + $0x30] sm:$0xff] %v860
  %877 = vst [vmem:[%s2 + $0x38] sm:$0xff] %v861
  %878 = vst [vmem:[%s2 + $0x40] sm:$0xff] %v862
  %879 = vst [vmem:[%s2 + $0x48] sm:$0xff] %v863
  %880 = vst [vmem:[%s2 + $0x50] sm:$0xff] %v864
  %881 = vst [vmem:[%s2 + $0x58] sm:$0xff] %v865
  %882 = vst [vmem:[%s2 + $0x60] sm:$0xff] %v866
  %883 = vst [vmem:[%s2 + $0x68] sm:$0xff] %v867
  %884 = vst [vmem:[%s2 + $0x70] sm:$0xff] %v868
  %885 = vst [vmem:[%s2 + $0x78] sm:$0xff] %v869
  %s886 = scalar_lea.vmem %s0, 288
  %v887 = vld [vmem:[%s886] sm:$0xf]
  %v888 = vld [vmem:[%s886 + $0x8] sm:$0xf]
  %v889 = vld [vmem:[%s886 + $0x10] sm:$0xf]
  %v890 = vld [vmem:[%s886 + $0x18] sm:$0xf]
  %v891 = vld [vmem:[%s886 + $0x20] sm:$0xf]
  %v892 = vld [vmem:[%s886 + $0x28] sm:$0xf]
  %v893 = vld [vmem:[%s886 + $0x30] sm:$0xf]
  %v894 = vld [vmem:[%s886 + $0x38] sm:$0xf]
  %v895 = vld [vmem:[%s886 + $0x48] sm:$0xf]
  %v896 = vld [vmem:[%s886 + $0x50] sm:$0xf]
  %v897 = vld [vmem:[%s886 + $0x58] sm:$0xf]
  %v898 = vld [vmem:[%s886 + $0x60] sm:$0xf]
  %v899 = vld [vmem:[%s886 + $0x68] sm:$0xf]
  %v900 = vld [vmem:[%s886 + $0x70] sm:$0xf]
  %v901 = vld [vmem:[%s886 + $0x78] sm:$0xf]
  %v902 = vld [vmem:[%s886 + $0x80] sm:$0xf]
  %s903 = scalar_lea.vmem %s1, 192
  %v904 = vld [vmem:[%s903] sm:$0xf]
  %v905 = vld [vmem:[%s903 + $0x4] sm:$0xf]
  %v906 = vld [vmem:[%s903 + $0x8] sm:$0xf]
  %v907 = vld [vmem:[%s903 + $0xc] sm:$0xf]
  %v908 = vld [vmem:[%s903 + $0x10] sm:$0xf]
  %v909 = vld [vmem:[%s903 + $0x14] sm:$0xf]
  %v910 = vld [vmem:[%s903 + $0x18] sm:$0xf]
  %v911 = vld [vmem:[%s903 + $0x1c] sm:$0xf]
  %v912 = vld [vmem:[%s903 + $0x20] sm:$0xf]
  %v913 = vld [vmem:[%s903 + $0x24] sm:$0xf]
  %v914 = vld [vmem:[%s903 + $0x28] sm:$0xf]
  %v915 = vld [vmem:[%s903 + $0x2c] sm:$0xf]
  %v916 = vld [vmem:[%s903 + $0x30] sm:$0xf]
  %v917 = vld [vmem:[%s903 + $0x34] sm:$0xf]
  %v918 = vld [vmem:[%s903 + $0x38] sm:$0xf]
  %v919 = vld [vmem:[%s903 + $0x3c] sm:$0xf]
  %v936 = vunpack.c.l.b16 %v887
  %v937 = vunpack.c.l.b16 %v888
  %v938 = vunpack.c.l.b16 %v889
  %v939 = vunpack.c.l.b16 %v890
  %v940 = vunpack.c.l.b16 %v891
  %v941 = vunpack.c.l.b16 %v892
  %v942 = vunpack.c.l.b16 %v893
  %v943 = vunpack.c.l.b16 %v894
  %v944 = vunpack.c.l.b16 %v895
  %v945 = vunpack.c.l.b16 %v896
  %v946 = vunpack.c.l.b16 %v897
  %v947 = vunpack.c.l.b16 %v898
  %v948 = vunpack.c.l.b16 %v899
  %v949 = vunpack.c.l.b16 %v900
  %v950 = vunpack.c.l.b16 %v901
  %v951 = vunpack.c.l.b16 %v902
  %v952 = vpack.c.b16 %v937, %v936
  %v953 = vpack.c.b16 %v939, %v938
  %v954 = vpack.c.b16 %v941, %v940
  %v955 = vpack.c.b16 %v943, %v942
  %v956 = vpack.c.b16 %v945, %v944
  %v957 = vpack.c.b16 %v947, %v946
  %v958 = vpack.c.b16 %v949, %v948
  %v959 = vpack.c.b16 %v951, %v950
  %v984 = vunpack.c.l.b16 %v904
  %v985 = vunpack.c.l.b16 %v905
  %v986 = vunpack.c.l.b16 %v906
  %v987 = vunpack.c.l.b16 %v907
  %v988 = vunpack.c.l.b16 %v908
  %v989 = vunpack.c.l.b16 %v909
  %v990 = vunpack.c.l.b16 %v910
  %v991 = vunpack.c.l.b16 %v911
  %v992 = vunpack.c.l.b16 %v912
  %v993 = vunpack.c.l.b16 %v913
  %v994 = vunpack.c.l.b16 %v914
  %v995 = vunpack.c.l.b16 %v915
  %v996 = vunpack.c.l.b16 %v916
  %v997 = vunpack.c.l.b16 %v917
  %v998 = vunpack.c.l.b16 %v918
  %v999 = vunpack.c.l.b16 %v919
  %v1000 = vpack.c.b16 %v985, %v984
  %v1001 = vpack.c.b16 %v987, %v986
  %v1002 = vpack.c.b16 %v989, %v988
  %v1003 = vpack.c.b16 %v991, %v990
  %v1004 = vpack.c.b16 %v993, %v992
  %v1005 = vpack.c.b16 %v995, %v994
  %v1006 = vpack.c.b16 %v997, %v996
  %v1007 = vpack.c.b16 %v999, %v998
  %1016 = vmatpush.bf16.msra.mxu0 %v1007
  %1017 = vmatpush.bf16.msra.mxu0 %v1006
  %1018 = vmatpush.bf16.msra.mxu0 %v1005
  %1019 = vmatpush.bf16.msra.mxu0 %v1004
  %1020 = vmatpush.bf16.msra.mxu0 %v1003
  %1021 = vmatpush.bf16.msra.mxu0 %v1002
  %1022 = vmatpush.bf16.msra.mxu0 %v1001
  %1023 = vmatpush.bf16.msra.mxu0 %v1000
  %1024 = vmatmul.bf16.gmra.mxu0 %v952
  %v1025 = vpop.f32.mrf.mxu0
  %v1026 = vadd.f32 0.0, %v1025
  %v1027 = vpop.f32.mrf.mxu0
  %v1028 = vadd.f32 0.0, %v1027
  %1029 = vmatmul.bf16.gmra.mxu0 %v953
  %v1030 = vpop.f32.mrf.mxu0
  %v1031 = vadd.f32 0.0, %v1030
  %v1032 = vpop.f32.mrf.mxu0
  %v1033 = vadd.f32 0.0, %v1032
  %1034 = vmatmul.bf16.gmra.mxu0 %v954
  %v1035 = vpop.f32.mrf.mxu0
  %v1036 = vadd.f32 0.0, %v1035
  %v1037 = vpop.f32.mrf.mxu0
  %v1038 = vadd.f32 0.0, %v1037
  %1039 = vmatmul.bf16.gmra.mxu0 %v955
  %v1040 = vpop.f32.mrf.mxu0
  %v1041 = vadd.f32 0.0, %v1040
  %v1042 = vpop.f32.mrf.mxu0
  %v1043 = vadd.f32 0.0, %v1042
  %1044 = vmatmul.bf16.gmra.mxu0 %v956
  %v1045 = vpop.f32.mrf.mxu0
  %v1046 = vadd.f32 0.0, %v1045
  %v1047 = vpop.f32.mrf.mxu0
  %v1048 = vadd.f32 0.0, %v1047
  %1049 = vmatmul.bf16.gmra.mxu0 %v957
  %v1050 = vpop.f32.mrf.mxu0
  %v1051 = vadd.f32 0.0, %v1050
  %v1052 = vpop.f32.mrf.mxu0
  %v1053 = vadd.f32 0.0, %v1052
  %1054 = vmatmul.bf16.gmra.mxu0 %v958
  %v1055 = vpop.f32.mrf.mxu0
  %v1056 = vadd.f32 0.0, %v1055
  %v1057 = vpop.f32.mrf.mxu0
  %v1058 = vadd.f32 0.0, %v1057
  %1059 = vmatmul.bf16.gmra.mxu0 %v959
  %v1060 = vpop.f32.mrf.mxu0
  %v1061 = vadd.f32 0.0, %v1060
  %v1062 = vpop.f32.mrf.mxu0
  %v1063 = vadd.f32 0.0, %v1062
  %1064 = vdwg.mxu0
  %v1065 = vld [vmem:[%s2] sm:$0xff]
  %v1066 = vld [vmem:[%s2 + $0x8] sm:$0xff]
  %v1067 = vld [vmem:[%s2 + $0x10] sm:$0xff]
  %v1068 = vld [vmem:[%s2 + $0x18] sm:$0xff]
  %v1069 = vld [vmem:[%s2 + $0x20] sm:$0xff]
  %v1070 = vld [vmem:[%s2 + $0x28] sm:$0xff]
  %v1071 = vld [vmem:[%s2 + $0x30] sm:$0xff]
  %v1072 = vld [vmem:[%s2 + $0x38] sm:$0xff]
  %v1073 = vld [vmem:[%s2 + $0x40] sm:$0xff]
  %v1074 = vld [vmem:[%s2 + $0x48] sm:$0xff]
  %v1075 = vld [vmem:[%s2 + $0x50] sm:$0xff]
  %v1076 = vld [vmem:[%s2 + $0x58] sm:$0xff]
  %v1077 = vld [vmem:[%s2 + $0x60] sm:$0xff]
  %v1078 = vld [vmem:[%s2 + $0x68] sm:$0xff]
  %v1079 = vld [vmem:[%s2 + $0x70] sm:$0xff]
  %v1080 = vld [vmem:[%s2 + $0x78] sm:$0xff]
  %v1081 = vadd.f32 %v1065, %v1026
  %v1082 = vadd.f32 %v1066, %v1028
  %v1083 = vadd.f32 %v1067, %v1031
  %v1084 = vadd.f32 %v1068, %v1033
  %v1085 = vadd.f32 %v1069, %v1036
  %v1086 = vadd.f32 %v1070, %v1038
  %v1087 = vadd.f32 %v1071, %v1041
  %v1088 = vadd.f32 %v1072, %v1043
  %v1089 = vadd.f32 %v1073, %v1046
  %v1090 = vadd.f32 %v1074, %v1048
  %v1091 = vadd.f32 %v1075, %v1051
  %v1092 = vadd.f32 %v1076, %v1053
  %v1093 = vadd.f32 %v1077, %v1056
  %v1094 = vadd.f32 %v1078, %v1058
  %v1095 = vadd.f32 %v1079, %v1061
  %v1096 = vadd.f32 %v1080, %v1063
  %1097 = vst [vmem:[%s2] sm:$0xff] %v1081
  %1098 = vst [vmem:[%s2 + $0x8] sm:$0xff] %v1082
  %1099 = vst [vmem:[%s2 + $0x10] sm:$0xff] %v1083
  %1100 = vst [vmem:[%s2 + $0x18] sm:$0xff] %v1084
  %1101 = vst [vmem:[%s2 + $0x20] sm:$0xff] %v1085
  %1102 = vst [vmem:[%s2 + $0x28] sm:$0xff] %v1086
  %1103 = vst [vmem:[%s2 + $0x30] sm:$0xff] %v1087
  %1104 = vst [vmem:[%s2 + $0x38] sm:$0xff] %v1088
  %1105 = vst [vmem:[%s2 + $0x40] sm:$0xff] %v1089
  %1106 = vst [vmem:[%s2 + $0x48] sm:$0xff] %v1090
  %1107 = vst [vmem:[%s2 + $0x50] sm:$0xff] %v1091
  %1108 = vst [vmem:[%s2 + $0x58] sm:$0xff] %v1092
  %1109 = vst [vmem:[%s2 + $0x60] sm:$0xff] %v1093
  %1110 = vst [vmem:[%s2 + $0x68] sm:$0xff] %v1094
  %1111 = vst [vmem:[%s2 + $0x70] sm:$0xff] %v1095
  %1112 = vst [vmem:[%s2 + $0x78] sm:$0xff] %v1096
  %s1113 = scalar_lea.vmem %s0, 432
  %v1114 = vld [vmem:[%s1113] sm:$0xf]
  %v1115 = vld [vmem:[%s1113 + $0x8] sm:$0xf]
  %v1116 = vld [vmem:[%s1113 + $0x10] sm:$0xf]
  %v1117 = vld [vmem:[%s1113 + $0x18] sm:$0xf]
  %v1118 = vld [vmem:[%s1113 + $0x20] sm:$0xf]
  %v1119 = vld [vmem:[%s1113 + $0x28] sm:$0xf]
  %v1120 = vld [vmem:[%s1113 + $0x30] sm:$0xf]
  %v1121 = vld [vmem:[%s1113 + $0x38] sm:$0xf]
  %v1122 = vld [vmem:[%s1113 + $0x48] sm:$0xf]
  %v1123 = vld [vmem:[%s1113 + $0x50] sm:$0xf]
  %v1124 = vld [vmem:[%s1113 + $0x58] sm:$0xf]
  %v1125 = vld [vmem:[%s1113 + $0x60] sm:$0xf]
  %v1126 = vld [vmem:[%s1113 + $0x68] sm:$0xf]
  %v1127 = vld [vmem:[%s1113 + $0x70] sm:$0xf]
  %v1128 = vld [vmem:[%s1113 + $0x78] sm:$0xf]
  %v1129 = vld [vmem:[%s1113 + $0x80] sm:$0xf]
  %s1130 = scalar_lea.vmem %s1, 256
  %v1131 = vld [vmem:[%s1130] sm:$0xf]
  %v1132 = vld [vmem:[%s1130 + $0x4] sm:$0xf]
  %v1133 = vld [vmem:[%s1130 + $0x8] sm:$0xf]
  %v1134 = vld [vmem:[%s1130 + $0xc] sm:$0xf]
  %v1135 = vld [vmem:[%s1130 + $0x10] sm:$0xf]
  %v1136 = vld [vmem:[%s1130 + $0x14] sm:$0xf]
  %v1137 = vld [vmem:[%s1130 + $0x18] sm:$0xf]
  %v1138 = vld [vmem:[%s1130 + $0x1c] sm:$0xf]
  %v1139 = vld [vmem:[%s1130 + $0x20] sm:$0xf]
  %v1140 = vld [vmem:[%s1130 + $0x24] sm:$0xf]
  %v1141 = vld [vmem:[%s1130 + $0x28] sm:$0xf]
  %v1142 = vld [vmem:[%s1130 + $0x2c] sm:$0xf]
  %v1143 = vld [vmem:[%s1130 + $0x30] sm:$0xf]
  %v1144 = vld [vmem:[%s1130 + $0x34] sm:$0xf]
  %v1145 = vld [vmem:[%s1130 + $0x38] sm:$0xf]
  %v1146 = vld [vmem:[%s1130 + $0x3c] sm:$0xf]
  %v1163 = vunpack.c.l.b16 %v1114
  %v1164 = vunpack.c.l.b16 %v1115
  %v1165 = vunpack.c.l.b16 %v1116
  %v1166 = vunpack.c.l.b16 %v1117
  %v1167 = vunpack.c.l.b16 %v1118
  %v1168 = vunpack.c.l.b16 %v1119
  %v1169 = vunpack.c.l.b16 %v1120
  %v1170 = vunpack.c.l.b16 %v1121
  %v1171 = vunpack.c.l.b16 %v1122
  %v1172 = vunpack.c.l.b16 %v1123
  %v1173 = vunpack.c.l.b16 %v1124
  %v1174 = vunpack.c.l.b16 %v1125
  %v1175 = vunpack.c.l.b16 %v1126
  %v1176 = vunpack.c.l.b16 %v1127
  %v1177 = vunpack.c.l.b16 %v1128
  %v1178 = vunpack.c.l.b16 %v1129
  %v1179 = vpack.c.b16 %v1164, %v1163
  %v1180 = vpack.c.b16 %v1166, %v1165
  %v1181 = vpack.c.b16 %v1168, %v1167
  %v1182 = vpack.c.b16 %v1170, %v1169
  %v1183 = vpack.c.b16 %v1172, %v1171
  %v1184 = vpack.c.b16 %v1174, %v1173
  %v1185 = vpack.c.b16 %v1176, %v1175
  %v1186 = vpack.c.b16 %v1178, %v1177
  %v1211 = vunpack.c.l.b16 %v1131
  %v1212 = vunpack.c.l.b16 %v1132
  %v1213 = vunpack.c.l.b16 %v1133
  %v1214 = vunpack.c.l.b16 %v1134
  %v1215 = vunpack.c.l.b16 %v1135
  %v1216 = vunpack.c.l.b16 %v1136
  %v1217 = vunpack.c.l.b16 %v1137
  %v1218 = vunpack.c.l.b16 %v1138
  %v1219 = vunpack.c.l.b16 %v1139
  %v1220 = vunpack.c.l.b16 %v1140
  %v1221 = vunpack.c.l.b16 %v1141
  %v1222 = vunpack.c.l.b16 %v1142
  %v1223 = vunpack.c.l.b16 %v1143
  %v1224 = vunpack.c.l.b16 %v1144
  %v1225 = vunpack.c.l.b16 %v1145
  %v1226 = vunpack.c.l.b16 %v1146
  %v1227 = vpack.c.b16 %v1212, %v1211
  %v1228 = vpack.c.b16 %v1214, %v1213
  %v1229 = vpack.c.b16 %v1216, %v1215
  %v1230 = vpack.c.b16 %v1218, %v1217
  %v1231 = vpack.c.b16 %v1220, %v1219
  %v1232 = vpack.c.b16 %v1222, %v1221
  %v1233 = vpack.c.b16 %v1224, %v1223
  %v1234 = vpack.c.b16 %v1226, %v1225
  %1243 = vmatpush.bf16.msra.mxu0 %v1234
  %1244 = vmatpush.bf16.msra.mxu0 %v1233
  %1245 = vmatpush.bf16.msra.mxu0 %v1232
  %1246 = vmatpush.bf16.msra.mxu0 %v1231
  %1247 = vmatpush.bf16.msra.mxu0 %v1230
  %1248 = vmatpush.bf16.msra.mxu0 %v1229
  %1249 = vmatpush.bf16.msra.mxu0 %v1228
  %1250 = vmatpush.bf16.msra.mxu0 %v1227
  %1251 = vmatmul.bf16.gmra.mxu0 %v1179
  %v1252 = vpop.f32.mrf.mxu0
  %v1253 = vadd.f32 0.0, %v1252
  %v1254 = vpop.f32.mrf.mxu0
  %v1255 = vadd.f32 0.0, %v1254
  %1256 = vmatmul.bf16.gmra.mxu0 %v1180
  %v1257 = vpop.f32.mrf.mxu0
  %v1258 = vadd.f32 0.0, %v1257
  %v1259 = vpop.f32.mrf.mxu0
  %v1260 = vadd.f32 0.0, %v1259
  %1261 = vmatmul.bf16.gmra.mxu0 %v1181
  %v1262 = vpop.f32.mrf.mxu0
  %v1263 = vadd.f32 0.0, %v1262
  %v1264 = vpop.f32.mrf.mxu0
  %v1265 = vadd.f32 0.0, %v1264
  %1266 = vmatmul.bf16.gmra.mxu0 %v1182
  %v1267 = vpop.f32.mrf.mxu0
  %v1268 = vadd.f32 0.0, %v1267
  %v1269 = vpop.f32.mrf.mxu0
  %v1270 = vadd.f32 0.0, %v1269
  %1271 = vmatmul.bf16.gmra.mxu0 %v1183
  %v1272 = vpop.f32.mrf.mxu0
  %v1273 = vadd.f32 0.0, %v1272
  %v1274 = vpop.f32.mrf.mxu0
  %v1275 = vadd.f32 0.0, %v1274
  %1276 = vmatmul.bf16.gmra.mxu0 %v1184
  %v1277 = vpop.f32.mrf.mxu0
  %v1278 = vadd.f32 0.0, %v1277
  %v1279 = vpop.f32.mrf.mxu0
  %v1280 = vadd.f32 0.0, %v1279
  %1281 = vmatmul.bf16.gmra.mxu0 %v1185
  %v1282 = vpop.f32.mrf.mxu0
  %v1283 = vadd.f32 0.0, %v1282
  %v1284 = vpop.f32.mrf.mxu0
  %v1285 = vadd.f32 0.0, %v1284
  %1286 = vmatmul.bf16.gmra.mxu0 %v1186
  %v1287 = vpop.f32.mrf.mxu0
  %v1288 = vadd.f32 0.0, %v1287
  %v1289 = vpop.f32.mrf.mxu0
  %v1290 = vadd.f32 0.0, %v1289
  %1291 = vdwg.mxu0
  %v1292 = vld [vmem:[%s2] sm:$0xff]
  %v1293 = vld [vmem:[%s2 + $0x8] sm:$0xff]
  %v1294 = vld [vmem:[%s2 + $0x10] sm:$0xff]
  %v1295 = vld [vmem:[%s2 + $0x18] sm:$0xff]
  %v1296 = vld [vmem:[%s2 + $0x20] sm:$0xff]
  %v1297 = vld [vmem:[%s2 + $0x28] sm:$0xff]
  %v1298 = vld [vmem:[%s2 + $0x30] sm:$0xff]
  %v1299 = vld [vmem:[%s2 + $0x38] sm:$0xff]
  %v1300 = vld [vmem:[%s2 + $0x40] sm:$0xff]
  %v1301 = vld [vmem:[%s2 + $0x48] sm:$0xff]
  %v1302 = vld [vmem:[%s2 + $0x50] sm:$0xff]
  %v1303 = vld [vmem:[%s2 + $0x58] sm:$0xff]
  %v1304 = vld [vmem:[%s2 + $0x60] sm:$0xff]
  %v1305 = vld [vmem:[%s2 + $0x68] sm:$0xff]
  %v1306 = vld [vmem:[%s2 + $0x70] sm:$0xff]
  %v1307 = vld [vmem:[%s2 + $0x78] sm:$0xff]
  %v1308 = vadd.f32 %v1292, %v1253
  %v1309 = vadd.f32 %v1293, %v1255
  %v1310 = vadd.f32 %v1294, %v1258
  %v1311 = vadd.f32 %v1295, %v1260
  %v1312 = vadd.f32 %v1296, %v1263
  %v1313 = vadd.f32 %v1297, %v1265
  %v1314 = vadd.f32 %v1298, %v1268
  %v1315 = vadd.f32 %v1299, %v1270
  %v1316 = vadd.f32 %v1300, %v1273
  %v1317 = vadd.f32 %v1301, %v1275
  %v1318 = vadd.f32 %v1302, %v1278
  %v1319 = vadd.f32 %v1303, %v1280
  %v1320 = vadd.f32 %v1304, %v1283
  %v1321 = vadd.f32 %v1305, %v1285
  %v1322 = vadd.f32 %v1306, %v1288
  %v1323 = vadd.f32 %v1307, %v1290
  %1324 = vst [vmem:[%s2] sm:$0xff] %v1308
  %1325 = vst [vmem:[%s2 + $0x8] sm:$0xff] %v1309
  %1326 = vst [vmem:[%s2 + $0x10] sm:$0xff] %v1310
  %1327 = vst [vmem:[%s2 + $0x18] sm:$0xff] %v1311
  %1328 = vst [vmem:[%s2 + $0x20] sm:$0xff] %v1312
  %1329 = vst [vmem:[%s2 + $0x28] sm:$0xff] %v1313
  %1330 = vst [vmem:[%s2 + $0x30] sm:$0xff] %v1314
  %1331 = vst [vmem:[%s2 + $0x38] sm:$0xff] %v1315
  %1332 = vst [vmem:[%s2 + $0x40] sm:$0xff] %v1316
  %1333 = vst [vmem:[%s2 + $0x48] sm:$0xff] %v1317
  %1334 = vst [vmem:[%s2 + $0x50] sm:$0xff] %v1318
  %1335 = vst [vmem:[%s2 + $0x58] sm:$0xff] %v1319
  %1336 = vst [vmem:[%s2 + $0x60] sm:$0xff] %v1320
  %1337 = vst [vmem:[%s2 + $0x68] sm:$0xff] %v1321
  %1338 = vst [vmem:[%s2 + $0x70] sm:$0xff] %v1322
  %1339 = vst [vmem:[%s2 + $0x78] sm:$0xff] %v1323
  %v1340 = vld [vmem:[%s886] sm:$0xf]
  %v1341 = vld [vmem:[%s886 + $0x4] sm:$0x1]
  %v1342 = vld [vmem:[%s886 + $0x8] sm:$0xf]
  %v1343 = vld [vmem:[%s886 + $0xc] sm:$0x1]
  %v1344 = vld [vmem:[%s886 + $0x10] sm:$0xf]
  %v1345 = vld [vmem:[%s886 + $0x14] sm:$0x1]
  %v1346 = vld [vmem:[%s886 + $0x18] sm:$0xf]
  %v1347 = vld [vmem:[%s886 + $0x1c] sm:$0x1]
  %v1348 = vld [vmem:[%s886 + $0x20] sm:$0xf]
  %v1349 = vld [vmem:[%s886 + $0x24] sm:$0x1]
  %v1350 = vld [vmem:[%s886 + $0x28] sm:$0xf]
  %v1351 = vld [vmem:[%s886 + $0x2c] sm:$0x1]
  %v1352 = vld [vmem:[%s886 + $0x30] sm:$0xf]
  %v1353 = vld [vmem:[%s886 + $0x34] sm:$0x1]
  %v1354 = vld [vmem:[%s886 + $0x38] sm:$0xf]
  %v1355 = vld [vmem:[%s886 + $0x3c] sm:$0x1]
  %v1356 = vld [vmem:[%s886 + $0x48] sm:$0xf]
  %v1357 = vld [vmem:[%s886 + $0x4c] sm:$0x1]
  %v1358 = vld [vmem:[%s886 + $0x50] sm:$0xf]
  %v1359 = vld [vmem:[%s886 + $0x54] sm:$0x1]
  %v1360 = vld [vmem:[%s886 + $0x58] sm:$0xf]
  %v1361 = vld [vmem:[%s886 + $0x5c] sm:$0x1]
  %v1362 = vld [vmem:[%s886 + $0x60] sm:$0xf]
  %v1363 = vld [vmem:[%s886 + $0x64] sm:$0x1]
  %v1364 = vld [vmem:[%s886 + $0x68] sm:$0xf]
  %v1365 = vld [vmem:[%s886 + $0x6c] sm:$0x1]
  %v1366 = vld [vmem:[%s886 + $0x70] sm:$0xf]
  %v1367 = vld [vmem:[%s886 + $0x74] sm:$0x1]
  %v1368 = vld [vmem:[%s886 + $0x78] sm:$0xf]
  %v1369 = vld [vmem:[%s886 + $0x7c] sm:$0x1]
  %v1370 = vld [vmem:[%s886 + $0x80] sm:$0xf]
  %v1371 = vld [vmem:[%s886 + $0x84] sm:$0x1]
  %v1373 = vshrl.u32 %v1340, 16
  %v1375 = vrot.slane %v1373, 4
  %v1376 = vshll.u32 %v1340, 16
  %v1378 = vrot.slane %v1376, 5
  %v1379 = vor.u32 %v1375, %v1378
  %v1380 = vrot.slane %v1379, 4
  %v1382 = vshll.u32 %v1341, 16
  %v1384 = vrot.slane %v1382, 5
  %v1385 = vsel %vm467, %v1380, %v1384
  %v1387 = vshrl.u32 %v1342, 16
  %v1389 = vrot.slane %v1387, 4
  %v1390 = vshll.u32 %v1342, 16
  %v1392 = vrot.slane %v1390, 5
  %v1393 = vor.u32 %v1389, %v1392
  %v1394 = vrot.slane %v1393, 4
  %v1396 = vshll.u32 %v1343, 16
  %v1398 = vrot.slane %v1396, 5
  %v1399 = vsel %vm467, %v1394, %v1398
  %v1401 = vshrl.u32 %v1344, 16
  %v1403 = vrot.slane %v1401, 4
  %v1404 = vshll.u32 %v1344, 16
  %v1406 = vrot.slane %v1404, 5
  %v1407 = vor.u32 %v1403, %v1406
  %v1408 = vrot.slane %v1407, 4
  %v1410 = vshll.u32 %v1345, 16
  %v1412 = vrot.slane %v1410, 5
  %v1413 = vsel %vm467, %v1408, %v1412
  %v1415 = vshrl.u32 %v1346, 16
  %v1417 = vrot.slane %v1415, 4
  %v1418 = vshll.u32 %v1346, 16
  %v1420 = vrot.slane %v1418, 5
  %v1421 = vor.u32 %v1417, %v1420
  %v1422 = vrot.slane %v1421, 4
  %v1424 = vshll.u32 %v1347, 16
  %v1426 = vrot.slane %v1424, 5
  %v1427 = vsel %vm467, %v1422, %v1426
  %v1429 = vshrl.u32 %v1348, 16
  %v1431 = vrot.slane %v1429, 4
  %v1432 = vshll.u32 %v1348, 16
  %v1434 = vrot.slane %v1432, 5
  %v1435 = vor.u32 %v1431, %v1434
  %v1436 = vrot.slane %v1435, 4
  %v1438 = vshll.u32 %v1349, 16
  %v1440 = vrot.slane %v1438, 5
  %v1441 = vsel %vm467, %v1436, %v1440
  %v1443 = vshrl.u32 %v1350, 16
  %v1445 = vrot.slane %v1443, 4
  %v1446 = vshll.u32 %v1350, 16
  %v1448 = vrot.slane %v1446, 5
  %v1449 = vor.u32 %v1445, %v1448
  %v1450 = vrot.slane %v1449, 4
  %v1452 = vshll.u32 %v1351, 16
  %v1454 = vrot.slane %v1452, 5
  %v1455 = vsel %vm467, %v1450, %v1454
  %v1457 = vshrl.u32 %v1352, 16
  %v1459 = vrot.slane %v1457, 4
  %v1460 = vshll.u32 %v1352, 16
  %v1462 = vrot.slane %v1460, 5
  %v1463 = vor.u32 %v1459, %v1462
  %v1464 = vrot.slane %v1463, 4
  %v1466 = vshll.u32 %v1353, 16
  %v1468 = vrot.slane %v1466, 5
  %v1469 = vsel %vm467, %v1464, %v1468
  %v1471 = vshrl.u32 %v1354, 16
  %v1473 = vrot.slane %v1471, 4
  %v1474 = vshll.u32 %v1354, 16
  %v1476 = vrot.slane %v1474, 5
  %v1477 = vor.u32 %v1473, %v1476
  %v1478 = vrot.slane %v1477, 4
  %v1480 = vshll.u32 %v1355, 16
  %v1482 = vrot.slane %v1480, 5
  %v1483 = vsel %vm467, %v1478, %v1482
  %v1485 = vshrl.u32 %v1356, 16
  %v1487 = vrot.slane %v1485, 4
  %v1488 = vshll.u32 %v1356, 16
  %v1490 = vrot.slane %v1488, 5
  %v1491 = vor.u32 %v1487, %v1490
  %v1492 = vrot.slane %v1491, 4
  %v1494 = vshll.u32 %v1357, 16
  %v1496 = vrot.slane %v1494, 5
  %v1497 = vsel %vm467, %v1492, %v1496
  %v1499 = vshrl.u32 %v1358, 16
  %v1501 = vrot.slane %v1499, 4
  %v1502 = vshll.u32 %v1358, 16
  %v1504 = vrot.slane %v1502, 5
  %v1505 = vor.u32 %v1501, %v1504
  %v1506 = vrot.slane %v1505, 4
  %v1508 = vshll.u32 %v1359, 16
  %v1510 = vrot.slane %v1508, 5
  %v1511 = vsel %vm467, %v1506, %v1510
  %v1513 = vshrl.u32 %v1360, 16
  %v1515 = vrot.slane %v1513, 4
  %v1516 = vshll.u32 %v1360, 16
  %v1518 = vrot.slane %v1516, 5
  %v1519 = vor.u32 %v1515, %v1518
  %v1520 = vrot.slane %v1519, 4
  %v1522 = vshll.u32 %v1361, 16
  %v1524 = vrot.slane %v1522, 5
  %v1525 = vsel %vm467, %v1520, %v1524
  %v1527 = vshrl.u32 %v1362, 16
  %v1529 = vrot.slane %v1527, 4
  %v1530 = vshll.u32 %v1362, 16
  %v1532 = vrot.slane %v1530, 5
  %v1533 = vor.u32 %v1529, %v1532
  %v1534 = vrot.slane %v1533, 4
  %v1536 = vshll.u32 %v1363, 16
  %v1538 = vrot.slane %v1536, 5
  %v1539 = vsel %vm467, %v1534, %v1538
  %v1541 = vshrl.u32 %v1364, 16
  %v1543 = vrot.slane %v1541, 4
  %v1544 = vshll.u32 %v1364, 16
  %v1546 = vrot.slane %v1544, 5
  %v1547 = vor.u32 %v1543, %v1546
  %v1548 = vrot.slane %v1547, 4
  %v1550 = vshll.u32 %v1365, 16
  %v1552 = vrot.slane %v1550, 5
  %v1553 = vsel %vm467, %v1548, %v1552
  %v1555 = vshrl.u32 %v1366, 16
  %v1557 = vrot.slane %v1555, 4
  %v1558 = vshll.u32 %v1366, 16
  %v1560 = vrot.slane %v1558, 5
  %v1561 = vor.u32 %v1557, %v1560
  %v1562 = vrot.slane %v1561, 4
  %v1564 = vshll.u32 %v1367, 16
  %v1566 = vrot.slane %v1564, 5
  %v1567 = vsel %vm467, %v1562, %v1566
  %v1569 = vshrl.u32 %v1368, 16
  %v1571 = vrot.slane %v1569, 4
  %v1572 = vshll.u32 %v1368, 16
  %v1574 = vrot.slane %v1572, 5
  %v1575 = vor.u32 %v1571, %v1574
  %v1576 = vrot.slane %v1575, 4
  %v1578 = vshll.u32 %v1369, 16
  %v1580 = vrot.slane %v1578, 5
  %v1581 = vsel %vm467, %v1576, %v1580
  %v1583 = vshrl.u32 %v1370, 16
  %v1585 = vrot.slane %v1583, 4
  %v1586 = vshll.u32 %v1370, 16
  %v1588 = vrot.slane %v1586, 5
  %v1589 = vor.u32 %v1585, %v1588
  %v1590 = vrot.slane %v1589, 4
  %v1592 = vshll.u32 %v1371, 16
  %v1594 = vrot.slane %v1592, 5
  %v1595 = vsel %vm467, %v1590, %v1594
  %s1596 = scalar_lea.vmem %s1, 320
  %v1597 = vld [vmem:[%s1596] sm:$0xf]
  %v1598 = vld [vmem:[%s1596 + $0x4] sm:$0xf]
  %v1599 = vld [vmem:[%s1596 + $0x8] sm:$0xf]
  %v1600 = vld [vmem:[%s1596 + $0xc] sm:$0xf]
  %v1601 = vld [vmem:[%s1596 + $0x10] sm:$0xf]
  %v1602 = vld [vmem:[%s1596 + $0x14] sm:$0xf]
  %v1603 = vld [vmem:[%s1596 + $0x18] sm:$0xf]
  %v1604 = vld [vmem:[%s1596 + $0x1c] sm:$0xf]
  %v1605 = vld [vmem:[%s1596 + $0x20] sm:$0xf]
  %v1606 = vld [vmem:[%s1596 + $0x24] sm:$0xf]
  %v1607 = vld [vmem:[%s1596 + $0x28] sm:$0xf]
  %v1608 = vld [vmem:[%s1596 + $0x2c] sm:$0xf]
  %v1609 = vld [vmem:[%s1596 + $0x30] sm:$0xf]
  %v1610 = vld [vmem:[%s1596 + $0x34] sm:$0xf]
  %v1611 = vld [vmem:[%s1596 + $0x38] sm:$0xf]
  %v1612 = vld [vmem:[%s1596 + $0x3c] sm:$0xf]
  %v1613 = vunpack.c.l.b16 %v1385
  %v1614 = vunpack.c.l.b16 %v1399
  %v1615 = vunpack.c.l.b16 %v1413
  %v1616 = vunpack.c.l.b16 %v1427
  %v1617 = vunpack.c.l.b16 %v1441
  %v1618 = vunpack.c.l.b16 %v1455
  %v1619 = vunpack.c.l.b16 %v1469
  %v1620 = vunpack.c.l.b16 %v1483
  %v1621 = vunpack.c.l.b16 %v1497
  %v1622 = vunpack.c.l.b16 %v1511
  %v1623 = vunpack.c.l.b16 %v1525
  %v1624 = vunpack.c.l.b16 %v1539
  %v1625 = vunpack.c.l.b16 %v1553
  %v1626 = vunpack.c.l.b16 %v1567
  %v1627 = vunpack.c.l.b16 %v1581
  %v1628 = vunpack.c.l.b16 %v1595
  %v1629 = vpack.c.b16 %v1614, %v1613
  %v1630 = vpack.c.b16 %v1616, %v1615
  %v1631 = vpack.c.b16 %v1618, %v1617
  %v1632 = vpack.c.b16 %v1620, %v1619
  %v1633 = vpack.c.b16 %v1622, %v1621
  %v1634 = vpack.c.b16 %v1624, %v1623
  %v1635 = vpack.c.b16 %v1626, %v1625
  %v1636 = vpack.c.b16 %v1628, %v1627
  %v1661 = vunpack.c.l.b16 %v1597
  %v1662 = vunpack.c.l.b16 %v1598
  %v1663 = vunpack.c.l.b16 %v1599
  %v1664 = vunpack.c.l.b16 %v1600
  %v1665 = vunpack.c.l.b16 %v1601
  %v1666 = vunpack.c.l.b16 %v1602
  %v1667 = vunpack.c.l.b16 %v1603
  %v1668 = vunpack.c.l.b16 %v1604
  %v1669 = vunpack.c.l.b16 %v1605
  %v1670 = vunpack.c.l.b16 %v1606
  %v1671 = vunpack.c.l.b16 %v1607
  %v1672 = vunpack.c.l.b16 %v1608
  %v1673 = vunpack.c.l.b16 %v1609
  %v1674 = vunpack.c.l.b16 %v1610
  %v1675 = vunpack.c.l.b16 %v1611
  %v1676 = vunpack.c.l.b16 %v1612
  %v1677 = vpack.c.b16 %v1662, %v1661
  %v1678 = vpack.c.b16 %v1664, %v1663
  %v1679 = vpack.c.b16 %v1666, %v1665
  %v1680 = vpack.c.b16 %v1668, %v1667
  %v1681 = vpack.c.b16 %v1670, %v1669
  %v1682 = vpack.c.b16 %v1672, %v1671
  %v1683 = vpack.c.b16 %v1674, %v1673
  %v1684 = vpack.c.b16 %v1676, %v1675
  %1693 = vmatpush.bf16.msra.mxu0 %v1684
  %1694 = vmatpush.bf16.msra.mxu0 %v1683
  %1695 = vmatpush.bf16.msra.mxu0 %v1682
  %1696 = vmatpush.bf16.msra.mxu0 %v1681
  %1697 = vmatpush.bf16.msra.mxu0 %v1680
  %1698 = vmatpush.bf16.msra.mxu0 %v1679
  %1699 = vmatpush.bf16.msra.mxu0 %v1678
  %1700 = vmatpush.bf16.msra.mxu0 %v1677
  %1701 = vmatmul.bf16.gmra.mxu0 %v1629
  %v1702 = vpop.f32.mrf.mxu0
  %v1703 = vadd.f32 0.0, %v1702
  %v1704 = vpop.f32.mrf.mxu0
  %v1705 = vadd.f32 0.0, %v1704
  %1706 = vmatmul.bf16.gmra.mxu0 %v1630
  %v1707 = vpop.f32.mrf.mxu0
  %v1708 = vadd.f32 0.0, %v1707
  %v1709 = vpop.f32.mrf.mxu0
  %v1710 = vadd.f32 0.0, %v1709
  %1711 = vmatmul.bf16.gmra.mxu0 %v1631
  %v1712 = vpop.f32.mrf.mxu0
  %v1713 = vadd.f32 0.0, %v1712
  %v1714 = vpop.f32.mrf.mxu0
  %v1715 = vadd.f32 0.0, %v1714
  %1716 = vmatmul.bf16.gmra.mxu0 %v1632
  %v1717 = vpop.f32.mrf.mxu0
  %v1718 = vadd.f32 0.0, %v1717
  %v1719 = vpop.f32.mrf.mxu0
  %v1720 = vadd.f32 0.0, %v1719
  %1721 = vmatmul.bf16.gmra.mxu0 %v1633
  %v1722 = vpop.f32.mrf.mxu0
  %v1723 = vadd.f32 0.0, %v1722
  %v1724 = vpop.f32.mrf.mxu0
  %v1725 = vadd.f32 0.0, %v1724
  %1726 = vmatmul.bf16.gmra.mxu0 %v1634
  %v1727 = vpop.f32.mrf.mxu0
  %v1728 = vadd.f32 0.0, %v1727
  %v1729 = vpop.f32.mrf.mxu0
  %v1730 = vadd.f32 0.0, %v1729
  %1731 = vmatmul.bf16.gmra.mxu0 %v1635
  %v1732 = vpop.f32.mrf.mxu0
  %v1733 = vadd.f32 0.0, %v1732
  %v1734 = vpop.f32.mrf.mxu0
  %v1735 = vadd.f32 0.0, %v1734
  %1736 = vmatmul.bf16.gmra.mxu0 %v1636
  %v1737 = vpop.f32.mrf.mxu0
  %v1738 = vadd.f32 0.0, %v1737
  %v1739 = vpop.f32.mrf.mxu0
  %v1740 = vadd.f32 0.0, %v1739
  %1741 = vdwg.mxu0
  %v1742 = vld [vmem:[%s2] sm:$0xff]
  %v1743 = vld [vmem:[%s2 + $0x8] sm:$0xff]
  %v1744 = vld [vmem:[%s2 + $0x10] sm:$0xff]
  %v1745 = vld [vmem:[%s2 + $0x18] sm:$0xff]
  %v1746 = vld [vmem:[%s2 + $0x20] sm:$0xff]
  %v1747 = vld [vmem:[%s2 + $0x28] sm:$0xff]
  %v1748 = vld [vmem:[%s2 + $0x30] sm:$0xff]
  %v1749 = vld [vmem:[%s2 + $0x38] sm:$0xff]
  %v1750 = vld [vmem:[%s2 + $0x40] sm:$0xff]
  %v1751 = vld [vmem:[%s2 + $0x48] sm:$0xff]
  %v1752 = vld [vmem:[%s2 + $0x50] sm:$0xff]
  %v1753 = vld [vmem:[%s2 + $0x58] sm:$0xff]
  %v1754 = vld [vmem:[%s2 + $0x60] sm:$0xff]
  %v1755 = vld [vmem:[%s2 + $0x68] sm:$0xff]
  %v1756 = vld [vmem:[%s2 + $0x70] sm:$0xff]
  %v1757 = vld [vmem:[%s2 + $0x78] sm:$0xff]
  %v1758 = vadd.f32 %v1742, %v1703
  %v1759 = vadd.f32 %v1743, %v1705
  %v1760 = vadd.f32 %v1744, %v1708
  %v1761 = vadd.f32 %v1745, %v1710
  %v1762 = vadd.f32 %v1746, %v1713
  %v1763 = vadd.f32 %v1747, %v1715
  %v1764 = vadd.f32 %v1748, %v1718
  %v1765 = vadd.f32 %v1749, %v1720
  %v1766 = vadd.f32 %v1750, %v1723
  %v1767 = vadd.f32 %v1751, %v1725
  %v1768 = vadd.f32 %v1752, %v1728
  %v1769 = vadd.f32 %v1753, %v1730
  %v1770 = vadd.f32 %v1754, %v1733
  %v1771 = vadd.f32 %v1755, %v1735
  %v1772 = vadd.f32 %v1756, %v1738
  %v1773 = vadd.f32 %v1757, %v1740
  %1774 = vst [vmem:[%s2] sm:$0xff] %v1758
  %1775 = vst [vmem:[%s2 + $0x8] sm:$0xff] %v1759
  %1776 = vst [vmem:[%s2 + $0x10] sm:$0xff] %v1760
  %1777 = vst [vmem:[%s2 + $0x18] sm:$0xff] %v1761
  %1778 = vst [vmem:[%s2 + $0x20] sm:$0xff] %v1762
  %1779 = vst [vmem:[%s2 + $0x28] sm:$0xff] %v1763
  %1780 = vst [vmem:[%s2 + $0x30] sm:$0xff] %v1764
  %1781 = vst [vmem:[%s2 + $0x38] sm:$0xff] %v1765
  %1782 = vst [vmem:[%s2 + $0x40] sm:$0xff] %v1766
  %1783 = vst [vmem:[%s2 + $0x48] sm:$0xff] %v1767
  %1784 = vst [vmem:[%s2 + $0x50] sm:$0xff] %v1768
  %1785 = vst [vmem:[%s2 + $0x58] sm:$0xff] %v1769
  %1786 = vst [vmem:[%s2 + $0x60] sm:$0xff] %v1770
  %1787 = vst [vmem:[%s2 + $0x68] sm:$0xff] %v1771
  %1788 = vst [vmem:[%s2 + $0x70] sm:$0xff] %v1772
  %1789 = vst [vmem:[%s2 + $0x78] sm:$0xff] %v1773
  %s1790 = scalar_lea.vmem %s0, 8
  %v1791 = vld [vmem:[%s1790] sm:$0xf]
  %v1792 = vld [vmem:[%s1790 + $0x8] sm:$0xf]
  %v1793 = vld [vmem:[%s1790 + $0x10] sm:$0xf]
  %v1794 = vld [vmem:[%s1790 + $0x18] sm:$0xf]
  %v1795 = vld [vmem:[%s1790 + $0x20] sm:$0xf]
  %v1796 = vld [vmem:[%s1790 + $0x28] sm:$0xf]
  %v1797 = vld [vmem:[%s1790 + $0x30] sm:$0xf]
  %v1798 = vld [vmem:[%s1790 + $0x38] sm:$0xf]
  %v1799 = vld [vmem:[%s1790 + $0x48] sm:$0xf]
  %v1800 = vld [vmem:[%s1790 + $0x50] sm:$0xf]
  %v1801 = vld [vmem:[%s1790 + $0x58] sm:$0xf]
  %v1802 = vld [vmem:[%s1790 + $0x60] sm:$0xf]
  %v1803 = vld [vmem:[%s1790 + $0x68] sm:$0xf]
  %v1804 = vld [vmem:[%s1790 + $0x70] sm:$0xf]
  %v1805 = vld [vmem:[%s1790 + $0x78] sm:$0xf]
  %v1806 = vld [vmem:[%s1790 + $0x80] sm:$0xf]
  %s1807 = scalar_lea.vmem %s1, 384
  %v1808 = vld [vmem:[%s1807] sm:$0xf]
  %v1809 = vld [vmem:[%s1807 + $0x4] sm:$0xf]
  %v1810 = vld [vmem:[%s1807 + $0x8] sm:$0xf]
  %v1811 = vld [vmem:[%s1807 + $0xc] sm:$0xf]
  %v1812 = vld [vmem:[%s1807 + $0x10] sm:$0xf]
  %v1813 = vld [vmem:[%s1807 + $0x14] sm:$0xf]
  %v1814 = vld [vmem:[%s1807 + $0x18] sm:$0xf]
  %v1815 = vld [vmem:[%s1807 + $0x1c] sm:$0xf]
  %v1816 = vld [vmem:[%s1807 + $0x20] sm:$0xf]
  %v1817 = vld [vmem:[%s1807 + $0x24] sm:$0xf]
  %v1818 = vld [vmem:[%s1807 + $0x28] sm:$0xf]
  %v1819 = vld [vmem:[%s1807 + $0x2c] sm:$0xf]
  %v1820 = vld [vmem:[%s1807 + $0x30] sm:$0xf]
  %v1821 = vld [vmem:[%s1807 + $0x34] sm:$0xf]
  %v1822 = vld [vmem:[%s1807 + $0x38] sm:$0xf]
  %v1823 = vld [vmem:[%s1807 + $0x3c] sm:$0xf]
  %v1840 = vunpack.c.l.b16 %v1791
  %v1841 = vunpack.c.l.b16 %v1792
  %v1842 = vunpack.c.l.b16 %v1793
  %v1843 = vunpack.c.l.b16 %v1794
  %v1844 = vunpack.c.l.b16 %v1795
  %v1845 = vunpack.c.l.b16 %v1796
  %v1846 = vunpack.c.l.b16 %v1797
  %v1847 = vunpack.c.l.b16 %v1798
  %v1848 = vunpack.c.l.b16 %v1799
  %v1849 = vunpack.c.l.b16 %v1800
  %v1850 = vunpack.c.l.b16 %v1801
  %v1851 = vunpack.c.l.b16 %v1802
  %v1852 = vunpack.c.l.b16 %v1803
  %v1853 = vunpack.c.l.b16 %v1804
  %v1854 = vunpack.c.l.b16 %v1805
  %v1855 = vunpack.c.l.b16 %v1806
  %v1856 = vpack.c.b16 %v1841, %v1840
  %v1857 = vpack.c.b16 %v1843, %v1842
  %v1858 = vpack.c.b16 %v1845, %v1844
  %v1859 = vpack.c.b16 %v1847, %v1846
  %v1860 = vpack.c.b16 %v1849, %v1848
  %v1861 = vpack.c.b16 %v1851, %v1850
  %v1862 = vpack.c.b16 %v1853, %v1852
  %v1863 = vpack.c.b16 %v1855, %v1854
  %v1888 = vunpack.c.l.b16 %v1808
  %v1889 = vunpack.c.l.b16 %v1809
  %v1890 = vunpack.c.l.b16 %v1810
  %v1891 = vunpack.c.l.b16 %v1811
  %v1892 = vunpack.c.l.b16 %v1812
  %v1893 = vunpack.c.l.b16 %v1813
  %v1894 = vunpack.c.l.b16 %v1814
  %v1895 = vunpack.c.l.b16 %v1815
  %v1896 = vunpack.c.l.b16 %v1816
  %v1897 = vunpack.c.l.b16 %v1817
  %v1898 = vunpack.c.l.b16 %v1818
  %v1899 = vunpack.c.l.b16 %v1819
  %v1900 = vunpack.c.l.b16 %v1820
  %v1901 = vunpack.c.l.b16 %v1821
  %v1902 = vunpack.c.l.b16 %v1822
  %v1903 = vunpack.c.l.b16 %v1823
  %v1904 = vpack.c.b16 %v1889, %v1888
  %v1905 = vpack.c.b16 %v1891, %v1890
  %v1906 = vpack.c.b16 %v1893, %v1892
  %v1907 = vpack.c.b16 %v1895, %v1894
  %v1908 = vpack.c.b16 %v1897, %v1896
  %v1909 = vpack.c.b16 %v1899, %v1898
  %v1910 = vpack.c.b16 %v1901, %v1900
  %v1911 = vpack.c.b16 %v1903, %v1902
  %1920 = vmatpush.bf16.msra.mxu0 %v1911
  %1921 = vmatpush.bf16.msra.mxu0 %v1910
  %1922 = vmatpush.bf16.msra.mxu0 %v1909
  %1923 = vmatpush.bf16.msra.mxu0 %v1908
  %1924 = vmatpush.bf16.msra.mxu0 %v1907
  %1925 = vmatpush.bf16.msra.mxu0 %v1906
  %1926 = vmatpush.bf16.msra.mxu0 %v1905
  %1927 = vmatpush.bf16.msra.mxu0 %v1904
  %1928 = vmatmul.bf16.gmra.mxu0 %v1856
  %v1929 = vpop.f32.mrf.mxu0
  %v1930 = vadd.f32 0.0, %v1929
  %v1931 = vpop.f32.mrf.mxu0
  %v1932 = vadd.f32 0.0, %v1931
  %1933 = vmatmul.bf16.gmra.mxu0 %v1857
  %v1934 = vpop.f32.mrf.mxu0
  %v1935 = vadd.f32 0.0, %v1934
  %v1936 = vpop.f32.mrf.mxu0
  %v1937 = vadd.f32 0.0, %v1936
  %1938 = vmatmul.bf16.gmra.mxu0 %v1858
  %v1939 = vpop.f32.mrf.mxu0
  %v1940 = vadd.f32 0.0, %v1939
  %v1941 = vpop.f32.mrf.mxu0
  %v1942 = vadd.f32 0.0, %v1941
  %1943 = vmatmul.bf16.gmra.mxu0 %v1859
  %v1944 = vpop.f32.mrf.mxu0
  %v1945 = vadd.f32 0.0, %v1944
  %v1946 = vpop.f32.mrf.mxu0
  %v1947 = vadd.f32 0.0, %v1946
  %1948 = vmatmul.bf16.gmra.mxu0 %v1860
  %v1949 = vpop.f32.mrf.mxu0
  %v1950 = vadd.f32 0.0, %v1949
  %v1951 = vpop.f32.mrf.mxu0
  %v1952 = vadd.f32 0.0, %v1951
  %1953 = vmatmul.bf16.gmra.mxu0 %v1861
  %v1954 = vpop.f32.mrf.mxu0
  %v1955 = vadd.f32 0.0, %v1954
  %v1956 = vpop.f32.mrf.mxu0
  %v1957 = vadd.f32 0.0, %v1956
  %1958 = vmatmul.bf16.gmra.mxu0 %v1862
  %v1959 = vpop.f32.mrf.mxu0
  %v1960 = vadd.f32 0.0, %v1959
  %v1961 = vpop.f32.mrf.mxu0
  %v1962 = vadd.f32 0.0, %v1961
  %1963 = vmatmul.bf16.gmra.mxu0 %v1863
  %v1964 = vpop.f32.mrf.mxu0
  %v1965 = vadd.f32 0.0, %v1964
  %v1966 = vpop.f32.mrf.mxu0
  %v1967 = vadd.f32 0.0, %v1966
  %1968 = vdwg.mxu0
  %v1969 = vld [vmem:[%s2] sm:$0xff]
  %v1970 = vld [vmem:[%s2 + $0x8] sm:$0xff]
  %v1971 = vld [vmem:[%s2 + $0x10] sm:$0xff]
  %v1972 = vld [vmem:[%s2 + $0x18] sm:$0xff]
  %v1973 = vld [vmem:[%s2 + $0x20] sm:$0xff]
  %v1974 = vld [vmem:[%s2 + $0x28] sm:$0xff]
  %v1975 = vld [vmem:[%s2 + $0x30] sm:$0xff]
  %v1976 = vld [vmem:[%s2 + $0x38] sm:$0xff]
  %v1977 = vld [vmem:[%s2 + $0x40] sm:$0xff]
  %v1978 = vld [vmem:[%s2 + $0x48] sm:$0xff]
  %v1979 = vld [vmem:[%s2 + $0x50] sm:$0xff]
  %v1980 = vld [vmem:[%s2 + $0x58] sm:$0xff]
  %v1981 = vld [vmem:[%s2 + $0x60] sm:$0xff]
  %v1982 = vld [vmem:[%s2 + $0x68] sm:$0xff]
  %v1983 = vld [vmem:[%s2 + $0x70] sm:$0xff]
  %v1984 = vld [vmem:[%s2 + $0x78] sm:$0xff]
  %v1985 = vadd.f32 %v1969, %v1930
  %v1986 = vadd.f32 %v1970, %v1932
  %v1987 = vadd.f32 %v1971, %v1935
  %v1988 = vadd.f32 %v1972, %v1937
  %v1989 = vadd.f32 %v1973, %v1940
  %v1990 = vadd.f32 %v1974, %v1942
  %v1991 = vadd.f32 %v1975, %v1945
  %v1992 = vadd.f32 %v1976, %v1947
  %v1993 = vadd.f32 %v1977, %v1950
  %v1994 = vadd.f32 %v1978, %v1952
  %v1995 = vadd.f32 %v1979, %v1955
  %v1996 = vadd.f32 %v1980, %v1957
  %v1997 = vadd.f32 %v1981, %v1960
  %v1998 = vadd.f32 %v1982, %v1962
  %v1999 = vadd.f32 %v1983, %v1965
  %v2000 = vadd.f32 %v1984, %v1967
  %2001 = vst [vmem:[%s2] sm:$0xff] %v1985
  %2002 = vst [vmem:[%s2 + $0x8] sm:$0xff] %v1986
  %2003 = vst [vmem:[%s2 + $0x10] sm:$0xff] %v1987
  %2004 = vst [vmem:[%s2 + $0x18] sm:$0xff] %v1988
  %2005 = vst [vmem:[%s2 + $0x20] sm:$0xff] %v1989
  %2006 = vst [vmem:[%s2 + $0x28] sm:$0xff] %v1990
  %2007 = vst [vmem:[%s2 + $0x30] sm:$0xff] %v1991
  %2008 = vst [vmem:[%s2 + $0x38] sm:$0xff] %v1992
  %2009 = vst [vmem:[%s2 + $0x40] sm:$0xff] %v1993
  %2010 = vst [vmem:[%s2 + $0x48] sm:$0xff] %v1994
  %2011 = vst [vmem:[%s2 + $0x50] sm:$0xff] %v1995
  %2012 = vst [vmem:[%s2 + $0x58] sm:$0xff] %v1996
  %2013 = vst [vmem:[%s2 + $0x60] sm:$0xff] %v1997
  %2014 = vst [vmem:[%s2 + $0x68] sm:$0xff] %v1998
  %2015 = vst [vmem:[%s2 + $0x70] sm:$0xff] %v1999
  %2016 = vst [vmem:[%s2 + $0x78] sm:$0xff] %v2000
  %s2017 = scalar_lea.vmem %s0, 152
  %v2018 = vld [vmem:[%s2017] sm:$0xf]
  %v2019 = vld [vmem:[%s2017 + $0x8] sm:$0xf]
  %v2020 = vld [vmem:[%s2017 + $0x10] sm:$0xf]
  %v2021 = vld [vmem:[%s2017 + $0x18] sm:$0xf]
  %v2022 = vld [vmem:[%s2017 + $0x20] sm:$0xf]
  %v2023 = vld [vmem:[%s2017 + $0x28] sm:$0xf]
  %v2024 = vld [vmem:[%s2017 + $0x30] sm:$0xf]
  %v2025 = vld [vmem:[%s2017 + $0x38] sm:$0xf]
  %v2026 = vld [vmem:[%s2017 + $0x48] sm:$0xf]
  %v2027 = vld [vmem:[%s2017 + $0x50] sm:$0xf]
  %v2028 = vld [vmem:[%s2017 + $0x58] sm:$0xf]
  %v2029 = vld [vmem:[%s2017 + $0x60] sm:$0xf]
  %v2030 = vld [vmem:[%s2017 + $0x68] sm:$0xf]
  %v2031 = vld [vmem:[%s2017 + $0x70] sm:$0xf]
  %v2032 = vld [vmem:[%s2017 + $0x78] sm:$0xf]
  %v2033 = vld [vmem:[%s2017 + $0x80] sm:$0xf]
  %s2034 = scalar_lea.vmem %s1, 448
  %v2035 = vld [vmem:[%s2034] sm:$0xf]
  %v2036 = vld [vmem:[%s2034 + $0x4] sm:$0xf]
  %v2037 = vld [vmem:[%s2034 + $0x8] sm:$0xf]
  %v2038 = vld [vmem:[%s2034 + $0xc] sm:$0xf]
  %v2039 = vld [vmem:[%s2034 + $0x10] sm:$0xf]
  %v2040 = vld [vmem:[%s2034 + $0x14] sm:$0xf]
  %v2041 = vld [vmem:[%s2034 + $0x18] sm:$0xf]
  %v2042 = vld [vmem:[%s2034 + $0x1c] sm:$0xf]
  %v2043 = vld [vmem:[%s2034 + $0x20] sm:$0xf]
  %v2044 = vld [vmem:[%s2034 + $0x24] sm:$0xf]
  %v2045 = vld [vmem:[%s2034 + $0x28] sm:$0xf]
  %v2046 = vld [vmem:[%s2034 + $0x2c] sm:$0xf]
  %v2047 = vld [vmem:[%s2034 + $0x30] sm:$0xf]
  %v2048 = vld [vmem:[%s2034 + $0x34] sm:$0xf]
  %v2049 = vld [vmem:[%s2034 + $0x38] sm:$0xf]
  %v2050 = vld [vmem:[%s2034 + $0x3c] sm:$0xf]
  %v2067 = vunpack.c.l.b16 %v2018
  %v2068 = vunpack.c.l.b16 %v2019
  %v2069 = vunpack.c.l.b16 %v2020
  %v2070 = vunpack.c.l.b16 %v2021
  %v2071 = vunpack.c.l.b16 %v2022
  %v2072 = vunpack.c.l.b16 %v2023
  %v2073 = vunpack.c.l.b16 %v2024
  %v2074 = vunpack.c.l.b16 %v2025
  %v2075 = vunpack.c.l.b16 %v2026
  %v2076 = vunpack.c.l.b16 %v2027
  %v2077 = vunpack.c.l.b16 %v2028
  %v2078 = vunpack.c.l.b16 %v2029
  %v2079 = vunpack.c.l.b16 %v2030
  %v2080 = vunpack.c.l.b16 %v2031
  %v2081 = vunpack.c.l.b16 %v2032
  %v2082 = vunpack.c.l.b16 %v2033
  %v2083 = vpack.c.b16 %v2068, %v2067
  %v2084 = vpack.c.b16 %v2070, %v2069
  %v2085 = vpack.c.b16 %v2072, %v2071
  %v2086 = vpack.c.b16 %v2074, %v2073
  %v2087 = vpack.c.b16 %v2076, %v2075
  %v2088 = vpack.c.b16 %v2078, %v2077
  %v2089 = vpack.c.b16 %v2080, %v2079
  %v2090 = vpack.c.b16 %v2082, %v2081
  %v2115 = vunpack.c.l.b16 %v2035
  %v2116 = vunpack.c.l.b16 %v2036
  %v2117 = vunpack.c.l.b16 %v2037
  %v2118 = vunpack.c.l.b16 %v2038
  %v2119 = vunpack.c.l.b16 %v2039
  %v2120 = vunpack.c.l.b16 %v2040
  %v2121 = vunpack.c.l.b16 %v2041
  %v2122 = vunpack.c.l.b16 %v2042
  %v2123 = vunpack.c.l.b16 %v2043
  %v2124 = vunpack.c.l.b16 %v2044
  %v2125 = vunpack.c.l.b16 %v2045
  %v2126 = vunpack.c.l.b16 %v2046
  %v2127 = vunpack.c.l.b16 %v2047
  %v2128 = vunpack.c.l.b16 %v2048
  %v2129 = vunpack.c.l.b16 %v2049
  %v2130 = vunpack.c.l.b16 %v2050
  %v2131 = vpack.c.b16 %v2116, %v2115
  %v2132 = vpack.c.b16 %v2118, %v2117
  %v2133 = vpack.c.b16 %v2120, %v2119
  %v2134 = vpack.c.b16 %v2122, %v2121
  %v2135 = vpack.c.b16 %v2124, %v2123
  %v2136 = vpack.c.b16 %v2126, %v2125
  %v2137 = vpack.c.b16 %v2128, %v2127
  %v2138 = vpack.c.b16 %v2130, %v2129
  %2147 = vmatpush.bf16.msra.mxu0 %v2138
  %2148 = vmatpush.bf16.msra.mxu0 %v2137
  %2149 = vmatpush.bf16.msra.mxu0 %v2136
  %2150 = vmatpush.bf16.msra.mxu0 %v2135
  %2151 = vmatpush.bf16.msra.mxu0 %v2134
  %2152 = vmatpush.bf16.msra.mxu0 %v2133
  %2153 = vmatpush.bf16.msra.mxu0 %v2132
  %2154 = vmatpush.bf16.msra.mxu0 %v2131
  %2155 = vmatmul.bf16.gmra.mxu0 %v2083
  %v2156 = vpop.f32.mrf.mxu0
  %v2157 = vadd.f32 0.0, %v2156
  %v2158 = vpop.f32.mrf.mxu0
  %v2159 = vadd.f32 0.0, %v2158
  %2160 = vmatmul.bf16.gmra.mxu0 %v2084
  %v2161 = vpop.f32.mrf.mxu0
  %v2162 = vadd.f32 0.0, %v2161
  %v2163 = vpop.f32.mrf.mxu0
  %v2164 = vadd.f32 0.0, %v2163
  %2165 = vmatmul.bf16.gmra.mxu0 %v2085
  %v2166 = vpop.f32.mrf.mxu0
  %v2167 = vadd.f32 0.0, %v2166
  %v2168 = vpop.f32.mrf.mxu0
  %v2169 = vadd.f32 0.0, %v2168
  %2170 = vmatmul.bf16.gmra.mxu0 %v2086
  %v2171 = vpop.f32.mrf.mxu0
  %v2172 = vadd.f32 0.0, %v2171
  %v2173 = vpop.f32.mrf.mxu0
  %v2174 = vadd.f32 0.0, %v2173
  %2175 = vmatmul.bf16.gmra.mxu0 %v2087
  %v2176 = vpop.f32.mrf.mxu0
  %v2177 = vadd.f32 0.0, %v2176
  %v2178 = vpop.f32.mrf.mxu0
  %v2179 = vadd.f32 0.0, %v2178
  %2180 = vmatmul.bf16.gmra.mxu0 %v2088
  %v2181 = vpop.f32.mrf.mxu0
  %v2182 = vadd.f32 0.0, %v2181
  %v2183 = vpop.f32.mrf.mxu0
  %v2184 = vadd.f32 0.0, %v2183
  %2185 = vmatmul.bf16.gmra.mxu0 %v2089
  %v2186 = vpop.f32.mrf.mxu0
  %v2187 = vadd.f32 0.0, %v2186
  %v2188 = vpop.f32.mrf.mxu0
  %v2189 = vadd.f32 0.0, %v2188
  %2190 = vmatmul.bf16.gmra.mxu0 %v2090
  %v2191 = vpop.f32.mrf.mxu0
  %v2192 = vadd.f32 0.0, %v2191
  %v2193 = vpop.f32.mrf.mxu0
  %v2194 = vadd.f32 0.0, %v2193
  %2195 = vdwg.mxu0
  %v2196 = vld [vmem:[%s2] sm:$0xff]
  %v2197 = vld [vmem:[%s2 + $0x8] sm:$0xff]
  %v2198 = vld [vmem:[%s2 + $0x10] sm:$0xff]
  %v2199 = vld [vmem:[%s2 + $0x18] sm:$0xff]
  %v2200 = vld [vmem:[%s2 + $0x20] sm:$0xff]
  %v2201 = vld [vmem:[%s2 + $0x28] sm:$0xff]
  %v2202 = vld [vmem:[%s2 + $0x30] sm:$0xff]
  %v2203 = vld [vmem:[%s2 + $0x38] sm:$0xff]
  %v2204 = vld [vmem:[%s2 + $0x40] sm:$0xff]
  %v2205 = vld [vmem:[%s2 + $0x48] sm:$0xff]
  %v2206 = vld [vmem:[%s2 + $0x50] sm:$0xff]
  %v2207 = vld [vmem:[%s2 + $0x58] sm:$0xff]
  %v2208 = vld [vmem:[%s2 + $0x60] sm:$0xff]
  %v2209 = vld [vmem:[%s2 + $0x68] sm:$0xff]
  %v2210 = vld [vmem:[%s2 + $0x70] sm:$0xff]
  %v2211 = vld [vmem:[%s2 + $0x78] sm:$0xff]
  %v2212 = vadd.f32 %v2196, %v2157
  %v2213 = vadd.f32 %v2197, %v2159
  %v2214 = vadd.f32 %v2198, %v2162
  %v2215 = vadd.f32 %v2199, %v2164
  %v2216 = vadd.f32 %v2200, %v2167
  %v2217 = vadd.f32 %v2201, %v2169
  %v2218 = vadd.f32 %v2202, %v2172
  %v2219 = vadd.f32 %v2203, %v2174
  %v2220 = vadd.f32 %v2204, %v2177
  %v2221 = vadd.f32 %v2205, %v2179
  %v2222 = vadd.f32 %v2206, %v2182
  %v2223 = vadd.f32 %v2207, %v2184
  %v2224 = vadd.f32 %v2208, %v2187
  %v2225 = vadd.f32 %v2209, %v2189
  %v2226 = vadd.f32 %v2210, %v2192
  %v2227 = vadd.f32 %v2211, %v2194
  %2228 = vst [vmem:[%s2] sm:$0xff] %v2212
  %2229 = vst [vmem:[%s2 + $0x8] sm:$0xff] %v2213
  %2230 = vst [vmem:[%s2 + $0x10] sm:$0xff] %v2214
  %2231 = vst [vmem:[%s2 + $0x18] sm:$0xff] %v2215
  %2232 = vst [vmem:[%s2 + $0x20] sm:$0xff] %v2216
  %2233 = vst [vmem:[%s2 + $0x28] sm:$0xff] %v2217
  %2234 = vst [vmem:[%s2 + $0x30] sm:$0xff] %v2218
  %2235 = vst [vmem:[%s2 + $0x38] sm:$0xff] %v2219
  %2236 = vst [vmem:[%s2 + $0x40] sm:$0xff] %v2220
  %2237 = vst [vmem:[%s2 + $0x48] sm:$0xff] %v2221
  %2238 = vst [vmem:[%s2 + $0x50] sm:$0xff] %v2222
  %2239 = vst [vmem:[%s2 + $0x58] sm:$0xff] %v2223
  %2240 = vst [vmem:[%s2 + $0x60] sm:$0xff] %v2224
  %2241 = vst [vmem:[%s2 + $0x68] sm:$0xff] %v2225
  %2242 = vst [vmem:[%s2 + $0x70] sm:$0xff] %v2226
  %2243 = vst [vmem:[%s2 + $0x78] sm:$0xff] %v2227
  %v2244 = vld [vmem:[%s1790] sm:$0xf]
  %v2245 = vld [vmem:[%s1790 + $0x4] sm:$0x1]
  %v2246 = vld [vmem:[%s1790 + $0x8] sm:$0xf]
  %v2247 = vld [vmem:[%s1790 + $0xc] sm:$0x1]
  %v2248 = vld [vmem:[%s1790 + $0x10] sm:$0xf]
  %v2249 = vld [vmem:[%s1790 + $0x14] sm:$0x1]
  %v2250 = vld [vmem:[%s1790 + $0x18] sm:$0xf]
  %v2251 = vld [vmem:[%s1790 + $0x1c] sm:$0x1]
  %v2252 = vld [vmem:[%s1790 + $0x20] sm:$0xf]
  %v2253 = vld [vmem:[%s1790 + $0x24] sm:$0x1]
  %v2254 = vld [vmem:[%s1790 + $0x28] sm:$0xf]
  %v2255 = vld [vmem:[%s1790 + $0x2c] sm:$0x1]
  %v2256 = vld [vmem:[%s1790 + $0x30] sm:$0xf]
  %v2257 = vld [vmem:[%s1790 + $0x34] sm:$0x1]
  %v2258 = vld [vmem:[%s1790 + $0x38] sm:$0xf]
  %v2259 = vld [vmem:[%s1790 + $0x3c] sm:$0x1]
  %v2260 = vld [vmem:[%s1790 + $0x48] sm:$0xf]
  %v2261 = vld [vmem:[%s1790 + $0x4c] sm:$0x1]
  %v2262 = vld [vmem:[%s1790 + $0x50] sm:$0xf]
  %v2263 = vld [vmem:[%s1790 + $0x54] sm:$0x1]
  %v2264 = vld [vmem:[%s1790 + $0x58] sm:$0xf]
  %v2265 = vld [vmem:[%s1790 + $0x5c] sm:$0x1]
  %v2266 = vld [vmem:[%s1790 + $0x60] sm:$0xf]
  %v2267 = vld [vmem:[%s1790 + $0x64] sm:$0x1]
  %v2268 = vld [vmem:[%s1790 + $0x68] sm:$0xf]
  %v2269 = vld [vmem:[%s1790 + $0x6c] sm:$0x1]
  %v2270 = vld [vmem:[%s1790 + $0x70] sm:$0xf]
  %v2271 = vld [vmem:[%s1790 + $0x74] sm:$0x1]
  %v2272 = vld [vmem:[%s1790 + $0x78] sm:$0xf]
  %v2273 = vld [vmem:[%s1790 + $0x7c] sm:$0x1]
  %v2274 = vld [vmem:[%s1790 + $0x80] sm:$0xf]
  %v2275 = vld [vmem:[%s1790 + $0x84] sm:$0x1]
  %v2277 = vshrl.u32 %v2244, 16
  %v2279 = vrot.slane %v2277, 4
  %v2280 = vshll.u32 %v2244, 16
  %v2282 = vrot.slane %v2280, 5
  %v2283 = vor.u32 %v2279, %v2282
  %v2284 = vrot.slane %v2283, 4
  %v2286 = vshll.u32 %v2245, 16
  %v2288 = vrot.slane %v2286, 5
  %v2289 = vsel %vm467, %v2284, %v2288
  %v2291 = vshrl.u32 %v2246, 16
  %v2293 = vrot.slane %v2291, 4
  %v2294 = vshll.u32 %v2246, 16
  %v2296 = vrot.slane %v2294, 5
  %v2297 = vor.u32 %v2293, %v2296
  %v2298 = vrot.slane %v2297, 4
  %v2300 = vshll.u32 %v2247, 16
  %v2302 = vrot.slane %v2300, 5
  %v2303 = vsel %vm467, %v2298, %v2302
  %v2305 = vshrl.u32 %v2248, 16
  %v2307 = vrot.slane %v2305, 4
  %v2308 = vshll.u32 %v2248, 16
  %v2310 = vrot.slane %v2308, 5
  %v2311 = vor.u32 %v2307, %v2310
  %v2312 = vrot.slane %v2311, 4
  %v2314 = vshll.u32 %v2249, 16
  %v2316 = vrot.slane %v2314, 5
  %v2317 = vsel %vm467, %v2312, %v2316
  %v2319 = vshrl.u32 %v2250, 16
  %v2321 = vrot.slane %v2319, 4
  %v2322 = vshll.u32 %v2250, 16
  %v2324 = vrot.slane %v2322, 5
  %v2325 = vor.u32 %v2321, %v2324
  %v2326 = vrot.slane %v2325, 4
  %v2328 = vshll.u32 %v2251, 16
  %v2330 = vrot.slane %v2328, 5
  %v2331 = vsel %vm467, %v2326, %v2330
  %v2333 = vshrl.u32 %v2252, 16
  %v2335 = vrot.slane %v2333, 4
  %v2336 = vshll.u32 %v2252, 16
  %v2338 = vrot.slane %v2336, 5
  %v2339 = vor.u32 %v2335, %v2338
  %v2340 = vrot.slane %v2339, 4
  %v2342 = vshll.u32 %v2253, 16
  %v2344 = vrot.slane %v2342, 5
  %v2345 = vsel %vm467, %v2340, %v2344
  %v2347 = vshrl.u32 %v2254, 16
  %v2349 = vrot.slane %v2347, 4
  %v2350 = vshll.u32 %v2254, 16
  %v2352 = vrot.slane %v2350, 5
  %v2353 = vor.u32 %v2349, %v2352
  %v2354 = vrot.slane %v2353, 4
  %v2356 = vshll.u32 %v2255, 16
  %v2358 = vrot.slane %v2356, 5
  %v2359 = vsel %vm467, %v2354, %v2358
  %v2361 = vshrl.u32 %v2256, 16
  %v2363 = vrot.slane %v2361, 4
  %v2364 = vshll.u32 %v2256, 16
  %v2366 = vrot.slane %v2364, 5
  %v2367 = vor.u32 %v2363, %v2366
  %v2368 = vrot.slane %v2367, 4
  %v2370 = vshll.u32 %v2257, 16
  %v2372 = vrot.slane %v2370, 5
  %v2373 = vsel %vm467, %v2368, %v2372
  %v2375 = vshrl.u32 %v2258, 16
  %v2377 = vrot.slane %v2375, 4
  %v2378 = vshll.u32 %v2258, 16
  %v2380 = vrot.slane %v2378, 5
  %v2381 = vor.u32 %v2377, %v2380
  %v2382 = vrot.slane %v2381, 4
  %v2384 = vshll.u32 %v2259, 16
  %v2386 = vrot.slane %v2384, 5
  %v2387 = vsel %vm467, %v2382, %v2386
  %v2389 = vshrl.u32 %v2260, 16
  %v2391 = vrot.slane %v2389, 4
  %v2392 = vshll.u32 %v2260, 16
  %v2394 = vrot.slane %v2392, 5
  %v2395 = vor.u32 %v2391, %v2394
  %v2396 = vrot.slane %v2395, 4
  %v2398 = vshll.u32 %v2261, 16
  %v2400 = vrot.slane %v2398, 5
  %v2401 = vsel %vm467, %v2396, %v2400
  %v2403 = vshrl.u32 %v2262, 16
  %v2405 = vrot.slane %v2403, 4
  %v2406 = vshll.u32 %v2262, 16
  %v2408 = vrot.slane %v2406, 5
  %v2409 = vor.u32 %v2405, %v2408
  %v2410 = vrot.slane %v2409, 4
  %v2412 = vshll.u32 %v2263, 16
  %v2414 = vrot.slane %v2412, 5
  %v2415 = vsel %vm467, %v2410, %v2414
  %v2417 = vshrl.u32 %v2264, 16
  %v2419 = vrot.slane %v2417, 4
  %v2420 = vshll.u32 %v2264, 16
  %v2422 = vrot.slane %v2420, 5
  %v2423 = vor.u32 %v2419, %v2422
  %v2424 = vrot.slane %v2423, 4
  %v2426 = vshll.u32 %v2265, 16
  %v2428 = vrot.slane %v2426, 5
  %v2429 = vsel %vm467, %v2424, %v2428
  %v2431 = vshrl.u32 %v2266, 16
  %v2433 = vrot.slane %v2431, 4
  %v2434 = vshll.u32 %v2266, 16
  %v2436 = vrot.slane %v2434, 5
  %v2437 = vor.u32 %v2433, %v2436
  %v2438 = vrot.slane %v2437, 4
  %v2440 = vshll.u32 %v2267, 16
  %v2442 = vrot.slane %v2440, 5
  %v2443 = vsel %vm467, %v2438, %v2442
  %v2445 = vshrl.u32 %v2268, 16
  %v2447 = vrot.slane %v2445, 4
  %v2448 = vshll.u32 %v2268, 16
  %v2450 = vrot.slane %v2448, 5
  %v2451 = vor.u32 %v2447, %v2450
  %v2452 = vrot.slane %v2451, 4
  %v2454 = vshll.u32 %v2269, 16
  %v2456 = vrot.slane %v2454, 5
  %v2457 = vsel %vm467, %v2452, %v2456
  %v2459 = vshrl.u32 %v2270, 16
  %v2461 = vrot.slane %v2459, 4
  %v2462 = vshll.u32 %v2270, 16
  %v2464 = vrot.slane %v2462, 5
  %v2465 = vor.u32 %v2461, %v2464
  %v2466 = vrot.slane %v2465, 4
  %v2468 = vshll.u32 %v2271, 16
  %v2470 = vrot.slane %v2468, 5
  %v2471 = vsel %vm467, %v2466, %v2470
  %v2473 = vshrl.u32 %v2272, 16
  %v2475 = vrot.slane %v2473, 4
  %v2476 = vshll.u32 %v2272, 16
  %v2478 = vrot.slane %v2476, 5
  %v2479 = vor.u32 %v2475, %v2478
  %v2480 = vrot.slane %v2479, 4
  %v2482 = vshll.u32 %v2273, 16
  %v2484 = vrot.slane %v2482, 5
  %v2485 = vsel %vm467, %v2480, %v2484
  %v2487 = vshrl.u32 %v2274, 16
  %v2489 = vrot.slane %v2487, 4
  %v2490 = vshll.u32 %v2274, 16
  %v2492 = vrot.slane %v2490, 5
  %v2493 = vor.u32 %v2489, %v2492
  %v2494 = vrot.slane %v2493, 4
  %v2496 = vshll.u32 %v2275, 16
  %v2498 = vrot.slane %v2496, 5
  %v2499 = vsel %vm467, %v2494, %v2498
  %s2500 = scalar_lea.vmem %s1, 512
  %v2501 = vld [vmem:[%s2500] sm:$0xf]
  %v2502 = vld [vmem:[%s2500 + $0x4] sm:$0xf]
  %v2503 = vld [vmem:[%s2500 + $0x8] sm:$0xf]
  %v2504 = vld [vmem:[%s2500 + $0xc] sm:$0xf]
  %v2505 = vld [vmem:[%s2500 + $0x10] sm:$0xf]
  %v2506 = vld [vmem:[%s2500 + $0x14] sm:$0xf]
  %v2507 = vld [vmem:[%s2500 + $0x18] sm:$0xf]
  %v2508 = vld [vmem:[%s2500 + $0x1c] sm:$0xf]
  %v2509 = vld [vmem:[%s2500 + $0x20] sm:$0xf]
  %v2510 = vld [vmem:[%s2500 + $0x24] sm:$0xf]
  %v2511 = vld [vmem:[%s2500 + $0x28] sm:$0xf]
  %v2512 = vld [vmem:[%s2500 + $0x2c] sm:$0xf]
  %v2513 = vld [vmem:[%s2500 + $0x30] sm:$0xf]
  %v2514 = vld [vmem:[%s2500 + $0x34] sm:$0xf]
  %v2515 = vld [vmem:[%s2500 + $0x38] sm:$0xf]
  %v2516 = vld [vmem:[%s2500 + $0x3c] sm:$0xf]
  %v2517 = vunpack.c.l.b16 %v2289
  %v2518 = vunpack.c.l.b16 %v2303
  %v2519 = vunpack.c.l.b16 %v2317
  %v2520 = vunpack.c.l.b16 %v2331
  %v2521 = vunpack.c.l.b16 %v2345
  %v2522 = vunpack.c.l.b16 %v2359
  %v2523 = vunpack.c.l.b16 %v2373
  %v2524 = vunpack.c.l.b16 %v2387
  %v2525 = vunpack.c.l.b16 %v2401
  %v2526 = vunpack.c.l.b16 %v2415
  %v2527 = vunpack.c.l.b16 %v2429
  %v2528 = vunpack.c.l.b16 %v2443
  %v2529 = vunpack.c.l.b16 %v2457
  %v2530 = vunpack.c.l.b16 %v2471
  %v2531 = vunpack.c.l.b16 %v2485
  %v2532 = vunpack.c.l.b16 %v2499
  %v2533 = vpack.c.b16 %v2518, %v2517
  %v2534 = vpack.c.b16 %v2520, %v2519
  %v2535 = vpack.c.b16 %v2522, %v2521
  %v2536 = vpack.c.b16 %v2524, %v2523
  %v2537 = vpack.c.b16 %v2526, %v2525
  %v2538 = vpack.c.b16 %v2528, %v2527
  %v2539 = vpack.c.b16 %v2530, %v2529
  %v2540 = vpack.c.b16 %v2532, %v2531
  %v2565 = vunpack.c.l.b16 %v2501
  %v2566 = vunpack.c.l.b16 %v2502
  %v2567 = vunpack.c.l.b16 %v2503
  %v2568 = vunpack.c.l.b16 %v2504
  %v2569 = vunpack.c.l.b16 %v2505
  %v2570 = vunpack.c.l.b16 %v2506
  %v2571 = vunpack.c.l.b16 %v2507
  %v2572 = vunpack.c.l.b16 %v2508
  %v2573 = vunpack.c.l.b16 %v2509
  %v2574 = vunpack.c.l.b16 %v2510
  %v2575 = vunpack.c.l.b16 %v2511
  %v2576 = vunpack.c.l.b16 %v2512
  %v2577 = vunpack.c.l.b16 %v2513
  %v2578 = vunpack.c.l.b16 %v2514
  %v2579 = vunpack.c.l.b16 %v2515
  %v2580 = vunpack.c.l.b16 %v2516
  %v2581 = vpack.c.b16 %v2566, %v2565
  %v2582 = vpack.c.b16 %v2568, %v2567
  %v2583 = vpack.c.b16 %v2570, %v2569
  %v2584 = vpack.c.b16 %v2572, %v2571
  %v2585 = vpack.c.b16 %v2574, %v2573
  %v2586 = vpack.c.b16 %v2576, %v2575
  %v2587 = vpack.c.b16 %v2578, %v2577
  %v2588 = vpack.c.b16 %v2580, %v2579
  %2597 = vmatpush.bf16.msra.mxu0 %v2588
  %2598 = vmatpush.bf16.msra.mxu0 %v2587
  %2599 = vmatpush.bf16.msra.mxu0 %v2586
  %2600 = vmatpush.bf16.msra.mxu0 %v2585
  %2601 = vmatpush.bf16.msra.mxu0 %v2584
  %2602 = vmatpush.bf16.msra.mxu0 %v2583
  %2603 = vmatpush.bf16.msra.mxu0 %v2582
  %2604 = vmatpush.bf16.msra.mxu0 %v2581
  %2605 = vmatmul.bf16.gmra.mxu0 %v2533
  %v2606 = vpop.f32.mrf.mxu0
  %v2607 = vadd.f32 0.0, %v2606
  %v2608 = vpop.f32.mrf.mxu0
  %v2609 = vadd.f32 0.0, %v2608
  %2610 = vmatmul.bf16.gmra.mxu0 %v2534
  %v2611 = vpop.f32.mrf.mxu0
  %v2612 = vadd.f32 0.0, %v2611
  %v2613 = vpop.f32.mrf.mxu0
  %v2614 = vadd.f32 0.0, %v2613
  %2615 = vmatmul.bf16.gmra.mxu0 %v2535
  %v2616 = vpop.f32.mrf.mxu0
  %v2617 = vadd.f32 0.0, %v2616
  %v2618 = vpop.f32.mrf.mxu0
  %v2619 = vadd.f32 0.0, %v2618
  %2620 = vmatmul.bf16.gmra.mxu0 %v2536
  %v2621 = vpop.f32.mrf.mxu0
  %v2622 = vadd.f32 0.0, %v2621
  %v2623 = vpop.f32.mrf.mxu0
  %v2624 = vadd.f32 0.0, %v2623
  %2625 = vmatmul.bf16.gmra.mxu0 %v2537
  %v2626 = vpop.f32.mrf.mxu0
  %v2627 = vadd.f32 0.0, %v2626
  %v2628 = vpop.f32.mrf.mxu0
  %v2629 = vadd.f32 0.0, %v2628
  %2630 = vmatmul.bf16.gmra.mxu0 %v2538
  %v2631 = vpop.f32.mrf.mxu0
  %v2632 = vadd.f32 0.0, %v2631
  %v2633 = vpop.f32.mrf.mxu0
  %v2634 = vadd.f32 0.0, %v2633
  %2635 = vmatmul.bf16.gmra.mxu0 %v2539
  %v2636 = vpop.f32.mrf.mxu0
  %v2637 = vadd.f32 0.0, %v2636
  %v2638 = vpop.f32.mrf.mxu0
  %v2639 = vadd.f32 0.0, %v2638
  %2640 = vmatmul.bf16.gmra.mxu0 %v2540
  %v2641 = vpop.f32.mrf.mxu0
  %v2642 = vadd.f32 0.0, %v2641
  %v2643 = vpop.f32.mrf.mxu0
  %v2644 = vadd.f32 0.0, %v2643
  %2645 = vdwg.mxu0
  %v2646 = vld [vmem:[%s2] sm:$0xff]
  %v2647 = vld [vmem:[%s2 + $0x8] sm:$0xff]
  %v2648 = vld [vmem:[%s2 + $0x10] sm:$0xff]
  %v2649 = vld [vmem:[%s2 + $0x18] sm:$0xff]
  %v2650 = vld [vmem:[%s2 + $0x20] sm:$0xff]
  %v2651 = vld [vmem:[%s2 + $0x28] sm:$0xff]
  %v2652 = vld [vmem:[%s2 + $0x30] sm:$0xff]
  %v2653 = vld [vmem:[%s2 + $0x38] sm:$0xff]
  %v2654 = vld [vmem:[%s2 + $0x40] sm:$0xff]
  %v2655 = vld [vmem:[%s2 + $0x48] sm:$0xff]
  %v2656 = vld [vmem:[%s2 + $0x50] sm:$0xff]
  %v2657 = vld [vmem:[%s2 + $0x58] sm:$0xff]
  %v2658 = vld [vmem:[%s2 + $0x60] sm:$0xff]
  %v2659 = vld [vmem:[%s2 + $0x68] sm:$0xff]
  %v2660 = vld [vmem:[%s2 + $0x70] sm:$0xff]
  %v2661 = vld [vmem:[%s2 + $0x78] sm:$0xff]
  %v2662 = vadd.f32 %v2646, %v2607
  %v2663 = vadd.f32 %v2647, %v2609
  %v2664 = vadd.f32 %v2648, %v2612
  %v2665 = vadd.f32 %v2649, %v2614
  %v2666 = vadd.f32 %v2650, %v2617
  %v2667 = vadd.f32 %v2651, %v2619
  %v2668 = vadd.f32 %v2652, %v2622
  %v2669 = vadd.f32 %v2653, %v2624
  %v2670 = vadd.f32 %v2654, %v2627
  %v2671 = vadd.f32 %v2655, %v2629
  %v2672 = vadd.f32 %v2656, %v2632
  %v2673 = vadd.f32 %v2657, %v2634
  %v2674 = vadd.f32 %v2658, %v2637
  %v2675 = vadd.f32 %v2659, %v2639
  %v2676 = vadd.f32 %v2660, %v2642
  %v2677 = vadd.f32 %v2661, %v2644
  %2678 = vst [vmem:[%s2] sm:$0xff] %v2662
  %2679 = vst [vmem:[%s2 + $0x8] sm:$0xff] %v2663
  %2680 = vst [vmem:[%s2 + $0x10] sm:$0xff] %v2664
  %2681 = vst [vmem:[%s2 + $0x18] sm:$0xff] %v2665
  %2682 = vst [vmem:[%s2 + $0x20] sm:$0xff] %v2666
  %2683 = vst [vmem:[%s2 + $0x28] sm:$0xff] %v2667
  %2684 = vst [vmem:[%s2 + $0x30] sm:$0xff] %v2668
  %2685 = vst [vmem:[%s2 + $0x38] sm:$0xff] %v2669
  %2686 = vst [vmem:[%s2 + $0x40] sm:$0xff] %v2670
  %2687 = vst [vmem:[%s2 + $0x48] sm:$0xff] %v2671
  %2688 = vst [vmem:[%s2 + $0x50] sm:$0xff] %v2672
  %2689 = vst [vmem:[%s2 + $0x58] sm:$0xff] %v2673
  %2690 = vst [vmem:[%s2 + $0x60] sm:$0xff] %v2674
  %2691 = vst [vmem:[%s2 + $0x68] sm:$0xff] %v2675
  %2692 = vst [vmem:[%s2 + $0x70] sm:$0xff] %v2676
  %2693 = vst [vmem:[%s2 + $0x78] sm:$0xff] %v2677
  %v2694 = vld [vmem:[%s2] sm:$0xff]
  %v2695 = vld [vmem:[%s2 + $0x8] sm:$0xff]
  %v2696 = vld [vmem:[%s2 + $0x10] sm:$0xff]
  %v2697 = vld [vmem:[%s2 + $0x18] sm:$0xff]
  %v2698 = vld [vmem:[%s2 + $0x20] sm:$0xff]
  %v2699 = vld [vmem:[%s2 + $0x28] sm:$0xff]
  %v2700 = vld [vmem:[%s2 + $0x30] sm:$0xff]
  %v2701 = vld [vmem:[%s2 + $0x38] sm:$0xff]
  %v2702 = vld [vmem:[%s2 + $0x40] sm:$0xff]
  %v2703 = vld [vmem:[%s2 + $0x48] sm:$0xff]
  %v2704 = vld [vmem:[%s2 + $0x50] sm:$0xff]
  %v2705 = vld [vmem:[%s2 + $0x58] sm:$0xff]
  %v2706 = vld [vmem:[%s2 + $0x60] sm:$0xff]
  %v2707 = vld [vmem:[%s2 + $0x68] sm:$0xff]
  %v2708 = vld [vmem:[%s2 + $0x70] sm:$0xff]
  %v2709 = vld [vmem:[%s2 + $0x78] sm:$0xff]
  %v2710 = vadd.f32 %v2694, %v2695
  %v2711 = vadd.f32 %v2710, %v2696
  %v2712 = vadd.f32 %v2711, %v2697
  %v2713 = vadd.f32 %v2712, %v2698
  %v2714 = vadd.f32 %v2713, %v2699
  %v2715 = vadd.f32 %v2714, %v2700
  %v2716 = vadd.f32 %v2715, %v2701
  %v2717 = vadd.f32 %v2716, %v2702
  %v2718 = vadd.f32 %v2717, %v2703
  %v2719 = vadd.f32 %v2718, %v2704
  %v2720 = vadd.f32 %v2719, %v2705
  %v2721 = vadd.f32 %v2720, %v2706
  %v2722 = vadd.f32 %v2721, %v2707
  %v2723 = vadd.f32 %v2722, %v2708
  %v2724 = vadd.f32 %v2723, %v2709
  %v2725 = vrot.slane %v2724, 4
  %v2726 = vadd.f32 %v2724, %v2725
  %v2727 = vrot.slane %v2726, 2
  %v2728 = vadd.f32 %v2726, %v2727
  %v2729 = vrot.slane %v2728, 1
  %v2730 = vadd.f32 %v2728, %v2729
  %v2731 = vmul.f32 %v2694, %v2694
  %v2732 = vmul.f32 %v2695, %v2695
  %v2733 = vmul.f32 %v2696, %v2696
  %v2734 = vmul.f32 %v2697, %v2697
  %v2735 = vmul.f32 %v2698, %v2698
  %v2736 = vmul.f32 %v2699, %v2699
  %v2737 = vmul.f32 %v2700, %v2700
  %v2738 = vmul.f32 %v2701, %v2701
  %v2739 = vmul.f32 %v2702, %v2702
  %v2740 = vmul.f32 %v2703, %v2703
  %v2741 = vmul.f32 %v2704, %v2704
  %v2742 = vmul.f32 %v2705, %v2705
  %v2743 = vmul.f32 %v2706, %v2706
  %v2744 = vmul.f32 %v2707, %v2707
  %v2745 = vmul.f32 %v2708, %v2708
  %v2746 = vmul.f32 %v2709, %v2709
  %v2747 = vadd.f32 %v2731, %v2732
  %v2748 = vadd.f32 %v2747, %v2733
  %v2749 = vadd.f32 %v2748, %v2734
  %v2750 = vadd.f32 %v2749, %v2735
  %v2751 = vadd.f32 %v2750, %v2736
  %v2752 = vadd.f32 %v2751, %v2737
  %v2753 = vadd.f32 %v2752, %v2738
  %v2754 = vadd.f32 %v2753, %v2739
  %v2755 = vadd.f32 %v2754, %v2740
  %v2756 = vadd.f32 %v2755, %v2741
  %v2757 = vadd.f32 %v2756, %v2742
  %v2758 = vadd.f32 %v2757, %v2743
  %v2759 = vadd.f32 %v2758, %v2744
  %v2760 = vadd.f32 %v2759, %v2745
  %v2761 = vadd.f32 %v2760, %v2746
  %v2762 = vrot.slane %v2761, 4
  %v2763 = vadd.f32 %v2761, %v2762
  %v2764 = vrot.slane %v2763, 2
  %v2765 = vadd.f32 %v2763, %v2764
  %v2766 = vrot.slane %v2765, 1
  %v2767 = vadd.f32 %v2765, %v2766
  %vm2768 = vcmask 1040384
  %v2769 = vsel %vm2768, %v2730, %v2767
  %2770 = vst [vmem:[%s3] sm:$0x3] %v2769
  // Predicated region
  $region10: #{basic_block_forward.4} parent=0 // pred_check
    _
  $region11: #{basic_block_forward.4} parent=0 // pred_check_branch
    %2772 = sbr.rel (0) target = $region13
  $region12: #{basic_block_forward.4} parent=0 // pred_region
    _
  $region13: #{basic_block_forward.4} parent=0 // pred_fallthru
    _
  // Predicated region
  $region14: #{basic_block_forward.4} parent=0 // pred_check
    _
  $region15: #{basic_block_forward.4} parent=0 // pred_check_branch
    %2774 = sbr.rel (0) target = $region17
  $region16: #{basic_block_forward.4} parent=0 // pred_region
    _
  $region17: #{basic_block_forward.4} parent=0 // pred_fallthru
    _
  // Predicated region
  $region18: #{basic_block_forward.4} parent=0 // pred_check
    _
  $region19: #{basic_block_forward.4} parent=0 // pred_check_branch
    %2776 = sbr.rel (0) target = $region21
  $region20: #{basic_block_forward.4} parent=0 // pred_region
    _
  $region21: #{basic_block_forward.4} parent=0 // pred_fallthru
    _
  // Predicated region
  $region22: #{basic_block_forward.4} parent=0 // pred_check
    _
  $region23: #{basic_block_forward.4} parent=0 // pred_check_branch
    %2778 = sbr.rel (0) target = $region25
  $region24: #{basic_block_forward.4} parent=0 // pred_region
    _
  $region25: #{basic_block_forward.4} parent=0 // pred_fallthru
    _

// kernel: basic_block_forward.6
$region0: #{basic_block_forward.6}
  #allocation0 [shape = 'u32[]', space=smem, size = 0x4, offset = 0x4, fixed_abs, tag = 'smem constant byte address 0x4 - core index']
  #allocation1 [shape = 'u32[72,128]{1,0:T(1,128)}', space=vmem, size = 0x9000, scoped, tag = 'internal scratch']
  %s0 = inlined_call_operand.vmem [shape: bf16[1,2,10,10,128], index: 0, kind: input, shape index: {}]
  %s1 = inlined_call_operand.vmem [shape: bf16[9,128,128], index: 1, kind: input, shape index: {}]
  %s2 = inlined_call_operand.vmem [shape: f32[128,128], index: 2, kind: output, shape index: {0}]
  %s3 = inlined_call_operand.vmem [shape: f32[1,2,128], index: 3, kind: output, shape index: {1}]
  %4 = xla_tuple %s2, %s3
  %s5 = sld [smem:[#allocation0]]
  $region26: #{basic_block_forward.6} parent=0
    _
  %s7 = ssub.s32 1, %s5
  %s8 = scalar_select 0, %s7, %s5
  // Predicated region
  $region2: #{basic_block_forward.6} parent=0 // pred_check
    _
  $region3: #{basic_block_forward.6} parent=0 // pred_check_branch
    %10 = sbr.rel (0) target = $region5
  $region4: #{basic_block_forward.6} parent=0 // pred_region
    _
  $region5: #{basic_block_forward.6} parent=0 // pred_fallthru
    _
  // Predicated region
  $region6: #{basic_block_forward.6} parent=0 // pred_check
    _
  $region7: #{basic_block_forward.6} parent=0 // pred_check_branch
    %12 = sbr.rel (0) target = $region9
  $region8: #{basic_block_forward.6} parent=0 // pred_region
    _
  $region9: #{basic_block_forward.6} parent=0 // pred_fallthru
    _
  %v13 = vld [vmem:[%s0] sm:$0xf]
  %v14 = vld [vmem:[%s0 + $0x8] sm:$0xf]
  %v15 = vld [vmem:[%s0 + $0x10] sm:$0xf]
  %v16 = vld [vmem:[%s0 + $0x18] sm:$0xf]
  %v17 = vld [vmem:[%s0 + $0x20] sm:$0xf]
  %v18 = vld [vmem:[%s0 + $0x28] sm:$0xf]
  %v19 = vld [vmem:[%s0 + $0x30] sm:$0xf]
  %v20 = vld [vmem:[%s0 + $0x38] sm:$0xf]
  %v21 = vld [vmem:[%s0 + $0x50] sm:$0xf]
  %v22 = vld [vmem:[%s0 + $0x58] sm:$0xf]
  %v23 = vld [vmem:[%s0 + $0x60] sm:$0xf]
  %v24 = vld [vmem:[%s0 + $0x68] sm:$0xf]
  %v25 = vld [vmem:[%s0 + $0x70] sm:$0xf]
  %v26 = vld [vmem:[%s0 + $0x78] sm:$0xf]
  %v27 = vld [vmem:[%s0 + $0x80] sm:$0xf]
  %v28 = vld [vmem:[%s0 + $0x88] sm:$0xf]
  %v29 = vld [vmem:[%s1] sm:$0xf]
  %v30 = vld [vmem:[%s1 + $0x4] sm:$0xf]
  %v31 = vld [vmem:[%s1 + $0x8] sm:$0xf]
  %v32 = vld [vmem:[%s1 + $0xc] sm:$0xf]
  %v33 = vld [vmem:[%s1 + $0x10] sm:$0xf]
  %v34 = vld [vmem:[%s1 + $0x14] sm:$0xf]
  %v35 = vld [vmem:[%s1 + $0x18] sm:$0xf]
  %v36 = vld [vmem:[%s1 + $0x1c] sm:$0xf]
  %v37 = vld [vmem:[%s1 + $0x20] sm:$0xf]
  %v38 = vld [vmem:[%s1 + $0x24] sm:$0xf]
  %v39 = vld [vmem:[%s1 + $0x28] sm:$0xf]
  %v40 = vld [vmem:[%s1 + $0x2c] sm:$0xf]
  %v41 = vld [vmem:[%s1 + $0x30] sm:$0xf]
  %v42 = vld [vmem:[%s1 + $0x34] sm:$0xf]
  %v43 = vld [vmem:[%s1 + $0x38] sm:$0xf]
  %v44 = vld [vmem:[%s1 + $0x3c] sm:$0xf]
  %v61 = vunpack.c.l.b16 %v13
  %v62 = vunpack.c.l.b16 %v14
  %v63 = vunpack.c.l.b16 %v15
  %v64 = vunpack.c.l.b16 %v16
  %v65 = vunpack.c.l.b16 %v17
  %v66 = vunpack.c.l.b16 %v18
  %v67 = vunpack.c.l.b16 %v19
  %v68 = vunpack.c.l.b16 %v20
  %v69 = vunpack.c.l.b16 %v21
  %v70 = vunpack.c.l.b16 %v22
  %v71 = vunpack.c.l.b16 %v23
  %v72 = vunpack.c.l.b16 %v24
  %v73 = vunpack.c.l.b16 %v25
  %v74 = vunpack.c.l.b16 %v26
  %v75 = vunpack.c.l.b16 %v27
  %v76 = vunpack.c.l.b16 %v28
  %v77 = vpack.c.b16 %v62, %v61
  %v78 = vpack.c.b16 %v64, %v63
  %v79 = vpack.c.b16 %v66, %v65
  %v80 = vpack.c.b16 %v68, %v67
  %v81 = vpack.c.b16 %v70, %v69
  %v82 = vpack.c.b16 %v72, %v71
  %v83 = vpack.c.b16 %v74, %v73
  %v84 = vpack.c.b16 %v76, %v75
  %v109 = vunpack.c.l.b16 %v29
  %v110 = vunpack.c.l.b16 %v30
  %v111 = vunpack.c.l.b16 %v31
  %v112 = vunpack.c.l.b16 %v32
  %v113 = vunpack.c.l.b16 %v33
  %v114 = vunpack.c.l.b16 %v34
  %v115 = vunpack.c.l.b16 %v35
  %v116 = vunpack.c.l.b16 %v36
  %v117 = vunpack.c.l.b16 %v37
  %v118 = vunpack.c.l.b16 %v38
  %v119 = vunpack.c.l.b16 %v39
  %v120 = vunpack.c.l.b16 %v40
  %v121 = vunpack.c.l.b16 %v41
  %v122 = vunpack.c.l.b16 %v42
  %v123 = vunpack.c.l.b16 %v43
  %v124 = vunpack.c.l.b16 %v44
  %v125 = vpack.c.b16 %v110, %v109
  %v126 = vpack.c.b16 %v112, %v111
  %v127 = vpack.c.b16 %v114, %v113
  %v128 = vpack.c.b16 %v116, %v115
  %v129 = vpack.c.b16 %v118, %v117
  %v130 = vpack.c.b16 %v120, %v119
  %v131 = vpack.c.b16 %v122, %v121
  %v132 = vpack.c.b16 %v124, %v123
  %141 = vmatpush.bf16.msra.mxu0 %v132
  %142 = vmatpush.bf16.msra.mxu0 %v131
  %143 = vmatpush.bf16.msra.mxu0 %v130
  %144 = vmatpush.bf16.msra.mxu0 %v129
  %145 = vmatpush.bf16.msra.mxu0 %v128
  %146 = vmatpush.bf16.msra.mxu0 %v127
  %147 = vmatpush.bf16.msra.mxu0 %v126
  %148 = vmatpush.bf16.msra.mxu0 %v125
  %149 = vmatmul.bf16.gmra.mxu0 %v77
  %v150 = vpop.f32.mrf.mxu0
  %v151 = vadd.f32 0.0, %v150
  %v152 = vpop.f32.mrf.mxu0
  %v153 = vadd.f32 0.0, %v152
  %154 = vmatmul.bf16.gmra.mxu0 %v78
  %v155 = vpop.f32.mrf.mxu0
  %v156 = vadd.f32 0.0, %v155
  %v157 = vpop.f32.mrf.mxu0
  %v158 = vadd.f32 0.0, %v157
  %159 = vmatmul.bf16.gmra.mxu0 %v79
  %v160 = vpop.f32.mrf.mxu0
  %v161 = vadd.f32 0.0, %v160
  %v162 = vpop.f32.mrf.mxu0
  %v163 = vadd.f32 0.0, %v162
  %164 = vmatmul.bf16.gmra.mxu0 %v80
  %v165 = vpop.f32.mrf.mxu0
  %v166 = vadd.f32 0.0, %v165
  %v167 = vpop.f32.mrf.mxu0
  %v168 = vadd.f32 0.0, %v167
  %169 = vmatmul.bf16.gmra.mxu0 %v81
  %v170 = vpop.f32.mrf.mxu0
  %v171 = vadd.f32 0.0, %v170
  %v172 = vpop.f32.mrf.mxu0
  %v173 = vadd.f32 0.0, %v172
  %174 = vmatmul.bf16.gmra.mxu0 %v82
  %v175 = vpop.f32.mrf.mxu0
  %v176 = vadd.f32 0.0, %v175
  %v177 = vpop.f32.mrf.mxu0
  %v178 = vadd.f32 0.0, %v177
  %179 = vmatmul.bf16.gmra.mxu0 %v83
  %v180 = vpop.f32.mrf.mxu0
  %v181 = vadd.f32 0.0, %v180
  %v182 = vpop.f32.mrf.mxu0
  %v183 = vadd.f32 0.0, %v182
  %184 = vmatmul.bf16.gmra.mxu0 %v84
  %v185 = vpop.f32.mrf.mxu0
  %v186 = vadd.f32 0.0, %v185
  %v187 = vpop.f32.mrf.mxu0
  %v188 = vadd.f32 0.0, %v187
  %189 = vdwg.mxu0
  %190 = vst [vmem:[%s2] sm:$0xff] %v151
  %191 = vst [vmem:[%s2 + $0x8] sm:$0xff] %v153
  %192 = vst [vmem:[%s2 + $0x10] sm:$0xff] %v156
  %193 = vst [vmem:[%s2 + $0x18] sm:$0xff] %v158
  %194 = vst [vmem:[%s2 + $0x20] sm:$0xff] %v161
  %195 = vst [vmem:[%s2 + $0x28] sm:$0xff] %v163
  %196 = vst [vmem:[%s2 + $0x30] sm:$0xff] %v166
  %197 = vst [vmem:[%s2 + $0x38] sm:$0xff] %v168
  %198 = vst [vmem:[%s2 + $0x40] sm:$0xff] %v171
  %199 = vst [vmem:[%s2 + $0x48] sm:$0xff] %v173
  %200 = vst [vmem:[%s2 + $0x50] sm:$0xff] %v176
  %201 = vst [vmem:[%s2 + $0x58] sm:$0xff] %v178
  %202 = vst [vmem:[%s2 + $0x60] sm:$0xff] %v181
  %203 = vst [vmem:[%s2 + $0x68] sm:$0xff] %v183
  %204 = vst [vmem:[%s2 + $0x70] sm:$0xff] %v186
  %205 = vst [vmem:[%s2 + $0x78] sm:$0xff] %v188
  %v206 = vld [vmem:[%s0] sm:$0xf]
  %v207 = vld [vmem:[%s0 + $0x4] sm:$0x1]
  %v208 = vld [vmem:[%s0 + $0x8] sm:$0xf]
  %v209 = vld [vmem:[%s0 + $0xc] sm:$0x1]
  %v210 = vld [vmem:[%s0 + $0x10] sm:$0xf]
  %v211 = vld [vmem:[%s0 + $0x14] sm:$0x1]
  %v212 = vld [vmem:[%s0 + $0x18] sm:$0xf]
  %v213 = vld [vmem:[%s0 + $0x1c] sm:$0x1]
  %v214 = vld [vmem:[%s0 + $0x20] sm:$0xf]
  %v215 = vld [vmem:[%s0 + $0x24] sm:$0x1]
  %v216 = vld [vmem:[%s0 + $0x28] sm:$0xf]
  %v217 = vld [vmem:[%s0 + $0x2c] sm:$0x1]
  %v218 = vld [vmem:[%s0 + $0x30] sm:$0xf]
  %v219 = vld [vmem:[%s0 + $0x34] sm:$0x1]
  %v220 = vld [vmem:[%s0 + $0x38] sm:$0xf]
  %v221 = vld [vmem:[%s0 + $0x3c] sm:$0x1]
  %v222 = vld [vmem:[%s0 + $0x50] sm:$0xf]
  %v223 = vld [vmem:[%s0 + $0x54] sm:$0x1]
  %v224 = vld [vmem:[%s0 + $0x58] sm:$0xf]
  %v225 = vld [vmem:[%s0 + $0x5c] sm:$0x1]
  %v226 = vld [vmem:[%s0 + $0x60] sm:$0xf]
  %v227 = vld [vmem:[%s0 + $0x64] sm:$0x1]
  %v228 = vld [vmem:[%s0 + $0x68] sm:$0xf]
  %v229 = vld [vmem:[%s0 + $0x6c] sm:$0x1]
  %v230 = vld [vmem:[%s0 + $0x70] sm:$0xf]
  %v231 = vld [vmem:[%s0 + $0x74] sm:$0x1]
  %v232 = vld [vmem:[%s0 + $0x78] sm:$0xf]
  %v233 = vld [vmem:[%s0 + $0x7c] sm:$0x1]
  %v234 = vld [vmem:[%s0 + $0x80] sm:$0xf]
  %v235 = vld [vmem:[%s0 + $0x84] sm:$0x1]
  %v236 = vld [vmem:[%s0 + $0x88] sm:$0xf]
  %v237 = vld [vmem:[%s0 + $0x8c] sm:$0x1]
  %vm238 = vsmask.f32 3328
  %vm239 = vsmask.f32 7440
  %vm240 = vmor %vm238, %vm239
  %v242 = vshrl.u32 %v206, 16
  %v244 = vrot.slane %v242, 4
  %v245 = vshll.u32 %v206, 16
  %v247 = vrot.slane %v245, 5
  %v248 = vor.u32 %v244, %v247
  %v249 = vrot.slane %v248, 4
  %v251 = vshll.u32 %v207, 16
  %v253 = vrot.slane %v251, 5
  %v254 = vsel %vm240, %v249, %v253
  %v256 = vshrl.u32 %v208, 16
  %v258 = vrot.slane %v256, 4
  %v259 = vshll.u32 %v208, 16
  %v261 = vrot.slane %v259, 5
  %v262 = vor.u32 %v258, %v261
  %v263 = vrot.slane %v262, 4
  %v265 = vshll.u32 %v209, 16
  %v267 = vrot.slane %v265, 5
  %v268 = vsel %vm240, %v263, %v267
  %v270 = vshrl.u32 %v210, 16
  %v272 = vrot.slane %v270, 4
  %v273 = vshll.u32 %v210, 16
  %v275 = vrot.slane %v273, 5
  %v276 = vor.u32 %v272, %v275
  %v277 = vrot.slane %v276, 4
  %v279 = vshll.u32 %v211, 16
  %v281 = vrot.slane %v279, 5
  %v282 = vsel %vm240, %v277, %v281
  %v284 = vshrl.u32 %v212, 16
  %v286 = vrot.slane %v284, 4
  %v287 = vshll.u32 %v212, 16
  %v289 = vrot.slane %v287, 5
  %v290 = vor.u32 %v286, %v289
  %v291 = vrot.slane %v290, 4
  %v293 = vshll.u32 %v213, 16
  %v295 = vrot.slane %v293, 5
  %v296 = vsel %vm240, %v291, %v295
  %v298 = vshrl.u32 %v214, 16
  %v300 = vrot.slane %v298, 4
  %v301 = vshll.u32 %v214, 16
  %v303 = vrot.slane %v301, 5
  %v304 = vor.u32 %v300, %v303
  %v305 = vrot.slane %v304, 4
  %v307 = vshll.u32 %v215, 16
  %v309 = vrot.slane %v307, 5
  %v310 = vsel %vm240, %v305, %v309
  %v312 = vshrl.u32 %v216, 16
  %v314 = vrot.slane %v312, 4
  %v315 = vshll.u32 %v216, 16
  %v317 = vrot.slane %v315, 5
  %v318 = vor.u32 %v314, %v317
  %v319 = vrot.slane %v318, 4
  %v321 = vshll.u32 %v217, 16
  %v323 = vrot.slane %v321, 5
  %v324 = vsel %vm240, %v319, %v323
  %v326 = vshrl.u32 %v218, 16
  %v328 = vrot.slane %v326, 4
  %v329 = vshll.u32 %v218, 16
  %v331 = vrot.slane %v329, 5
  %v332 = vor.u32 %v328, %v331
  %v333 = vrot.slane %v332, 4
  %v335 = vshll.u32 %v219, 16
  %v337 = vrot.slane %v335, 5
  %v338 = vsel %vm240, %v333, %v337
  %v340 = vshrl.u32 %v220, 16
  %v342 = vrot.slane %v340, 4
  %v343 = vshll.u32 %v220, 16
  %v345 = vrot.slane %v343, 5
  %v346 = vor.u32 %v342, %v345
  %v347 = vrot.slane %v346, 4
  %v349 = vshll.u32 %v221, 16
  %v351 = vrot.slane %v349, 5
  %v352 = vsel %vm240, %v347, %v351
  %v354 = vshrl.u32 %v222, 16
  %v356 = vrot.slane %v354, 4
  %v357 = vshll.u32 %v222, 16
  %v359 = vrot.slane %v357, 5
  %v360 = vor.u32 %v356, %v359
  %v361 = vrot.slane %v360, 4
  %v363 = vshll.u32 %v223, 16
  %v365 = vrot.slane %v363, 5
  %v366 = vsel %vm240, %v361, %v365
  %v368 = vshrl.u32 %v224, 16
  %v370 = vrot.slane %v368, 4
  %v371 = vshll.u32 %v224, 16
  %v373 = vrot.slane %v371, 5
  %v374 = vor.u32 %v370, %v373
  %v375 = vrot.slane %v374, 4
  %v377 = vshll.u32 %v225, 16
  %v379 = vrot.slane %v377, 5
  %v380 = vsel %vm240, %v375, %v379
  %v382 = vshrl.u32 %v226, 16
  %v384 = vrot.slane %v382, 4
  %v385 = vshll.u32 %v226, 16
  %v387 = vrot.slane %v385, 5
  %v388 = vor.u32 %v384, %v387
  %v389 = vrot.slane %v388, 4
  %v391 = vshll.u32 %v227, 16
  %v393 = vrot.slane %v391, 5
  %v394 = vsel %vm240, %v389, %v393
  %v396 = vshrl.u32 %v228, 16
  %v398 = vrot.slane %v396, 4
  %v399 = vshll.u32 %v228, 16
  %v401 = vrot.slane %v399, 5
  %v402 = vor.u32 %v398, %v401
  %v403 = vrot.slane %v402, 4
  %v405 = vshll.u32 %v229, 16
  %v407 = vrot.slane %v405, 5
  %v408 = vsel %vm240, %v403, %v407
  %v410 = vshrl.u32 %v230, 16
  %v412 = vrot.slane %v410, 4
  %v413 = vshll.u32 %v230, 16
  %v415 = vrot.slane %v413, 5
  %v416 = vor.u32 %v412, %v415
  %v417 = vrot.slane %v416, 4
  %v419 = vshll.u32 %v231, 16
  %v421 = vrot.slane %v419, 5
  %v422 = vsel %vm240, %v417, %v421
  %v424 = vshrl.u32 %v232, 16
  %v426 = vrot.slane %v424, 4
  %v427 = vshll.u32 %v232, 16
  %v429 = vrot.slane %v427, 5
  %v430 = vor.u32 %v426, %v429
  %v431 = vrot.slane %v430, 4
  %v433 = vshll.u32 %v233, 16
  %v435 = vrot.slane %v433, 5
  %v436 = vsel %vm240, %v431, %v435
  %v438 = vshrl.u32 %v234, 16
  %v440 = vrot.slane %v438, 4
  %v441 = vshll.u32 %v234, 16
  %v443 = vrot.slane %v441, 5
  %v444 = vor.u32 %v440, %v443
  %v445 = vrot.slane %v444, 4
  %v447 = vshll.u32 %v235, 16
  %v449 = vrot.slane %v447, 5
  %v450 = vsel %vm240, %v445, %v449
  %v452 = vshrl.u32 %v236, 16
  %v454 = vrot.slane %v452, 4
  %v455 = vshll.u32 %v236, 16
  %v457 = vrot.slane %v455, 5
  %v458 = vor.u32 %v454, %v457
  %v459 = vrot.slane %v458, 4
  %v461 = vshll.u32 %v237, 16
  %v463 = vrot.slane %v461, 5
  %v464 = vsel %vm240, %v459, %v463
  %s465 = scalar_lea.vmem %s1, 64
  %v466 = vld [vmem:[%s465] sm:$0xf]
  %v467 = vld [vmem:[%s465 + $0x4] sm:$0xf]
  %v468 = vld [vmem:[%s465 + $0x8] sm:$0xf]
  %v469 = vld [vmem:[%s465 + $0xc] sm:$0xf]
  %v470 = vld [vmem:[%s465 + $0x10] sm:$0xf]
  %v471 = vld [vmem:[%s465 + $0x14] sm:$0xf]
  %v472 = vld [vmem:[%s465 + $0x18] sm:$0xf]
  %v473 = vld [vmem:[%s465 + $0x1c] sm:$0xf]
  %v474 = vld [vmem:[%s465 + $0x20] sm:$0xf]
  %v475 = vld [vmem:[%s465 + $0x24] sm:$0xf]
  %v476 = vld [vmem:[%s465 + $0x28] sm:$0xf]
  %v477 = vld [vmem:[%s465 + $0x2c] sm:$0xf]
  %v478 = vld [vmem:[%s465 + $0x30] sm:$0xf]
  %v479 = vld [vmem:[%s465 + $0x34] sm:$0xf]
  %v480 = vld [vmem:[%s465 + $0x38] sm:$0xf]
  %v481 = vld [vmem:[%s465 + $0x3c] sm:$0xf]
  %v482 = vunpack.c.l.b16 %v254
  %v483 = vunpack.c.l.b16 %v268
  %v484 = vunpack.c.l.b16 %v282
  %v485 = vunpack.c.l.b16 %v296
  %v486 = vunpack.c.l.b16 %v310
  %v487 = vunpack.c.l.b16 %v324
  %v488 = vunpack.c.l.b16 %v338
  %v489 = vunpack.c.l.b16 %v352
  %v490 = vunpack.c.l.b16 %v366
  %v491 = vunpack.c.l.b16 %v380
  %v492 = vunpack.c.l.b16 %v394
  %v493 = vunpack.c.l.b16 %v408
  %v494 = vunpack.c.l.b16 %v422
  %v495 = vunpack.c.l.b16 %v436
  %v496 = vunpack.c.l.b16 %v450
  %v497 = vunpack.c.l.b16 %v464
  %v498 = vpack.c.b16 %v483, %v482
  %v499 = vpack.c.b16 %v485, %v484
  %v500 = vpack.c.b16 %v487, %v486
  %v501 = vpack.c.b16 %v489, %v488
  %v502 = vpack.c.b16 %v491, %v490
  %v503 = vpack.c.b16 %v493, %v492
  %v504 = vpack.c.b16 %v495, %v494
  %v505 = vpack.c.b16 %v497, %v496
  %v530 = vunpack.c.l.b16 %v466
  %v531 = vunpack.c.l.b16 %v467
  %v532 = vunpack.c.l.b16 %v468
  %v533 = vunpack.c.l.b16 %v469
  %v534 = vunpack.c.l.b16 %v470
  %v535 = vunpack.c.l.b16 %v471
  %v536 = vunpack.c.l.b16 %v472
  %v537 = vunpack.c.l.b16 %v473
  %v538 = vunpack.c.l.b16 %v474
  %v539 = vunpack.c.l.b16 %v475
  %v540 = vunpack.c.l.b16 %v476
  %v541 = vunpack.c.l.b16 %v477
  %v542 = vunpack.c.l.b16 %v478
  %v543 = vunpack.c.l.b16 %v479
  %v544 = vunpack.c.l.b16 %v480
  %v545 = vunpack.c.l.b16 %v481
  %v546 = vpack.c.b16 %v531, %v530
  %v547 = vpack.c.b16 %v533, %v532
  %v548 = vpack.c.b16 %v535, %v534
  %v549 = vpack.c.b16 %v537, %v536
  %v550 = vpack.c.b16 %v539, %v538
  %v551 = vpack.c.b16 %v541, %v540
  %v552 = vpack.c.b16 %v543, %v542
  %v553 = vpack.c.b16 %v545, %v544
  %562 = vmatpush.bf16.msra.mxu0 %v553
  %563 = vmatpush.bf16.msra.mxu0 %v552
  %564 = vmatpush.bf16.msra.mxu0 %v551
  %565 = vmatpush.bf16.msra.mxu0 %v550
  %566 = vmatpush.bf16.msra.mxu0 %v549
  %567 = vmatpush.bf16.msra.mxu0 %v548
  %568 = vmatpush.bf16.msra.mxu0 %v547
  %569 = vmatpush.bf16.msra.mxu0 %v546
  %570 = vmatmul.bf16.gmra.mxu0 %v498
  %v571 = vpop.f32.mrf.mxu0
  %v572 = vadd.f32 0.0, %v571
  %v573 = vpop.f32.mrf.mxu0
  %v574 = vadd.f32 0.0, %v573
  %575 = vmatmul.bf16.gmra.mxu0 %v499
  %v576 = vpop.f32.mrf.mxu0
  %v577 = vadd.f32 0.0, %v576
  %v578 = vpop.f32.mrf.mxu0
  %v579 = vadd.f32 0.0, %v578
  %580 = vmatmul.bf16.gmra.mxu0 %v500
  %v581 = vpop.f32.mrf.mxu0
  %v582 = vadd.f32 0.0, %v581
  %v583 = vpop.f32.mrf.mxu0
  %v584 = vadd.f32 0.0, %v583
  %585 = vmatmul.bf16.gmra.mxu0 %v501
  %v586 = vpop.f32.mrf.mxu0
  %v587 = vadd.f32 0.0, %v586
  %v588 = vpop.f32.mrf.mxu0
  %v589 = vadd.f32 0.0, %v588
  %590 = vmatmul.bf16.gmra.mxu0 %v502
  %v591 = vpop.f32.mrf.mxu0
  %v592 = vadd.f32 0.0, %v591
  %v593 = vpop.f32.mrf.mxu0
  %v594 = vadd.f32 0.0, %v593
  %595 = vmatmul.bf16.gmra.mxu0 %v503
  %v596 = vpop.f32.mrf.mxu0
  %v597 = vadd.f32 0.0, %v596
  %v598 = vpop.f32.mrf.mxu0
  %v599 = vadd.f32 0.0, %v598
  %600 = vmatmul.bf16.gmra.mxu0 %v504
  %v601 = vpop.f32.mrf.mxu0
  %v602 = vadd.f32 0.0, %v601
  %v603 = vpop.f32.mrf.mxu0
  %v604 = vadd.f32 0.0, %v603
  %605 = vmatmul.bf16.gmra.mxu0 %v505
  %v606 = vpop.f32.mrf.mxu0
  %v607 = vadd.f32 0.0, %v606
  %v608 = vpop.f32.mrf.mxu0
  %v609 = vadd.f32 0.0, %v608
  %610 = vdwg.mxu0
  %v611 = vld [vmem:[%s2] sm:$0xff]
  %v612 = vld [vmem:[%s2 + $0x8] sm:$0xff]
  %v613 = vld [vmem:[%s2 + $0x10] sm:$0xff]
  %v614 = vld [vmem:[%s2 + $0x18] sm:$0xff]
  %v615 = vld [vmem:[%s2 + $0x20] sm:$0xff]
  %v616 = vld [vmem:[%s2 + $0x28] sm:$0xff]
  %v617 = vld [vmem:[%s2 + $0x30] sm:$0xff]
  %v618 = vld [vmem:[%s2 + $0x38] sm:$0xff]
  %v619 = vld [vmem:[%s2 + $0x40] sm:$0xff]
  %v620 = vld [vmem:[%s2 + $0x48] sm:$0xff]
  %v621 = vld [vmem:[%s2 + $0x50] sm:$0xff]
  %v622 = vld [vmem:[%s2 + $0x58] sm:$0xff]
  %v623 = vld [vmem:[%s2 + $0x60] sm:$0xff]
  %v624 = vld [vmem:[%s2 + $0x68] sm:$0xff]
  %v625 = vld [vmem:[%s2 + $0x70] sm:$0xff]
  %v626 = vld [vmem:[%s2 + $0x78] sm:$0xff]
  %v627 = vadd.f32 %v611, %v572
  %v628 = vadd.f32 %v612, %v574
  %v629 = vadd.f32 %v613, %v577
  %v630 = vadd.f32 %v614, %v579
  %v631 = vadd.f32 %v615, %v582
  %v632 = vadd.f32 %v616, %v584
  %v633 = vadd.f32 %v617, %v587
  %v634 = vadd.f32 %v618, %v589
  %v635 = vadd.f32 %v619, %v592
  %v636 = vadd.f32 %v620, %v594
  %v637 = vadd.f32 %v621, %v597
  %v638 = vadd.f32 %v622, %v599
  %v639 = vadd.f32 %v623, %v602
  %v640 = vadd.f32 %v624, %v604
  %v641 = vadd.f32 %v625, %v607
  %v642 = vadd.f32 %v626, %v609
  %643 = vst [vmem:[%s2] sm:$0xff] %v627
  %644 = vst [vmem:[%s2 + $0x8] sm:$0xff] %v628
  %645 = vst [vmem:[%s2 + $0x10] sm:$0xff] %v629
  %646 = vst [vmem:[%s2 + $0x18] sm:$0xff] %v630
  %647 = vst [vmem:[%s2 + $0x20] sm:$0xff] %v631
  %648 = vst [vmem:[%s2 + $0x28] sm:$0xff] %v632
  %649 = vst [vmem:[%s2 + $0x30] sm:$0xff] %v633
  %650 = vst [vmem:[%s2 + $0x38] sm:$0xff] %v634
  %651 = vst [vmem:[%s2 + $0x40] sm:$0xff] %v635
  %652 = vst [vmem:[%s2 + $0x48] sm:$0xff] %v636
  %653 = vst [vmem:[%s2 + $0x50] sm:$0xff] %v637
  %654 = vst [vmem:[%s2 + $0x58] sm:$0xff] %v638
  %655 = vst [vmem:[%s2 + $0x60] sm:$0xff] %v639
  %656 = vst [vmem:[%s2 + $0x68] sm:$0xff] %v640
  %657 = vst [vmem:[%s2 + $0x70] sm:$0xff] %v641
  %658 = vst [vmem:[%s2 + $0x78] sm:$0xff] %v642
  %v659 = vld [vmem:[%s0] sm:$0xe]
  %v660 = vld [vmem:[%s0 + $0x4] sm:$0x1]
  %v661 = vld [vmem:[%s0 + $0x8] sm:$0xe]
  %v662 = vld [vmem:[%s0 + $0xc] sm:$0x1]
  %v663 = vld [vmem:[%s0 + $0x10] sm:$0xe]
  %v664 = vld [vmem:[%s0 + $0x14] sm:$0x1]
  %v665 = vld [vmem:[%s0 + $0x18] sm:$0xe]
  %v666 = vld [vmem:[%s0 + $0x1c] sm:$0x1]
  %v667 = vld [vmem:[%s0 + $0x20] sm:$0xe]
  %v668 = vld [vmem:[%s0 + $0x24] sm:$0x1]
  %v669 = vld [vmem:[%s0 + $0x28] sm:$0xe]
  %v670 = vld [vmem:[%s0 + $0x2c] sm:$0x1]
  %v671 = vld [vmem:[%s0 + $0x30] sm:$0xe]
  %v672 = vld [vmem:[%s0 + $0x34] sm:$0x1]
  %v673 = vld [vmem:[%s0 + $0x38] sm:$0xe]
  %v674 = vld [vmem:[%s0 + $0x3c] sm:$0x1]
  %v675 = vld [vmem:[%s0 + $0x50] sm:$0xe]
  %v676 = vld [vmem:[%s0 + $0x54] sm:$0x1]
  %v677 = vld [vmem:[%s0 + $0x58] sm:$0xe]
  %v678 = vld [vmem:[%s0 + $0x5c] sm:$0x1]
  %v679 = vld [vmem:[%s0 + $0x60] sm:$0xe]
  %v680 = vld [vmem:[%s0 + $0x64] sm:$0x1]
  %v681 = vld [vmem:[%s0 + $0x68] sm:$0xe]
  %v682 = vld [vmem:[%s0 + $0x6c] sm:$0x1]
  %v683 = vld [vmem:[%s0 + $0x70] sm:$0xe]
  %v684 = vld [vmem:[%s0 + $0x74] sm:$0x1]
  %v685 = vld [vmem:[%s0 + $0x78] sm:$0xe]
  %v686 = vld [vmem:[%s0 + $0x7c] sm:$0x1]
  %v687 = vld [vmem:[%s0 + $0x80] sm:$0xe]
  %v688 = vld [vmem:[%s0 + $0x84] sm:$0x1]
  %v689 = vld [vmem:[%s0 + $0x88] sm:$0xe]
  %v690 = vld [vmem:[%s0 + $0x8c] sm:$0x1]
  %vm723 = vcmask 1042432
  %vm724 = vcmask 1046532
  %vm725 = vmor %vm723, %vm724
  %v726 = vrot.slane %v659, 5
  %v727 = vrot.slane %v726, 4
  %v728 = vrot.slane %v660, 5
  %v729 = vsel %vm725, %v727, %v728
  %v730 = vrot.slane %v661, 5
  %v731 = vrot.slane %v730, 4
  %v732 = vrot.slane %v662, 5
  %v733 = vsel %vm725, %v731, %v732
  %v734 = vrot.slane %v663, 5
  %v735 = vrot.slane %v734, 4
  %v736 = vrot.slane %v664, 5
  %v737 = vsel %vm725, %v735, %v736
  %v738 = vrot.slane %v665, 5
  %v739 = vrot.slane %v738, 4
  %v740 = vrot.slane %v666, 5
  %v741 = vsel %vm725, %v739, %v740
  %v742 = vrot.slane %v667, 5
  %v743 = vrot.slane %v742, 4
  %v744 = vrot.slane %v668, 5
  %v745 = vsel %vm725, %v743, %v744
  %v746 = vrot.slane %v669, 5
  %v747 = vrot.slane %v746, 4
  %v748 = vrot.slane %v670, 5
  %v749 = vsel %vm725, %v747, %v748
  %v750 = vrot.slane %v671, 5
  %v751 = vrot.slane %v750, 4
  %v752 = vrot.slane %v672, 5
  %v753 = vsel %vm725, %v751, %v752
  %v754 = vrot.slane %v673, 5
  %v755 = vrot.slane %v754, 4
  %v756 = vrot.slane %v674, 5
  %v757 = vsel %vm725, %v755, %v756
  %v758 = vrot.slane %v675, 5
  %v759 = vrot.slane %v758, 4
  %v760 = vrot.slane %v676, 5
  %v761 = vsel %vm725, %v759, %v760
  %v762 = vrot.slane %v677, 5
  %v763 = vrot.slane %v762, 4
  %v764 = vrot.slane %v678, 5
  %v765 = vsel %vm725, %v763, %v764
  %v766 = vrot.slane %v679, 5
  %v767 = vrot.slane %v766, 4
  %v768 = vrot.slane %v680, 5
  %v769 = vsel %vm725, %v767, %v768
  %v770 = vrot.slane %v681, 5
  %v771 = vrot.slane %v770, 4
  %v772 = vrot.slane %v682, 5
  %v773 = vsel %vm725, %v771, %v772
  %v774 = vrot.slane %v683, 5
  %v775 = vrot.slane %v774, 4
  %v776 = vrot.slane %v684, 5
  %v777 = vsel %vm725, %v775, %v776
  %v778 = vrot.slane %v685, 5
  %v779 = vrot.slane %v778, 4
  %v780 = vrot.slane %v686, 5
  %v781 = vsel %vm725, %v779, %v780
  %v782 = vrot.slane %v687, 5
  %v783 = vrot.slane %v782, 4
  %v784 = vrot.slane %v688, 5
  %v785 = vsel %vm725, %v783, %v784
  %v786 = vrot.slane %v689, 5
  %v787 = vrot.slane %v786, 4
  %v788 = vrot.slane %v690, 5
  %v789 = vsel %vm725, %v787, %v788
  %s790 = scalar_lea.vmem %s1, 128
  %v791 = vld [vmem:[%s790] sm:$0xf]
  %v792 = vld [vmem:[%s790 + $0x4] sm:$0xf]
  %v793 = vld [vmem:[%s790 + $0x8] sm:$0xf]
  %v794 = vld [vmem:[%s790 + $0xc] sm:$0xf]
  %v795 = vld [vmem:[%s790 + $0x10] sm:$0xf]
  %v796 = vld [vmem:[%s790 + $0x14] sm:$0xf]
  %v797 = vld [vmem:[%s790 + $0x18] sm:$0xf]
  %v798 = vld [vmem:[%s790 + $0x1c] sm:$0xf]
  %v799 = vld [vmem:[%s790 + $0x20] sm:$0xf]
  %v800 = vld [vmem:[%s790 + $0x24] sm:$0xf]
  %v801 = vld [vmem:[%s790 + $0x28] sm:$0xf]
  %v802 = vld [vmem:[%s790 + $0x2c] sm:$0xf]
  %v803 = vld [vmem:[%s790 + $0x30] sm:$0xf]
  %v804 = vld [vmem:[%s790 + $0x34] sm:$0xf]
  %v805 = vld [vmem:[%s790 + $0x38] sm:$0xf]
  %v806 = vld [vmem:[%s790 + $0x3c] sm:$0xf]
  %v807 = vunpack.c.l.b16 %v729
  %v808 = vunpack.c.l.b16 %v733
  %v809 = vunpack.c.l.b16 %v737
  %v810 = vunpack.c.l.b16 %v741
  %v811 = vunpack.c.l.b16 %v745
  %v812 = vunpack.c.l.b16 %v749
  %v813 = vunpack.c.l.b16 %v753
  %v814 = vunpack.c.l.b16 %v757
  %v815 = vunpack.c.l.b16 %v761
  %v816 = vunpack.c.l.b16 %v765
  %v817 = vunpack.c.l.b16 %v769
  %v818 = vunpack.c.l.b16 %v773
  %v819 = vunpack.c.l.b16 %v777
  %v820 = vunpack.c.l.b16 %v781
  %v821 = vunpack.c.l.b16 %v785
  %v822 = vunpack.c.l.b16 %v789
  %v823 = vpack.c.b16 %v808, %v807
  %v824 = vpack.c.b16 %v810, %v809
  %v825 = vpack.c.b16 %v812, %v811
  %v826 = vpack.c.b16 %v814, %v813
  %v827 = vpack.c.b16 %v816, %v815
  %v828 = vpack.c.b16 %v818, %v817
  %v829 = vpack.c.b16 %v820, %v819
  %v830 = vpack.c.b16 %v822, %v821
  %v855 = vunpack.c.l.b16 %v791
  %v856 = vunpack.c.l.b16 %v792
  %v857 = vunpack.c.l.b16 %v793
  %v858 = vunpack.c.l.b16 %v794
  %v859 = vunpack.c.l.b16 %v795
  %v860 = vunpack.c.l.b16 %v796
  %v861 = vunpack.c.l.b16 %v797
  %v862 = vunpack.c.l.b16 %v798
  %v863 = vunpack.c.l.b16 %v799
  %v864 = vunpack.c.l.b16 %v800
  %v865 = vunpack.c.l.b16 %v801
  %v866 = vunpack.c.l.b16 %v802
  %v867 = vunpack.c.l.b16 %v803
  %v868 = vunpack.c.l.b16 %v804
  %v869 = vunpack.c.l.b16 %v805
  %v870 = vunpack.c.l.b16 %v806
  %v871 = vpack.c.b16 %v856, %v855
  %v872 = vpack.c.b16 %v858, %v857
  %v873 = vpack.c.b16 %v860, %v859
  %v874 = vpack.c.b16 %v862, %v861
  %v875 = vpack.c.b16 %v864, %v863
  %v876 = vpack.c.b16 %v866, %v865
  %v877 = vpack.c.b16 %v868, %v867
  %v878 = vpack.c.b16 %v870, %v869
  %887 = vmatpush.bf16.msra.mxu0 %v878
  %888 = vmatpush.bf16.msra.mxu0 %v877
  %889 = vmatpush.bf16.msra.mxu0 %v876
  %890 = vmatpush.bf16.msra.mxu0 %v875
  %891 = vmatpush.bf16.msra.mxu0 %v874
  %892 = vmatpush.bf16.msra.mxu0 %v873
  %893 = vmatpush.bf16.msra.mxu0 %v872
  %894 = vmatpush.bf16.msra.mxu0 %v871
  %895 = vmatmul.bf16.gmra.mxu0 %v823
  %v896 = vpop.f32.mrf.mxu0
  %v897 = vadd.f32 0.0, %v896
  %v898 = vpop.f32.mrf.mxu0
  %v899 = vadd.f32 0.0, %v898
  %900 = vmatmul.bf16.gmra.mxu0 %v824
  %v901 = vpop.f32.mrf.mxu0
  %v902 = vadd.f32 0.0, %v901
  %v903 = vpop.f32.mrf.mxu0
  %v904 = vadd.f32 0.0, %v903
  %905 = vmatmul.bf16.gmra.mxu0 %v825
  %v906 = vpop.f32.mrf.mxu0
  %v907 = vadd.f32 0.0, %v906
  %v908 = vpop.f32.mrf.mxu0
  %v909 = vadd.f32 0.0, %v908
  %910 = vmatmul.bf16.gmra.mxu0 %v826
  %v911 = vpop.f32.mrf.mxu0
  %v912 = vadd.f32 0.0, %v911
  %v913 = vpop.f32.mrf.mxu0
  %v914 = vadd.f32 0.0, %v913
  %915 = vmatmul.bf16.gmra.mxu0 %v827
  %v916 = vpop.f32.mrf.mxu0
  %v917 = vadd.f32 0.0, %v916
  %v918 = vpop.f32.mrf.mxu0
  %v919 = vadd.f32 0.0, %v918
  %920 = vmatmul.bf16.gmra.mxu0 %v828
  %v921 = vpop.f32.mrf.mxu0
  %v922 = vadd.f32 0.0, %v921
  %v923 = vpop.f32.mrf.mxu0
  %v924 = vadd.f32 0.0, %v923
  %925 = vmatmul.bf16.gmra.mxu0 %v829
  %v926 = vpop.f32.mrf.mxu0
  %v927 = vadd.f32 0.0, %v926
  %v928 = vpop.f32.mrf.mxu0
  %v929 = vadd.f32 0.0, %v928
  %930 = vmatmul.bf16.gmra.mxu0 %v830
  %v931 = vpop.f32.mrf.mxu0
  %v932 = vadd.f32 0.0, %v931
  %v933 = vpop.f32.mrf.mxu0
  %v934 = vadd.f32 0.0, %v933
  %935 = vdwg.mxu0
  %v936 = vld [vmem:[%s2] sm:$0xff]
  %v937 = vld [vmem:[%s2 + $0x8] sm:$0xff]
  %v938 = vld [vmem:[%s2 + $0x10] sm:$0xff]
  %v939 = vld [vmem:[%s2 + $0x18] sm:$0xff]
  %v940 = vld [vmem:[%s2 + $0x20] sm:$0xff]
  %v941 = vld [vmem:[%s2 + $0x28] sm:$0xff]
  %v942 = vld [vmem:[%s2 + $0x30] sm:$0xff]
  %v943 = vld [vmem:[%s2 + $0x38] sm:$0xff]
  %v944 = vld [vmem:[%s2 + $0x40] sm:$0xff]
  %v945 = vld [vmem:[%s2 + $0x48] sm:$0xff]
  %v946 = vld [vmem:[%s2 + $0x50] sm:$0xff]
  %v947 = vld [vmem:[%s2 + $0x58] sm:$0xff]
  %v948 = vld [vmem:[%s2 + $0x60] sm:$0xff]
  %v949 = vld [vmem:[%s2 + $0x68] sm:$0xff]
  %v950 = vld [vmem:[%s2 + $0x70] sm:$0xff]
  %v951 = vld [vmem:[%s2 + $0x78] sm:$0xff]
  %v952 = vadd.f32 %v936, %v897
  %v953 = vadd.f32 %v937, %v899
  %v954 = vadd.f32 %v938, %v902
  %v955 = vadd.f32 %v939, %v904
  %v956 = vadd.f32 %v940, %v907
  %v957 = vadd.f32 %v941, %v909
  %v958 = vadd.f32 %v942, %v912
  %v959 = vadd.f32 %v943, %v914
  %v960 = vadd.f32 %v944, %v917
  %v961 = vadd.f32 %v945, %v919
  %v962 = vadd.f32 %v946, %v922
  %v963 = vadd.f32 %v947, %v924
  %v964 = vadd.f32 %v948, %v927
  %v965 = vadd.f32 %v949, %v929
  %v966 = vadd.f32 %v950, %v932
  %v967 = vadd.f32 %v951, %v934
  %968 = vst [vmem:[%s2] sm:$0xff] %v952
  %969 = vst [vmem:[%s2 + $0x8] sm:$0xff] %v953
  %970 = vst [vmem:[%s2 + $0x10] sm:$0xff] %v954
  %971 = vst [vmem:[%s2 + $0x18] sm:$0xff] %v955
  %972 = vst [vmem:[%s2 + $0x20] sm:$0xff] %v956
  %973 = vst [vmem:[%s2 + $0x28] sm:$0xff] %v957
  %974 = vst [vmem:[%s2 + $0x30] sm:$0xff] %v958
  %975 = vst [vmem:[%s2 + $0x38] sm:$0xff] %v959
  %976 = vst [vmem:[%s2 + $0x40] sm:$0xff] %v960
  %977 = vst [vmem:[%s2 + $0x48] sm:$0xff] %v961
  %978 = vst [vmem:[%s2 + $0x50] sm:$0xff] %v962
  %979 = vst [vmem:[%s2 + $0x58] sm:$0xff] %v963
  %980 = vst [vmem:[%s2 + $0x60] sm:$0xff] %v964
  %981 = vst [vmem:[%s2 + $0x68] sm:$0xff] %v965
  %982 = vst [vmem:[%s2 + $0x70] sm:$0xff] %v966
  %983 = vst [vmem:[%s2 + $0x78] sm:$0xff] %v967
  %s984 = scalar_lea.vmem %s0, 8
  %v985 = vld [vmem:[%s984] sm:$0xf]
  %v986 = vld [vmem:[%s984 + $0x8] sm:$0xf]
  %v987 = vld [vmem:[%s984 + $0x10] sm:$0xf]
  %v988 = vld [vmem:[%s984 + $0x18] sm:$0xf]
  %v989 = vld [vmem:[%s984 + $0x20] sm:$0xf]
  %v990 = vld [vmem:[%s984 + $0x28] sm:$0xf]
  %v991 = vld [vmem:[%s984 + $0x30] sm:$0xf]
  %v992 = vld [vmem:[%s984 + $0x38] sm:$0xf]
  %v993 = vld [vmem:[%s984 + $0x50] sm:$0xf]
  %v994 = vld [vmem:[%s984 + $0x58] sm:$0xf]
  %v995 = vld [vmem:[%s984 + $0x60] sm:$0xf]
  %v996 = vld [vmem:[%s984 + $0x68] sm:$0xf]
  %v997 = vld [vmem:[%s984 + $0x70] sm:$0xf]
  %v998 = vld [vmem:[%s984 + $0x78] sm:$0xf]
  %v999 = vld [vmem:[%s984 + $0x80] sm:$0xf]
  %v1000 = vld [vmem:[%s984 + $0x88] sm:$0xf]
  %s1001 = scalar_lea.vmem %s1, 192
  %v1002 = vld [vmem:[%s1001] sm:$0xf]
  %v1003 = vld [vmem:[%s1001 + $0x4] sm:$0xf]
  %v1004 = vld [vmem:[%s1001 + $0x8] sm:$0xf]
  %v1005 = vld [vmem:[%s1001 + $0xc] sm:$0xf]
  %v1006 = vld [vmem:[%s1001 + $0x10] sm:$0xf]
  %v1007 = vld [vmem:[%s1001 + $0x14] sm:$0xf]
  %v1008 = vld [vmem:[%s1001 + $0x18] sm:$0xf]
  %v1009 = vld [vmem:[%s1001 + $0x1c] sm:$0xf]
  %v1010 = vld [vmem:[%s1001 + $0x20] sm:$0xf]
  %v1011 = vld [vmem:[%s1001 + $0x24] sm:$0xf]
  %v1012 = vld [vmem:[%s1001 + $0x28] sm:$0xf]
  %v1013 = vld [vmem:[%s1001 + $0x2c] sm:$0xf]
  %v1014 = vld [vmem:[%s1001 + $0x30] sm:$0xf]
  %v1015 = vld [vmem:[%s1001 + $0x34] sm:$0xf]
  %v1016 = vld [vmem:[%s1001 + $0x38] sm:$0xf]
  %v1017 = vld [vmem:[%s1001 + $0x3c] sm:$0xf]
  %v1034 = vunpack.c.l.b16 %v985
  %v1035 = vunpack.c.l.b16 %v986
  %v1036 = vunpack.c.l.b16 %v987
  %v1037 = vunpack.c.l.b16 %v988
  %v1038 = vunpack.c.l.b16 %v989
  %v1039 = vunpack.c.l.b16 %v990
  %v1040 = vunpack.c.l.b16 %v991
  %v1041 = vunpack.c.l.b16 %v992
  %v1042 = vunpack.c.l.b16 %v993
  %v1043 = vunpack.c.l.b16 %v994
  %v1044 = vunpack.c.l.b16 %v995
  %v1045 = vunpack.c.l.b16 %v996
  %v1046 = vunpack.c.l.b16 %v997
  %v1047 = vunpack.c.l.b16 %v998
  %v1048 = vunpack.c.l.b16 %v999
  %v1049 = vunpack.c.l.b16 %v1000
  %v1050 = vpack.c.b16 %v1035, %v1034
  %v1051 = vpack.c.b16 %v1037, %v1036
  %v1052 = vpack.c.b16 %v1039, %v1038
  %v1053 = vpack.c.b16 %v1041, %v1040
  %v1054 = vpack.c.b16 %v1043, %v1042
  %v1055 = vpack.c.b16 %v1045, %v1044
  %v1056 = vpack.c.b16 %v1047, %v1046
  %v1057 = vpack.c.b16 %v1049, %v1048
  %v1082 = vunpack.c.l.b16 %v1002
  %v1083 = vunpack.c.l.b16 %v1003
  %v1084 = vunpack.c.l.b16 %v1004
  %v1085 = vunpack.c.l.b16 %v1005
  %v1086 = vunpack.c.l.b16 %v1006
  %v1087 = vunpack.c.l.b16 %v1007
  %v1088 = vunpack.c.l.b16 %v1008
  %v1089 = vunpack.c.l.b16 %v1009
  %v1090 = vunpack.c.l.b16 %v1010
  %v1091 = vunpack.c.l.b16 %v1011
  %v1092 = vunpack.c.l.b16 %v1012
  %v1093 = vunpack.c.l.b16 %v1013
  %v1094 = vunpack.c.l.b16 %v1014
  %v1095 = vunpack.c.l.b16 %v1015
  %v1096 = vunpack.c.l.b16 %v1016
  %v1097 = vunpack.c.l.b16 %v1017
  %v1098 = vpack.c.b16 %v1083, %v1082
  %v1099 = vpack.c.b16 %v1085, %v1084
  %v1100 = vpack.c.b16 %v1087, %v1086
  %v1101 = vpack.c.b16 %v1089, %v1088
  %v1102 = vpack.c.b16 %v1091, %v1090
  %v1103 = vpack.c.b16 %v1093, %v1092
  %v1104 = vpack.c.b16 %v1095, %v1094
  %v1105 = vpack.c.b16 %v1097, %v1096
  %1114 = vmatpush.bf16.msra.mxu0 %v1105
  %1115 = vmatpush.bf16.msra.mxu0 %v1104
  %1116 = vmatpush.bf16.msra.mxu0 %v1103
  %1117 = vmatpush.bf16.msra.mxu0 %v1102
  %1118 = vmatpush.bf16.msra.mxu0 %v1101
  %1119 = vmatpush.bf16.msra.mxu0 %v1100
  %1120 = vmatpush.bf16.msra.mxu0 %v1099
  %1121 = vmatpush.bf16.msra.mxu0 %v1098
  %1122 = vmatmul.bf16.gmra.mxu0 %v1050
  %v1123 = vpop.f32.mrf.mxu0
  %v1124 = vadd.f32 0.0, %v1123
  %v1125 = vpop.f32.mrf.mxu0
  %v1126 = vadd.f32 0.0, %v1125
  %1127 = vmatmul.bf16.gmra.mxu0 %v1051
  %v1128 = vpop.f32.mrf.mxu0
  %v1129 = vadd.f32 0.0, %v1128
  %v1130 = vpop.f32.mrf.mxu0
  %v1131 = vadd.f32 0.0, %v1130
  %1132 = vmatmul.bf16.gmra.mxu0 %v1052
  %v1133 = vpop.f32.mrf.mxu0
  %v1134 = vadd.f32 0.0, %v1133
  %v1135 = vpop.f32.mrf.mxu0
  %v1136 = vadd.f32 0.0, %v1135
  %1137 = vmatmul.bf16.gmra.mxu0 %v1053
  %v1138 = vpop.f32.mrf.mxu0
  %v1139 = vadd.f32 0.0, %v1138
  %v1140 = vpop.f32.mrf.mxu0
  %v1141 = vadd.f32 0.0, %v1140
  %1142 = vmatmul.bf16.gmra.mxu0 %v1054
  %v1143 = vpop.f32.mrf.mxu0
  %v1144 = vadd.f32 0.0, %v1143
  %v1145 = vpop.f32.mrf.mxu0
  %v1146 = vadd.f32 0.0, %v1145
  %1147 = vmatmul.bf16.gmra.mxu0 %v1055
  %v1148 = vpop.f32.mrf.mxu0
  %v1149 = vadd.f32 0.0, %v1148
  %v1150 = vpop.f32.mrf.mxu0
  %v1151 = vadd.f32 0.0, %v1150
  %1152 = vmatmul.bf16.gmra.mxu0 %v1056
  %v1153 = vpop.f32.mrf.mxu0
  %v1154 = vadd.f32 0.0, %v1153
  %v1155 = vpop.f32.mrf.mxu0
  %v1156 = vadd.f32 0.0, %v1155
  %1157 = vmatmul.bf16.gmra.mxu0 %v1057
  %v1158 = vpop.f32.mrf.mxu0
  %v1159 = vadd.f32 0.0, %v1158
  %v1160 = vpop.f32.mrf.mxu0
  %v1161 = vadd.f32 0.0, %v1160
  %1162 = vdwg.mxu0
  %v1163 = vld [vmem:[%s2] sm:$0xff]
  %v1164 = vld [vmem:[%s2 + $0x8] sm:$0xff]
  %v1165 = vld [vmem:[%s2 + $0x10] sm:$0xff]
  %v1166 = vld [vmem:[%s2 + $0x18] sm:$0xff]
  %v1167 = vld [vmem:[%s2 + $0x20] sm:$0xff]
  %v1168 = vld [vmem:[%s2 + $0x28] sm:$0xff]
  %v1169 = vld [vmem:[%s2 + $0x30] sm:$0xff]
  %v1170 = vld [vmem:[%s2 + $0x38] sm:$0xff]
  %v1171 = vld [vmem:[%s2 + $0x40] sm:$0xff]
  %v1172 = vld [vmem:[%s2 + $0x48] sm:$0xff]
  %v1173 = vld [vmem:[%s2 + $0x50] sm:$0xff]
  %v1174 = vld [vmem:[%s2 + $0x58] sm:$0xff]
  %v1175 = vld [vmem:[%s2 + $0x60] sm:$0xff]
  %v1176 = vld [vmem:[%s2 + $0x68] sm:$0xff]
  %v1177 = vld [vmem:[%s2 + $0x70] sm:$0xff]
  %v1178 = vld [vmem:[%s2 + $0x78] sm:$0xff]
  %v1179 = vadd.f32 %v1163, %v1124
  %v1180 = vadd.f32 %v1164, %v1126
  %v1181 = vadd.f32 %v1165, %v1129
  %v1182 = vadd.f32 %v1166, %v1131
  %v1183 = vadd.f32 %v1167, %v1134
  %v1184 = vadd.f32 %v1168, %v1136
  %v1185 = vadd.f32 %v1169, %v1139
  %v1186 = vadd.f32 %v1170, %v1141
  %v1187 = vadd.f32 %v1171, %v1144
  %v1188 = vadd.f32 %v1172, %v1146
  %v1189 = vadd.f32 %v1173, %v1149
  %v1190 = vadd.f32 %v1174, %v1151
  %v1191 = vadd.f32 %v1175, %v1154
  %v1192 = vadd.f32 %v1176, %v1156
  %v1193 = vadd.f32 %v1177, %v1159
  %v1194 = vadd.f32 %v1178, %v1161
  %1195 = vst [vmem:[%s2] sm:$0xff] %v1179
  %1196 = vst [vmem:[%s2 + $0x8] sm:$0xff] %v1180
  %1197 = vst [vmem:[%s2 + $0x10] sm:$0xff] %v1181
  %1198 = vst [vmem:[%s2 + $0x18] sm:$0xff] %v1182
  %1199 = vst [vmem:[%s2 + $0x20] sm:$0xff] %v1183
  %1200 = vst [vmem:[%s2 + $0x28] sm:$0xff] %v1184
  %1201 = vst [vmem:[%s2 + $0x30] sm:$0xff] %v1185
  %1202 = vst [vmem:[%s2 + $0x38] sm:$0xff] %v1186
  %1203 = vst [vmem:[%s2 + $0x40] sm:$0xff] %v1187
  %1204 = vst [vmem:[%s2 + $0x48] sm:$0xff] %v1188
  %1205 = vst [vmem:[%s2 + $0x50] sm:$0xff] %v1189
  %1206 = vst [vmem:[%s2 + $0x58] sm:$0xff] %v1190
  %1207 = vst [vmem:[%s2 + $0x60] sm:$0xff] %v1191
  %1208 = vst [vmem:[%s2 + $0x68] sm:$0xff] %v1192
  %1209 = vst [vmem:[%s2 + $0x70] sm:$0xff] %v1193
  %1210 = vst [vmem:[%s2 + $0x78] sm:$0xff] %v1194
  %v1211 = vld [vmem:[%s984] sm:$0xf]
  %v1212 = vld [vmem:[%s984 + $0x4] sm:$0x1]
  %v1213 = vld [vmem:[%s984 + $0x8] sm:$0xf]
  %v1214 = vld [vmem:[%s984 + $0xc] sm:$0x1]
  %v1215 = vld [vmem:[%s984 + $0x10] sm:$0xf]
  %v1216 = vld [vmem:[%s984 + $0x14] sm:$0x1]
  %v1217 = vld [vmem:[%s984 + $0x18] sm:$0xf]
  %v1218 = vld [vmem:[%s984 + $0x1c] sm:$0x1]
  %v1219 = vld [vmem:[%s984 + $0x20] sm:$0xf]
  %v1220 = vld [vmem:[%s984 + $0x24] sm:$0x1]
  %v1221 = vld [vmem:[%s984 + $0x28] sm:$0xf]
  %v1222 = vld [vmem:[%s984 + $0x2c] sm:$0x1]
  %v1223 = vld [vmem:[%s984 + $0x30] sm:$0xf]
  %v1224 = vld [vmem:[%s984 + $0x34] sm:$0x1]
  %v1225 = vld [vmem:[%s984 + $0x38] sm:$0xf]
  %v1226 = vld [vmem:[%s984 + $0x3c] sm:$0x1]
  %v1227 = vld [vmem:[%s984 + $0x50] sm:$0xf]
  %v1228 = vld [vmem:[%s984 + $0x54] sm:$0x1]
  %v1229 = vld [vmem:[%s984 + $0x58] sm:$0xf]
  %v1230 = vld [vmem:[%s984 + $0x5c] sm:$0x1]
  %v1231 = vld [vmem:[%s984 + $0x60] sm:$0xf]
  %v1232 = vld [vmem:[%s984 + $0x64] sm:$0x1]
  %v1233 = vld [vmem:[%s984 + $0x68] sm:$0xf]
  %v1234 = vld [vmem:[%s984 + $0x6c] sm:$0x1]
  %v1235 = vld [vmem:[%s984 + $0x70] sm:$0xf]
  %v1236 = vld [vmem:[%s984 + $0x74] sm:$0x1]
  %v1237 = vld [vmem:[%s984 + $0x78] sm:$0xf]
  %v1238 = vld [vmem:[%s984 + $0x7c] sm:$0x1]
  %v1239 = vld [vmem:[%s984 + $0x80] sm:$0xf]
  %v1240 = vld [vmem:[%s984 + $0x84] sm:$0x1]
  %v1241 = vld [vmem:[%s984 + $0x88] sm:$0xf]
  %v1242 = vld [vmem:[%s984 + $0x8c] sm:$0x1]
  %v1244 = vshrl.u32 %v1211, 16
  %v1246 = vrot.slane %v1244, 4
  %v1247 = vshll.u32 %v1211, 16
  %v1249 = vrot.slane %v1247, 5
  %v1250 = vor.u32 %v1246, %v1249
  %v1251 = vrot.slane %v1250, 4
  %v1253 = vshll.u32 %v1212, 16
  %v1255 = vrot.slane %v1253, 5
  %v1256 = vsel %vm240, %v1251, %v1255
  %v1258 = vshrl.u32 %v1213, 16
  %v1260 = vrot.slane %v1258, 4
  %v1261 = vshll.u32 %v1213, 16
  %v1263 = vrot.slane %v1261, 5
  %v1264 = vor.u32 %v1260, %v1263
  %v1265 = vrot.slane %v1264, 4
  %v1267 = vshll.u32 %v1214, 16
  %v1269 = vrot.slane %v1267, 5
  %v1270 = vsel %vm240, %v1265, %v1269
  %v1272 = vshrl.u32 %v1215, 16
  %v1274 = vrot.slane %v1272, 4
  %v1275 = vshll.u32 %v1215, 16
  %v1277 = vrot.slane %v1275, 5
  %v1278 = vor.u32 %v1274, %v1277
  %v1279 = vrot.slane %v1278, 4
  %v1281 = vshll.u32 %v1216, 16
  %v1283 = vrot.slane %v1281, 5
  %v1284 = vsel %vm240, %v1279, %v1283
  %v1286 = vshrl.u32 %v1217, 16
  %v1288 = vrot.slane %v1286, 4
  %v1289 = vshll.u32 %v1217, 16
  %v1291 = vrot.slane %v1289, 5
  %v1292 = vor.u32 %v1288, %v1291
  %v1293 = vrot.slane %v1292, 4
  %v1295 = vshll.u32 %v1218, 16
  %v1297 = vrot.slane %v1295, 5
  %v1298 = vsel %vm240, %v1293, %v1297
  %v1300 = vshrl.u32 %v1219, 16
  %v1302 = vrot.slane %v1300, 4
  %v1303 = vshll.u32 %v1219, 16
  %v1305 = vrot.slane %v1303, 5
  %v1306 = vor.u32 %v1302, %v1305
  %v1307 = vrot.slane %v1306, 4
  %v1309 = vshll.u32 %v1220, 16
  %v1311 = vrot.slane %v1309, 5
  %v1312 = vsel %vm240, %v1307, %v1311
  %v1314 = vshrl.u32 %v1221, 16
  %v1316 = vrot.slane %v1314, 4
  %v1317 = vshll.u32 %v1221, 16
  %v1319 = vrot.slane %v1317, 5
  %v1320 = vor.u32 %v1316, %v1319
  %v1321 = vrot.slane %v1320, 4
  %v1323 = vshll.u32 %v1222, 16
  %v1325 = vrot.slane %v1323, 5
  %v1326 = vsel %vm240, %v1321, %v1325
  %v1328 = vshrl.u32 %v1223, 16
  %v1330 = vrot.slane %v1328, 4
  %v1331 = vshll.u32 %v1223, 16
  %v1333 = vrot.slane %v1331, 5
  %v1334 = vor.u32 %v1330, %v1333
  %v1335 = vrot.slane %v1334, 4
  %v1337 = vshll.u32 %v1224, 16
  %v1339 = vrot.slane %v1337, 5
  %v1340 = vsel %vm240, %v1335, %v1339
  %v1342 = vshrl.u32 %v1225, 16
  %v1344 = vrot.slane %v1342, 4
  %v1345 = vshll.u32 %v1225, 16
  %v1347 = vrot.slane %v1345, 5
  %v1348 = vor.u32 %v1344, %v1347
  %v1349 = vrot.slane %v1348, 4
  %v1351 = vshll.u32 %v1226, 16
  %v1353 = vrot.slane %v1351, 5
  %v1354 = vsel %vm240, %v1349, %v1353
  %v1356 = vshrl.u32 %v1227, 16
  %v1358 = vrot.slane %v1356, 4
  %v1359 = vshll.u32 %v1227, 16
  %v1361 = vrot.slane %v1359, 5
  %v1362 = vor.u32 %v1358, %v1361
  %v1363 = vrot.slane %v1362, 4
  %v1365 = vshll.u32 %v1228, 16
  %v1367 = vrot.slane %v1365, 5
  %v1368 = vsel %vm240, %v1363, %v1367
  %v1370 = vshrl.u32 %v1229, 16
  %v1372 = vrot.slane %v1370, 4
  %v1373 = vshll.u32 %v1229, 16
  %v1375 = vrot.slane %v1373, 5
  %v1376 = vor.u32 %v1372, %v1375
  %v1377 = vrot.slane %v1376, 4
  %v1379 = vshll.u32 %v1230, 16
  %v1381 = vrot.slane %v1379, 5
  %v1382 = vsel %vm240, %v1377, %v1381
  %v1384 = vshrl.u32 %v1231, 16
  %v1386 = vrot.slane %v1384, 4
  %v1387 = vshll.u32 %v1231, 16
  %v1389 = vrot.slane %v1387, 5
  %v1390 = vor.u32 %v1386, %v1389
  %v1391 = vrot.slane %v1390, 4
  %v1393 = vshll.u32 %v1232, 16
  %v1395 = vrot.slane %v1393, 5
  %v1396 = vsel %vm240, %v1391, %v1395
  %v1398 = vshrl.u32 %v1233, 16
  %v1400 = vrot.slane %v1398, 4
  %v1401 = vshll.u32 %v1233, 16
  %v1403 = vrot.slane %v1401, 5
  %v1404 = vor.u32 %v1400, %v1403
  %v1405 = vrot.slane %v1404, 4
  %v1407 = vshll.u32 %v1234, 16
  %v1409 = vrot.slane %v1407, 5
  %v1410 = vsel %vm240, %v1405, %v1409
  %v1412 = vshrl.u32 %v1235, 16
  %v1414 = vrot.slane %v1412, 4
  %v1415 = vshll.u32 %v1235, 16
  %v1417 = vrot.slane %v1415, 5
  %v1418 = vor.u32 %v1414, %v1417
  %v1419 = vrot.slane %v1418, 4
  %v1421 = vshll.u32 %v1236, 16
  %v1423 = vrot.slane %v1421, 5
  %v1424 = vsel %vm240, %v1419, %v1423
  %v1426 = vshrl.u32 %v1237, 16
  %v1428 = vrot.slane %v1426, 4
  %v1429 = vshll.u32 %v1237, 16
  %v1431 = vrot.slane %v1429, 5
  %v1432 = vor.u32 %v1428, %v1431
  %v1433 = vrot.slane %v1432, 4
  %v1435 = vshll.u32 %v1238, 16
  %v1437 = vrot.slane %v1435, 5
  %v1438 = vsel %vm240, %v1433, %v1437
  %v1440 = vshrl.u32 %v1239, 16
  %v1442 = vrot.slane %v1440, 4
  %v1443 = vshll.u32 %v1239, 16
  %v1445 = vrot.slane %v1443, 5
  %v1446 = vor.u32 %v1442, %v1445
  %v1447 = vrot.slane %v1446, 4
  %v1449 = vshll.u32 %v1240, 16
  %v1451 = vrot.slane %v1449, 5
  %v1452 = vsel %vm240, %v1447, %v1451
  %v1454 = vshrl.u32 %v1241, 16
  %v1456 = vrot.slane %v1454, 4
  %v1457 = vshll.u32 %v1241, 16
  %v1459 = vrot.slane %v1457, 5
  %v1460 = vor.u32 %v1456, %v1459
  %v1461 = vrot.slane %v1460, 4
  %v1463 = vshll.u32 %v1242, 16
  %v1465 = vrot.slane %v1463, 5
  %v1466 = vsel %vm240, %v1461, %v1465
  %s1467 = scalar_lea.vmem %s1, 256
  %v1468 = vld [vmem:[%s1467] sm:$0xf]
  %v1469 = vld [vmem:[%s1467 + $0x4] sm:$0xf]
  %v1470 = vld [vmem:[%s1467 + $0x8] sm:$0xf]
  %v1471 = vld [vmem:[%s1467 + $0xc] sm:$0xf]
  %v1472 = vld [vmem:[%s1467 + $0x10] sm:$0xf]
  %v1473 = vld [vmem:[%s1467 + $0x14] sm:$0xf]
  %v1474 = vld [vmem:[%s1467 + $0x18] sm:$0xf]
  %v1475 = vld [vmem:[%s1467 + $0x1c] sm:$0xf]
  %v1476 = vld [vmem:[%s1467 + $0x20] sm:$0xf]
  %v1477 = vld [vmem:[%s1467 + $0x24] sm:$0xf]
  %v1478 = vld [vmem:[%s1467 + $0x28] sm:$0xf]
  %v1479 = vld [vmem:[%s1467 + $0x2c] sm:$0xf]
  %v1480 = vld [vmem:[%s1467 + $0x30] sm:$0xf]
  %v1481 = vld [vmem:[%s1467 + $0x34] sm:$0xf]
  %v1482 = vld [vmem:[%s1467 + $0x38] sm:$0xf]
  %v1483 = vld [vmem:[%s1467 + $0x3c] sm:$0xf]
  %v1484 = vunpack.c.l.b16 %v1256
  %v1485 = vunpack.c.l.b16 %v1270
  %v1486 = vunpack.c.l.b16 %v1284
  %v1487 = vunpack.c.l.b16 %v1298
  %v1488 = vunpack.c.l.b16 %v1312
  %v1489 = vunpack.c.l.b16 %v1326
  %v1490 = vunpack.c.l.b16 %v1340
  %v1491 = vunpack.c.l.b16 %v1354
  %v1492 = vunpack.c.l.b16 %v1368
  %v1493 = vunpack.c.l.b16 %v1382
  %v1494 = vunpack.c.l.b16 %v1396
  %v1495 = vunpack.c.l.b16 %v1410
  %v1496 = vunpack.c.l.b16 %v1424
  %v1497 = vunpack.c.l.b16 %v1438
  %v1498 = vunpack.c.l.b16 %v1452
  %v1499 = vunpack.c.l.b16 %v1466
  %v1500 = vpack.c.b16 %v1485, %v1484
  %v1501 = vpack.c.b16 %v1487, %v1486
  %v1502 = vpack.c.b16 %v1489, %v1488
  %v1503 = vpack.c.b16 %v1491, %v1490
  %v1504 = vpack.c.b16 %v1493, %v1492
  %v1505 = vpack.c.b16 %v1495, %v1494
  %v1506 = vpack.c.b16 %v1497, %v1496
  %v1507 = vpack.c.b16 %v1499, %v1498
  %v1532 = vunpack.c.l.b16 %v1468
  %v1533 = vunpack.c.l.b16 %v1469
  %v1534 = vunpack.c.l.b16 %v1470
  %v1535 = vunpack.c.l.b16 %v1471
  %v1536 = vunpack.c.l.b16 %v1472
  %v1537 = vunpack.c.l.b16 %v1473
  %v1538 = vunpack.c.l.b16 %v1474
  %v1539 = vunpack.c.l.b16 %v1475
  %v1540 = vunpack.c.l.b16 %v1476
  %v1541 = vunpack.c.l.b16 %v1477
  %v1542 = vunpack.c.l.b16 %v1478
  %v1543 = vunpack.c.l.b16 %v1479
  %v1544 = vunpack.c.l.b16 %v1480
  %v1545 = vunpack.c.l.b16 %v1481
  %v1546 = vunpack.c.l.b16 %v1482
  %v1547 = vunpack.c.l.b16 %v1483
  %v1548 = vpack.c.b16 %v1533, %v1532
  %v1549 = vpack.c.b16 %v1535, %v1534
  %v1550 = vpack.c.b16 %v1537, %v1536
  %v1551 = vpack.c.b16 %v1539, %v1538
  %v1552 = vpack.c.b16 %v1541, %v1540
  %v1553 = vpack.c.b16 %v1543, %v1542
  %v1554 = vpack.c.b16 %v1545, %v1544
  %v1555 = vpack.c.b16 %v1547, %v1546
  %1564 = vmatpush.bf16.msra.mxu0 %v1555
  %1565 = vmatpush.bf16.msra.mxu0 %v1554
  %1566 = vmatpush.bf16.msra.mxu0 %v1553
  %1567 = vmatpush.bf16.msra.mxu0 %v1552
  %1568 = vmatpush.bf16.msra.mxu0 %v1551
  %1569 = vmatpush.bf16.msra.mxu0 %v1550
  %1570 = vmatpush.bf16.msra.mxu0 %v1549
  %1571 = vmatpush.bf16.msra.mxu0 %v1548
  %1572 = vmatmul.bf16.gmra.mxu0 %v1500
  %v1573 = vpop.f32.mrf.mxu0
  %v1574 = vadd.f32 0.0, %v1573
  %v1575 = vpop.f32.mrf.mxu0
  %v1576 = vadd.f32 0.0, %v1575
  %1577 = vmatmul.bf16.gmra.mxu0 %v1501
  %v1578 = vpop.f32.mrf.mxu0
  %v1579 = vadd.f32 0.0, %v1578
  %v1580 = vpop.f32.mrf.mxu0
  %v1581 = vadd.f32 0.0, %v1580
  %1582 = vmatmul.bf16.gmra.mxu0 %v1502
  %v1583 = vpop.f32.mrf.mxu0
  %v1584 = vadd.f32 0.0, %v1583
  %v1585 = vpop.f32.mrf.mxu0
  %v1586 = vadd.f32 0.0, %v1585
  %1587 = vmatmul.bf16.gmra.mxu0 %v1503
  %v1588 = vpop.f32.mrf.mxu0
  %v1589 = vadd.f32 0.0, %v1588
  %v1590 = vpop.f32.mrf.mxu0
  %v1591 = vadd.f32 0.0, %v1590
  %1592 = vmatmul.bf16.gmra.mxu0 %v1504
  %v1593 = vpop.f32.mrf.mxu0
  %v1594 = vadd.f32 0.0, %v1593
  %v1595 = vpop.f32.mrf.mxu0
  %v1596 = vadd.f32 0.0, %v1595
  %1597 = vmatmul.bf16.gmra.mxu0 %v1505
  %v1598 = vpop.f32.mrf.mxu0
  %v1599 = vadd.f32 0.0, %v1598
  %v1600 = vpop.f32.mrf.mxu0
  %v1601 = vadd.f32 0.0, %v1600
  %1602 = vmatmul.bf16.gmra.mxu0 %v1506
  %v1603 = vpop.f32.mrf.mxu0
  %v1604 = vadd.f32 0.0, %v1603
  %v1605 = vpop.f32.mrf.mxu0
  %v1606 = vadd.f32 0.0, %v1605
  %1607 = vmatmul.bf16.gmra.mxu0 %v1507
  %v1608 = vpop.f32.mrf.mxu0
  %v1609 = vadd.f32 0.0, %v1608
  %v1610 = vpop.f32.mrf.mxu0
  %v1611 = vadd.f32 0.0, %v1610
  %1612 = vdwg.mxu0
  %v1613 = vld [vmem:[%s2] sm:$0xff]
  %v1614 = vld [vmem:[%s2 + $0x8] sm:$0xff]
  %v1615 = vld [vmem:[%s2 + $0x10] sm:$0xff]
  %v1616 = vld [vmem:[%s2 + $0x18] sm:$0xff]
  %v1617 = vld [vmem:[%s2 + $0x20] sm:$0xff]
  %v1618 = vld [vmem:[%s2 + $0x28] sm:$0xff]
  %v1619 = vld [vmem:[%s2 + $0x30] sm:$0xff]
  %v1620 = vld [vmem:[%s2 + $0x38] sm:$0xff]
  %v1621 = vld [vmem:[%s2 + $0x40] sm:$0xff]
  %v1622 = vld [vmem:[%s2 + $0x48] sm:$0xff]
  %v1623 = vld [vmem:[%s2 + $0x50] sm:$0xff]
  %v1624 = vld [vmem:[%s2 + $0x58] sm:$0xff]
  %v1625 = vld [vmem:[%s2 + $0x60] sm:$0xff]
  %v1626 = vld [vmem:[%s2 + $0x68] sm:$0xff]
  %v1627 = vld [vmem:[%s2 + $0x70] sm:$0xff]
  %v1628 = vld [vmem:[%s2 + $0x78] sm:$0xff]
  %v1629 = vadd.f32 %v1613, %v1574
  %v1630 = vadd.f32 %v1614, %v1576
  %v1631 = vadd.f32 %v1615, %v1579
  %v1632 = vadd.f32 %v1616, %v1581
  %v1633 = vadd.f32 %v1617, %v1584
  %v1634 = vadd.f32 %v1618, %v1586
  %v1635 = vadd.f32 %v1619, %v1589
  %v1636 = vadd.f32 %v1620, %v1591
  %v1637 = vadd.f32 %v1621, %v1594
  %v1638 = vadd.f32 %v1622, %v1596
  %v1639 = vadd.f32 %v1623, %v1599
  %v1640 = vadd.f32 %v1624, %v1601
  %v1641 = vadd.f32 %v1625, %v1604
  %v1642 = vadd.f32 %v1626, %v1606
  %v1643 = vadd.f32 %v1627, %v1609
  %v1644 = vadd.f32 %v1628, %v1611
  %1645 = vst [vmem:[%s2] sm:$0xff] %v1629
  %1646 = vst [vmem:[%s2 + $0x8] sm:$0xff] %v1630
  %1647 = vst [vmem:[%s2 + $0x10] sm:$0xff] %v1631
  %1648 = vst [vmem:[%s2 + $0x18] sm:$0xff] %v1632
  %1649 = vst [vmem:[%s2 + $0x20] sm:$0xff] %v1633
  %1650 = vst [vmem:[%s2 + $0x28] sm:$0xff] %v1634
  %1651 = vst [vmem:[%s2 + $0x30] sm:$0xff] %v1635
  %1652 = vst [vmem:[%s2 + $0x38] sm:$0xff] %v1636
  %1653 = vst [vmem:[%s2 + $0x40] sm:$0xff] %v1637
  %1654 = vst [vmem:[%s2 + $0x48] sm:$0xff] %v1638
  %1655 = vst [vmem:[%s2 + $0x50] sm:$0xff] %v1639
  %1656 = vst [vmem:[%s2 + $0x58] sm:$0xff] %v1640
  %1657 = vst [vmem:[%s2 + $0x60] sm:$0xff] %v1641
  %1658 = vst [vmem:[%s2 + $0x68] sm:$0xff] %v1642
  %1659 = vst [vmem:[%s2 + $0x70] sm:$0xff] %v1643
  %1660 = vst [vmem:[%s2 + $0x78] sm:$0xff] %v1644
  %v1661 = vld [vmem:[%s984] sm:$0xe]
  %v1662 = vld [vmem:[%s984 + $0x4] sm:$0x1]
  %v1663 = vld [vmem:[%s984 + $0x8] sm:$0xe]
  %v1664 = vld [vmem:[%s984 + $0xc] sm:$0x1]
  %v1665 = vld [vmem:[%s984 + $0x10] sm:$0xe]
  %v1666 = vld [vmem:[%s984 + $0x14] sm:$0x1]
  %v1667 = vld [vmem:[%s984 + $0x18] sm:$0xe]
  %v1668 = vld [vmem:[%s984 + $0x1c] sm:$0x1]
  %v1669 = vld [vmem:[%s984 + $0x20] sm:$0xe]
  %v1670 = vld [vmem:[%s984 + $0x24] sm:$0x1]
  %v1671 = vld [vmem:[%s984 + $0x28] sm:$0xe]
  %v1672 = vld [vmem:[%s984 + $0x2c] sm:$0x1]
  %v1673 = vld [vmem:[%s984 + $0x30] sm:$0xe]
  %v1674 = vld [vmem:[%s984 + $0x34] sm:$0x1]
  %v1675 = vld [vmem:[%s984 + $0x38] sm:$0xe]
  %v1676 = vld [vmem:[%s984 + $0x3c] sm:$0x1]
  %v1677 = vld [vmem:[%s984 + $0x50] sm:$0xe]
  %v1678 = vld [vmem:[%s984 + $0x54] sm:$0x1]
  %v1679 = vld [vmem:[%s984 + $0x58] sm:$0xe]
  %v1680 = vld [vmem:[%s984 + $0x5c] sm:$0x1]
  %v1681 = vld [vmem:[%s984 + $0x60] sm:$0xe]
  %v1682 = vld [vmem:[%s984 + $0x64] sm:$0x1]
  %v1683 = vld [vmem:[%s984 + $0x68] sm:$0xe]
  %v1684 = vld [vmem:[%s984 + $0x6c] sm:$0x1]
  %v1685 = vld [vmem:[%s984 + $0x70] sm:$0xe]
  %v1686 = vld [vmem:[%s984 + $0x74] sm:$0x1]
  %v1687 = vld [vmem:[%s984 + $0x78] sm:$0xe]
  %v1688 = vld [vmem:[%s984 + $0x7c] sm:$0x1]
  %v1689 = vld [vmem:[%s984 + $0x80] sm:$0xe]
  %v1690 = vld [vmem:[%s984 + $0x84] sm:$0x1]
  %v1691 = vld [vmem:[%s984 + $0x88] sm:$0xe]
  %v1692 = vld [vmem:[%s984 + $0x8c] sm:$0x1]
  %v1725 = vrot.slane %v1661, 5
  %v1726 = vrot.slane %v1725, 4
  %v1727 = vrot.slane %v1662, 5
  %v1728 = vsel %vm725, %v1726, %v1727
  %v1729 = vrot.slane %v1663, 5
  %v1730 = vrot.slane %v1729, 4
  %v1731 = vrot.slane %v1664, 5
  %v1732 = vsel %vm725, %v1730, %v1731
  %v1733 = vrot.slane %v1665, 5
  %v1734 = vrot.slane %v1733, 4
  %v1735 = vrot.slane %v1666, 5
  %v1736 = vsel %vm725, %v1734, %v1735
  %v1737 = vrot.slane %v1667, 5
  %v1738 = vrot.slane %v1737, 4
  %v1739 = vrot.slane %v1668, 5
  %v1740 = vsel %vm725, %v1738, %v1739
  %v1741 = vrot.slane %v1669, 5
  %v1742 = vrot.slane %v1741, 4
  %v1743 = vrot.slane %v1670, 5
  %v1744 = vsel %vm725, %v1742, %v1743
  %v1745 = vrot.slane %v1671, 5
  %v1746 = vrot.slane %v1745, 4
  %v1747 = vrot.slane %v1672, 5
  %v1748 = vsel %vm725, %v1746, %v1747
  %v1749 = vrot.slane %v1673, 5
  %v1750 = vrot.slane %v1749, 4
  %v1751 = vrot.slane %v1674, 5
  %v1752 = vsel %vm725, %v1750, %v1751
  %v1753 = vrot.slane %v1675, 5
  %v1754 = vrot.slane %v1753, 4
  %v1755 = vrot.slane %v1676, 5
  %v1756 = vsel %vm725, %v1754, %v1755
  %v1757 = vrot.slane %v1677, 5
  %v1758 = vrot.slane %v1757, 4
  %v1759 = vrot.slane %v1678, 5
  %v1760 = vsel %vm725, %v1758, %v1759
  %v1761 = vrot.slane %v1679, 5
  %v1762 = vrot.slane %v1761, 4
  %v1763 = vrot.slane %v1680, 5
  %v1764 = vsel %vm725, %v1762, %v1763
  %v1765 = vrot.slane %v1681, 5
  %v1766 = vrot.slane %v1765, 4
  %v1767 = vrot.slane %v1682, 5
  %v1768 = vsel %vm725, %v1766, %v1767
  %v1769 = vrot.slane %v1683, 5
  %v1770 = vrot.slane %v1769, 4
  %v1771 = vrot.slane %v1684, 5
  %v1772 = vsel %vm725, %v1770, %v1771
  %v1773 = vrot.slane %v1685, 5
  %v1774 = vrot.slane %v1773, 4
  %v1775 = vrot.slane %v1686, 5
  %v1776 = vsel %vm725, %v1774, %v1775
  %v1777 = vrot.slane %v1687, 5
  %v1778 = vrot.slane %v1777, 4
  %v1779 = vrot.slane %v1688, 5
  %v1780 = vsel %vm725, %v1778, %v1779
  %v1781 = vrot.slane %v1689, 5
  %v1782 = vrot.slane %v1781, 4
  %v1783 = vrot.slane %v1690, 5
  %v1784 = vsel %vm725, %v1782, %v1783
  %v1785 = vrot.slane %v1691, 5
  %v1786 = vrot.slane %v1785, 4
  %v1787 = vrot.slane %v1692, 5
  %v1788 = vsel %vm725, %v1786, %v1787
  %s1789 = scalar_lea.vmem %s1, 320
  %v1790 = vld [vmem:[%s1789] sm:$0xf]
  %v1791 = vld [vmem:[%s1789 + $0x4] sm:$0xf]
  %v1792 = vld [vmem:[%s1789 + $0x8] sm:$0xf]
  %v1793 = vld [vmem:[%s1789 + $0xc] sm:$0xf]
  %v1794 = vld [vmem:[%s1789 + $0x10] sm:$0xf]
  %v1795 = vld [vmem:[%s1789 + $0x14] sm:$0xf]
  %v1796 = vld [vmem:[%s1789 + $0x18] sm:$0xf]
  %v1797 = vld [vmem:[%s1789 + $0x1c] sm:$0xf]
  %v1798 = vld [vmem:[%s1789 + $0x20] sm:$0xf]
  %v1799 = vld [vmem:[%s1789 + $0x24] sm:$0xf]
  %v1800 = vld [vmem:[%s1789 + $0x28] sm:$0xf]
  %v1801 = vld [vmem:[%s1789 + $0x2c] sm:$0xf]
  %v1802 = vld [vmem:[%s1789 + $0x30] sm:$0xf]
  %v1803 = vld [vmem:[%s1789 + $0x34] sm:$0xf]
  %v1804 = vld [vmem:[%s1789 + $0x38] sm:$0xf]
  %v1805 = vld [vmem:[%s1789 + $0x3c] sm:$0xf]
  %v1806 = vunpack.c.l.b16 %v1728
  %v1807 = vunpack.c.l.b16 %v1732
  %v1808 = vunpack.c.l.b16 %v1736
  %v1809 = vunpack.c.l.b16 %v1740
  %v1810 = vunpack.c.l.b16 %v1744
  %v1811 = vunpack.c.l.b16 %v1748
  %v1812 = vunpack.c.l.b16 %v1752
  %v1813 = vunpack.c.l.b16 %v1756
  %v1814 = vunpack.c.l.b16 %v1760
  %v1815 = vunpack.c.l.b16 %v1764
  %v1816 = vunpack.c.l.b16 %v1768
  %v1817 = vunpack.c.l.b16 %v1772
  %v1818 = vunpack.c.l.b16 %v1776
  %v1819 = vunpack.c.l.b16 %v1780
  %v1820 = vunpack.c.l.b16 %v1784
  %v1821 = vunpack.c.l.b16 %v1788
  %v1822 = vpack.c.b16 %v1807, %v1806
  %v1823 = vpack.c.b16 %v1809, %v1808
  %v1824 = vpack.c.b16 %v1811, %v1810
  %v1825 = vpack.c.b16 %v1813, %v1812
  %v1826 = vpack.c.b16 %v1815, %v1814
  %v1827 = vpack.c.b16 %v1817, %v1816
  %v1828 = vpack.c.b16 %v1819, %v1818
  %v1829 = vpack.c.b16 %v1821, %v1820
  %v1854 = vunpack.c.l.b16 %v1790
  %v1855 = vunpack.c.l.b16 %v1791
  %v1856 = vunpack.c.l.b16 %v1792
  %v1857 = vunpack.c.l.b16 %v1793
  %v1858 = vunpack.c.l.b16 %v1794
  %v1859 = vunpack.c.l.b16 %v1795
  %v1860 = vunpack.c.l.b16 %v1796
  %v1861 = vunpack.c.l.b16 %v1797
  %v1862 = vunpack.c.l.b16 %v1798
  %v1863 = vunpack.c.l.b16 %v1799
  %v1864 = vunpack.c.l.b16 %v1800
  %v1865 = vunpack.c.l.b16 %v1801
  %v1866 = vunpack.c.l.b16 %v1802
  %v1867 = vunpack.c.l.b16 %v1803
  %v1868 = vunpack.c.l.b16 %v1804
  %v1869 = vunpack.c.l.b16 %v1805
  %v1870 = vpack.c.b16 %v1855, %v1854
  %v1871 = vpack.c.b16 %v1857, %v1856
  %v1872 = vpack.c.b16 %v1859, %v1858
  %v1873 = vpack.c.b16 %v1861, %v1860
  %v1874 = vpack.c.b16 %v1863, %v1862
  %v1875 = vpack.c.b16 %v1865, %v1864
  %v1876 = vpack.c.b16 %v1867, %v1866
  %v1877 = vpack.c.b16 %v1869, %v1868
  %1886 = vmatpush.bf16.msra.mxu0 %v1877
  %1887 = vmatpush.bf16.msra.mxu0 %v1876
  %1888 = vmatpush.bf16.msra.mxu0 %v1875
  %1889 = vmatpush.bf16.msra.mxu0 %v1874
  %1890 = vmatpush.bf16.msra.mxu0 %v1873
  %1891 = vmatpush.bf16.msra.mxu0 %v1872
  %1892 = vmatpush.bf16.msra.mxu0 %v1871
  %1893 = vmatpush.bf16.msra.mxu0 %v1870
  %1894 = vmatmul.bf16.gmra.mxu0 %v1822
  %v1895 = vpop.f32.mrf.mxu0
  %v1896 = vadd.f32 0.0, %v1895
  %v1897 = vpop.f32.mrf.mxu0
  %v1898 = vadd.f32 0.0, %v1897
  %1899 = vmatmul.bf16.gmra.mxu0 %v1823
  %v1900 = vpop.f32.mrf.mxu0
  %v1901 = vadd.f32 0.0, %v1900
  %v1902 = vpop.f32.mrf.mxu0
  %v1903 = vadd.f32 0.0, %v1902
  %1904 = vmatmul.bf16.gmra.mxu0 %v1824
  %v1905 = vpop.f32.mrf.mxu0
  %v1906 = vadd.f32 0.0, %v1905
  %v1907 = vpop.f32.mrf.mxu0
  %v1908 = vadd.f32 0.0, %v1907
  %1909 = vmatmul.bf16.gmra.mxu0 %v1825
  %v1910 = vpop.f32.mrf.mxu0
  %v1911 = vadd.f32 0.0, %v1910
  %v1912 = vpop.f32.mrf.mxu0
  %v1913 = vadd.f32 0.0, %v1912
  %1914 = vmatmul.bf16.gmra.mxu0 %v1826
  %v1915 = vpop.f32.mrf.mxu0
  %v1916 = vadd.f32 0.0, %v1915
  %v1917 = vpop.f32.mrf.mxu0
  %v1918 = vadd.f32 0.0, %v1917
  %1919 = vmatmul.bf16.gmra.mxu0 %v1827
  %v1920 = vpop.f32.mrf.mxu0
  %v1921 = vadd.f32 0.0, %v1920
  %v1922 = vpop.f32.mrf.mxu0
  %v1923 = vadd.f32 0.0, %v1922
  %1924 = vmatmul.bf16.gmra.mxu0 %v1828
  %v1925 = vpop.f32.mrf.mxu0
  %v1926 = vadd.f32 0.0, %v1925
  %v1927 = vpop.f32.mrf.mxu0
  %v1928 = vadd.f32 0.0, %v1927
  %1929 = vmatmul.bf16.gmra.mxu0 %v1829
  %v1930 = vpop.f32.mrf.mxu0
  %v1931 = vadd.f32 0.0, %v1930
  %v1932 = vpop.f32.mrf.mxu0
  %v1933 = vadd.f32 0.0, %v1932
  %1934 = vdwg.mxu0
  %v1935 = vld [vmem:[%s2] sm:$0xff]
  %v1936 = vld [vmem:[%s2 + $0x8] sm:$0xff]
  %v1937 = vld [vmem:[%s2 + $0x10] sm:$0xff]
  %v1938 = vld [vmem:[%s2 + $0x18] sm:$0xff]
  %v1939 = vld [vmem:[%s2 + $0x20] sm:$0xff]
  %v1940 = vld [vmem:[%s2 + $0x28] sm:$0xff]
  %v1941 = vld [vmem:[%s2 + $0x30] sm:$0xff]
  %v1942 = vld [vmem:[%s2 + $0x38] sm:$0xff]
  %v1943 = vld [vmem:[%s2 + $0x40] sm:$0xff]
  %v1944 = vld [vmem:[%s2 + $0x48] sm:$0xff]
  %v1945 = vld [vmem:[%s2 + $0x50] sm:$0xff]
  %v1946 = vld [vmem:[%s2 + $0x58] sm:$0xff]
  %v1947 = vld [vmem:[%s2 + $0x60] sm:$0xff]
  %v1948 = vld [vmem:[%s2 + $0x68] sm:$0xff]
  %v1949 = vld [vmem:[%s2 + $0x70] sm:$0xff]
  %v1950 = vld [vmem:[%s2 + $0x78] sm:$0xff]
  %v1951 = vadd.f32 %v1935, %v1896
  %v1952 = vadd.f32 %v1936, %v1898
  %v1953 = vadd.f32 %v1937, %v1901
  %v1954 = vadd.f32 %v1938, %v1903
  %v1955 = vadd.f32 %v1939, %v1906
  %v1956 = vadd.f32 %v1940, %v1908
  %v1957 = vadd.f32 %v1941, %v1911
  %v1958 = vadd.f32 %v1942, %v1913
  %v1959 = vadd.f32 %v1943, %v1916
  %v1960 = vadd.f32 %v1944, %v1918
  %v1961 = vadd.f32 %v1945, %v1921
  %v1962 = vadd.f32 %v1946, %v1923
  %v1963 = vadd.f32 %v1947, %v1926
  %v1964 = vadd.f32 %v1948, %v1928
  %v1965 = vadd.f32 %v1949, %v1931
  %v1966 = vadd.f32 %v1950, %v1933
  %1967 = vst [vmem:[%s2] sm:$0xff] %v1951
  %1968 = vst [vmem:[%s2 + $0x8] sm:$0xff] %v1952
  %1969 = vst [vmem:[%s2 + $0x10] sm:$0xff] %v1953
  %1970 = vst [vmem:[%s2 + $0x18] sm:$0xff] %v1954
  %1971 = vst [vmem:[%s2 + $0x20] sm:$0xff] %v1955
  %1972 = vst [vmem:[%s2 + $0x28] sm:$0xff] %v1956
  %1973 = vst [vmem:[%s2 + $0x30] sm:$0xff] %v1957
  %1974 = vst [vmem:[%s2 + $0x38] sm:$0xff] %v1958
  %1975 = vst [vmem:[%s2 + $0x40] sm:$0xff] %v1959
  %1976 = vst [vmem:[%s2 + $0x48] sm:$0xff] %v1960
  %1977 = vst [vmem:[%s2 + $0x50] sm:$0xff] %v1961
  %1978 = vst [vmem:[%s2 + $0x58] sm:$0xff] %v1962
  %1979 = vst [vmem:[%s2 + $0x60] sm:$0xff] %v1963
  %1980 = vst [vmem:[%s2 + $0x68] sm:$0xff] %v1964
  %1981 = vst [vmem:[%s2 + $0x70] sm:$0xff] %v1965
  %1982 = vst [vmem:[%s2 + $0x78] sm:$0xff] %v1966
  %s1983 = scalar_lea.vmem %s0, 16
  %v1984 = vld [vmem:[%s1983] sm:$0xf]
  %v1985 = vld [vmem:[%s1983 + $0x8] sm:$0xf]
  %v1986 = vld [vmem:[%s1983 + $0x10] sm:$0xf]
  %v1987 = vld [vmem:[%s1983 + $0x18] sm:$0xf]
  %v1988 = vld [vmem:[%s1983 + $0x20] sm:$0xf]
  %v1989 = vld [vmem:[%s1983 + $0x28] sm:$0xf]
  %v1990 = vld [vmem:[%s1983 + $0x30] sm:$0xf]
  %v1991 = vld [vmem:[%s1983 + $0x38] sm:$0xf]
  %v1992 = vld [vmem:[%s1983 + $0x50] sm:$0xf]
  %v1993 = vld [vmem:[%s1983 + $0x58] sm:$0xf]
  %v1994 = vld [vmem:[%s1983 + $0x60] sm:$0xf]
  %v1995 = vld [vmem:[%s1983 + $0x68] sm:$0xf]
  %v1996 = vld [vmem:[%s1983 + $0x70] sm:$0xf]
  %v1997 = vld [vmem:[%s1983 + $0x78] sm:$0xf]
  %v1998 = vld [vmem:[%s1983 + $0x80] sm:$0xf]
  %v1999 = vld [vmem:[%s1983 + $0x88] sm:$0xf]
  %s2000 = scalar_lea.vmem %s1, 384
  %v2001 = vld [vmem:[%s2000] sm:$0xf]
  %v2002 = vld [vmem:[%s2000 + $0x4] sm:$0xf]
  %v2003 = vld [vmem:[%s2000 + $0x8] sm:$0xf]
  %v2004 = vld [vmem:[%s2000 + $0xc] sm:$0xf]
  %v2005 = vld [vmem:[%s2000 + $0x10] sm:$0xf]
  %v2006 = vld [vmem:[%s2000 + $0x14] sm:$0xf]
  %v2007 = vld [vmem:[%s2000 + $0x18] sm:$0xf]
  %v2008 = vld [vmem:[%s2000 + $0x1c] sm:$0xf]
  %v2009 = vld [vmem:[%s2000 + $0x20] sm:$0xf]
  %v2010 = vld [vmem:[%s2000 + $0x24] sm:$0xf]
  %v2011 = vld [vmem:[%s2000 + $0x28] sm:$0xf]
  %v2012 = vld [vmem:[%s2000 + $0x2c] sm:$0xf]
  %v2013 = vld [vmem:[%s2000 + $0x30] sm:$0xf]
  %v2014 = vld [vmem:[%s2000 + $0x34] sm:$0xf]
  %v2015 = vld [vmem:[%s2000 + $0x38] sm:$0xf]
  %v2016 = vld [vmem:[%s2000 + $0x3c] sm:$0xf]
  %v2033 = vunpack.c.l.b16 %v1984
  %v2034 = vunpack.c.l.b16 %v1985
  %v2035 = vunpack.c.l.b16 %v1986
  %v2036 = vunpack.c.l.b16 %v1987
  %v2037 = vunpack.c.l.b16 %v1988
  %v2038 = vunpack.c.l.b16 %v1989
  %v2039 = vunpack.c.l.b16 %v1990
  %v2040 = vunpack.c.l.b16 %v1991
  %v2041 = vunpack.c.l.b16 %v1992
  %v2042 = vunpack.c.l.b16 %v1993
  %v2043 = vunpack.c.l.b16 %v1994
  %v2044 = vunpack.c.l.b16 %v1995
  %v2045 = vunpack.c.l.b16 %v1996
  %v2046 = vunpack.c.l.b16 %v1997
  %v2047 = vunpack.c.l.b16 %v1998
  %v2048 = vunpack.c.l.b16 %v1999
  %v2049 = vpack.c.b16 %v2034, %v2033
  %v2050 = vpack.c.b16 %v2036, %v2035
  %v2051 = vpack.c.b16 %v2038, %v2037
  %v2052 = vpack.c.b16 %v2040, %v2039
  %v2053 = vpack.c.b16 %v2042, %v2041
  %v2054 = vpack.c.b16 %v2044, %v2043
  %v2055 = vpack.c.b16 %v2046, %v2045
  %v2056 = vpack.c.b16 %v2048, %v2047
  %v2081 = vunpack.c.l.b16 %v2001
  %v2082 = vunpack.c.l.b16 %v2002
  %v2083 = vunpack.c.l.b16 %v2003
  %v2084 = vunpack.c.l.b16 %v2004
  %v2085 = vunpack.c.l.b16 %v2005
  %v2086 = vunpack.c.l.b16 %v2006
  %v2087 = vunpack.c.l.b16 %v2007
  %v2088 = vunpack.c.l.b16 %v2008
  %v2089 = vunpack.c.l.b16 %v2009
  %v2090 = vunpack.c.l.b16 %v2010
  %v2091 = vunpack.c.l.b16 %v2011
  %v2092 = vunpack.c.l.b16 %v2012
  %v2093 = vunpack.c.l.b16 %v2013
  %v2094 = vunpack.c.l.b16 %v2014
  %v2095 = vunpack.c.l.b16 %v2015
  %v2096 = vunpack.c.l.b16 %v2016
  %v2097 = vpack.c.b16 %v2082, %v2081
  %v2098 = vpack.c.b16 %v2084, %v2083
  %v2099 = vpack.c.b16 %v2086, %v2085
  %v2100 = vpack.c.b16 %v2088, %v2087
  %v2101 = vpack.c.b16 %v2090, %v2089
  %v2102 = vpack.c.b16 %v2092, %v2091
  %v2103 = vpack.c.b16 %v2094, %v2093
  %v2104 = vpack.c.b16 %v2096, %v2095
  %2113 = vmatpush.bf16.msra.mxu0 %v2104
  %2114 = vmatpush.bf16.msra.mxu0 %v2103
  %2115 = vmatpush.bf16.msra.mxu0 %v2102
  %2116 = vmatpush.bf16.msra.mxu0 %v2101
  %2117 = vmatpush.bf16.msra.mxu0 %v2100
  %2118 = vmatpush.bf16.msra.mxu0 %v2099
  %2119 = vmatpush.bf16.msra.mxu0 %v2098
  %2120 = vmatpush.bf16.msra.mxu0 %v2097
  %2121 = vmatmul.bf16.gmra.mxu0 %v2049
  %v2122 = vpop.f32.mrf.mxu0
  %v2123 = vadd.f32 0.0, %v2122
  %v2124 = vpop.f32.mrf.mxu0
  %v2125 = vadd.f32 0.0, %v2124
  %2126 = vmatmul.bf16.gmra.mxu0 %v2050
  %v2127 = vpop.f32.mrf.mxu0
  %v2128 = vadd.f32 0.0, %v2127
  %v2129 = vpop.f32.mrf.mxu0
  %v2130 = vadd.f32 0.0, %v2129
  %2131 = vmatmul.bf16.gmra.mxu0 %v2051
  %v2132 = vpop.f32.mrf.mxu0
  %v2133 = vadd.f32 0.0, %v2132
  %v2134 = vpop.f32.mrf.mxu0
  %v2135 = vadd.f32 0.0, %v2134
  %2136 = vmatmul.bf16.gmra.mxu0 %v2052
  %v2137 = vpop.f32.mrf.mxu0
  %v2138 = vadd.f32 0.0, %v2137
  %v2139 = vpop.f32.mrf.mxu0
  %v2140 = vadd.f32 0.0, %v2139
  %2141 = vmatmul.bf16.gmra.mxu0 %v2053
  %v2142 = vpop.f32.mrf.mxu0
  %v2143 = vadd.f32 0.0, %v2142
  %v2144 = vpop.f32.mrf.mxu0
  %v2145 = vadd.f32 0.0, %v2144
  %2146 = vmatmul.bf16.gmra.mxu0 %v2054
  %v2147 = vpop.f32.mrf.mxu0
  %v2148 = vadd.f32 0.0, %v2147
  %v2149 = vpop.f32.mrf.mxu0
  %v2150 = vadd.f32 0.0, %v2149
  %2151 = vmatmul.bf16.gmra.mxu0 %v2055
  %v2152 = vpop.f32.mrf.mxu0
  %v2153 = vadd.f32 0.0, %v2152
  %v2154 = vpop.f32.mrf.mxu0
  %v2155 = vadd.f32 0.0, %v2154
  %2156 = vmatmul.bf16.gmra.mxu0 %v2056
  %v2157 = vpop.f32.mrf.mxu0
  %v2158 = vadd.f32 0.0, %v2157
  %v2159 = vpop.f32.mrf.mxu0
  %v2160 = vadd.f32 0.0, %v2159
  %2161 = vdwg.mxu0
  %v2162 = vld [vmem:[%s2] sm:$0xff]
  %v2163 = vld [vmem:[%s2 + $0x8] sm:$0xff]
  %v2164 = vld [vmem:[%s2 + $0x10] sm:$0xff]
  %v2165 = vld [vmem:[%s2 + $0x18] sm:$0xff]
  %v2166 = vld [vmem:[%s2 + $0x20] sm:$0xff]
  %v2167 = vld [vmem:[%s2 + $0x28] sm:$0xff]
  %v2168 = vld [vmem:[%s2 + $0x30] sm:$0xff]
  %v2169 = vld [vmem:[%s2 + $0x38] sm:$0xff]
  %v2170 = vld [vmem:[%s2 + $0x40] sm:$0xff]
  %v2171 = vld [vmem:[%s2 + $0x48] sm:$0xff]
  %v2172 = vld [vmem:[%s2 + $0x50] sm:$0xff]
  %v2173 = vld [vmem:[%s2 + $0x58] sm:$0xff]
  %v2174 = vld [vmem:[%s2 + $0x60] sm:$0xff]
  %v2175 = vld [vmem:[%s2 + $0x68] sm:$0xff]
  %v2176 = vld [vmem:[%s2 + $0x70] sm:$0xff]
  %v2177 = vld [vmem:[%s2 + $0x78] sm:$0xff]
  %v2178 = vadd.f32 %v2162, %v2123
  %v2179 = vadd.f32 %v2163, %v2125
  %v2180 = vadd.f32 %v2164, %v2128
  %v2181 = vadd.f32 %v2165, %v2130
  %v2182 = vadd.f32 %v2166, %v2133
  %v2183 = vadd.f32 %v2167, %v2135
  %v2184 = vadd.f32 %v2168, %v2138
  %v2185 = vadd.f32 %v2169, %v2140
  %v2186 = vadd.f32 %v2170, %v2143
  %v2187 = vadd.f32 %v2171, %v2145
  %v2188 = vadd.f32 %v2172, %v2148
  %v2189 = vadd.f32 %v2173, %v2150
  %v2190 = vadd.f32 %v2174, %v2153
  %v2191 = vadd.f32 %v2175, %v2155
  %v2192 = vadd.f32 %v2176, %v2158
  %v2193 = vadd.f32 %v2177, %v2160
  %2194 = vst [vmem:[%s2] sm:$0xff] %v2178
  %2195 = vst [vmem:[%s2 + $0x8] sm:$0xff] %v2179
  %2196 = vst [vmem:[%s2 + $0x10] sm:$0xff] %v2180
  %2197 = vst [vmem:[%s2 + $0x18] sm:$0xff] %v2181
  %2198 = vst [vmem:[%s2 + $0x20] sm:$0xff] %v2182
  %2199 = vst [vmem:[%s2 + $0x28] sm:$0xff] %v2183
  %2200 = vst [vmem:[%s2 + $0x30] sm:$0xff] %v2184
  %2201 = vst [vmem:[%s2 + $0x38] sm:$0xff] %v2185
  %2202 = vst [vmem:[%s2 + $0x40] sm:$0xff] %v2186
  %2203 = vst [vmem:[%s2 + $0x48] sm:$0xff] %v2187
  %2204 = vst [vmem:[%s2 + $0x50] sm:$0xff] %v2188
  %2205 = vst [vmem:[%s2 + $0x58] sm:$0xff] %v2189
  %2206 = vst [vmem:[%s2 + $0x60] sm:$0xff] %v2190
  %2207 = vst [vmem:[%s2 + $0x68] sm:$0xff] %v2191
  %2208 = vst [vmem:[%s2 + $0x70] sm:$0xff] %v2192
  %2209 = vst [vmem:[%s2 + $0x78] sm:$0xff] %v2193
  %v2210 = vld [vmem:[%s1983] sm:$0xf]
  %v2211 = vld [vmem:[%s1983 + $0x4] sm:$0x1]
  %v2212 = vld [vmem:[%s1983 + $0x8] sm:$0xf]
  %v2213 = vld [vmem:[%s1983 + $0xc] sm:$0x1]
  %v2214 = vld [vmem:[%s1983 + $0x10] sm:$0xf]
  %v2215 = vld [vmem:[%s1983 + $0x14] sm:$0x1]
  %v2216 = vld [vmem:[%s1983 + $0x18] sm:$0xf]
  %v2217 = vld [vmem:[%s1983 + $0x1c] sm:$0x1]
  %v2218 = vld [vmem:[%s1983 + $0x20] sm:$0xf]
  %v2219 = vld [vmem:[%s1983 + $0x24] sm:$0x1]
  %v2220 = vld [vmem:[%s1983 + $0x28] sm:$0xf]
  %v2221 = vld [vmem:[%s1983 + $0x2c] sm:$0x1]
  %v2222 = vld [vmem:[%s1983 + $0x30] sm:$0xf]
  %v2223 = vld [vmem:[%s1983 + $0x34] sm:$0x1]
  %v2224 = vld [vmem:[%s1983 + $0x38] sm:$0xf]
  %v2225 = vld [vmem:[%s1983 + $0x3c] sm:$0x1]
  %v2226 = vld [vmem:[%s1983 + $0x50] sm:$0xf]
  %v2227 = vld [vmem:[%s1983 + $0x54] sm:$0x1]
  %v2228 = vld [vmem:[%s1983 + $0x58] sm:$0xf]
  %v2229 = vld [vmem:[%s1983 + $0x5c] sm:$0x1]
  %v2230 = vld [vmem:[%s1983 + $0x60] sm:$0xf]
  %v2231 = vld [vmem:[%s1983 + $0x64] sm:$0x1]
  %v2232 = vld [vmem:[%s1983 + $0x68] sm:$0xf]
  %v2233 = vld [vmem:[%s1983 + $0x6c] sm:$0x1]
  %v2234 = vld [vmem:[%s1983 + $0x70] sm:$0xf]
  %v2235 = vld [vmem:[%s1983 + $0x74] sm:$0x1]
  %v2236 = vld [vmem:[%s1983 + $0x78] sm:$0xf]
  %v2237 = vld [vmem:[%s1983 + $0x7c] sm:$0x1]
  %v2238 = vld [vmem:[%s1983 + $0x80] sm:$0xf]
  %v2239 = vld [vmem:[%s1983 + $0x84] sm:$0x1]
  %v2240 = vld [vmem:[%s1983 + $0x88] sm:$0xf]
  %v2241 = vld [vmem:[%s1983 + $0x8c] sm:$0x1]
  %v2243 = vshrl.u32 %v2210, 16
  %v2245 = vrot.slane %v2243, 4
  %v2246 = vshll.u32 %v2210, 16
  %v2248 = vrot.slane %v2246, 5
  %v2249 = vor.u32 %v2245, %v2248
  %v2250 = vrot.slane %v2249, 4
  %v2252 = vshll.u32 %v2211, 16
  %v2254 = vrot.slane %v2252, 5
  %v2255 = vsel %vm240, %v2250, %v2254
  %v2257 = vshrl.u32 %v2212, 16
  %v2259 = vrot.slane %v2257, 4
  %v2260 = vshll.u32 %v2212, 16
  %v2262 = vrot.slane %v2260, 5
  %v2263 = vor.u32 %v2259, %v2262
  %v2264 = vrot.slane %v2263, 4
  %v2266 = vshll.u32 %v2213, 16
  %v2268 = vrot.slane %v2266, 5
  %v2269 = vsel %vm240, %v2264, %v2268
  %v2271 = vshrl.u32 %v2214, 16
  %v2273 = vrot.slane %v2271, 4
  %v2274 = vshll.u32 %v2214, 16
  %v2276 = vrot.slane %v2274, 5
  %v2277 = vor.u32 %v2273, %v2276
  %v2278 = vrot.slane %v2277, 4
  %v2280 = vshll.u32 %v2215, 16
  %v2282 = vrot.slane %v2280, 5
  %v2283 = vsel %vm240, %v2278, %v2282
  %v2285 = vshrl.u32 %v2216, 16
  %v2287 = vrot.slane %v2285, 4
  %v2288 = vshll.u32 %v2216, 16
  %v2290 = vrot.slane %v2288, 5
  %v2291 = vor.u32 %v2287, %v2290
  %v2292 = vrot.slane %v2291, 4
  %v2294 = vshll.u32 %v2217, 16
  %v2296 = vrot.slane %v2294, 5
  %v2297 = vsel %vm240, %v2292, %v2296
  %v2299 = vshrl.u32 %v2218, 16
  %v2301 = vrot.slane %v2299, 4
  %v2302 = vshll.u32 %v2218, 16
  %v2304 = vrot.slane %v2302, 5
  %v2305 = vor.u32 %v2301, %v2304
  %v2306 = vrot.slane %v2305, 4
  %v2308 = vshll.u32 %v2219, 16
  %v2310 = vrot.slane %v2308, 5
  %v2311 = vsel %vm240, %v2306, %v2310
  %v2313 = vshrl.u32 %v2220, 16
  %v2315 = vrot.slane %v2313, 4
  %v2316 = vshll.u32 %v2220, 16
  %v2318 = vrot.slane %v2316, 5
  %v2319 = vor.u32 %v2315, %v2318
  %v2320 = vrot.slane %v2319, 4
  %v2322 = vshll.u32 %v2221, 16
  %v2324 = vrot.slane %v2322, 5
  %v2325 = vsel %vm240, %v2320, %v2324
  %v2327 = vshrl.u32 %v2222, 16
  %v2329 = vrot.slane %v2327, 4
  %v2330 = vshll.u32 %v2222, 16
  %v2332 = vrot.slane %v2330, 5
  %v2333 = vor.u32 %v2329, %v2332
  %v2334 = vrot.slane %v2333, 4
  %v2336 = vshll.u32 %v2223, 16
  %v2338 = vrot.slane %v2336, 5
  %v2339 = vsel %vm240, %v2334, %v2338
  %v2341 = vshrl.u32 %v2224, 16
  %v2343 = vrot.slane %v2341, 4
  %v2344 = vshll.u32 %v2224, 16
  %v2346 = vrot.slane %v2344, 5
  %v2347 = vor.u32 %v2343, %v2346
  %v2348 = vrot.slane %v2347, 4
  %v2350 = vshll.u32 %v2225, 16
  %v2352 = vrot.slane %v2350, 5
  %v2353 = vsel %vm240, %v2348, %v2352
  %v2355 = vshrl.u32 %v2226, 16
  %v2357 = vrot.slane %v2355, 4
  %v2358 = vshll.u32 %v2226, 16
  %v2360 = vrot.slane %v2358, 5
  %v2361 = vor.u32 %v2357, %v2360
  %v2362 = vrot.slane %v2361, 4
  %v2364 = vshll.u32 %v2227, 16
  %v2366 = vrot.slane %v2364, 5
  %v2367 = vsel %vm240, %v2362, %v2366
  %v2369 = vshrl.u32 %v2228, 16
  %v2371 = vrot.slane %v2369, 4
  %v2372 = vshll.u32 %v2228, 16
  %v2374 = vrot.slane %v2372, 5
  %v2375 = vor.u32 %v2371, %v2374
  %v2376 = vrot.slane %v2375, 4
  %v2378 = vshll.u32 %v2229, 16
  %v2380 = vrot.slane %v2378, 5
  %v2381 = vsel %vm240, %v2376, %v2380
  %v2383 = vshrl.u32 %v2230, 16
  %v2385 = vrot.slane %v2383, 4
  %v2386 = vshll.u32 %v2230, 16
  %v2388 = vrot.slane %v2386, 5
  %v2389 = vor.u32 %v2385, %v2388
  %v2390 = vrot.slane %v2389, 4
  %v2392 = vshll.u32 %v2231, 16
  %v2394 = vrot.slane %v2392, 5
  %v2395 = vsel %vm240, %v2390, %v2394
  %v2397 = vshrl.u32 %v2232, 16
  %v2399 = vrot.slane %v2397, 4
  %v2400 = vshll.u32 %v2232, 16
  %v2402 = vrot.slane %v2400, 5
  %v2403 = vor.u32 %v2399, %v2402
  %v2404 = vrot.slane %v2403, 4
  %v2406 = vshll.u32 %v2233, 16
  %v2408 = vrot.slane %v2406, 5
  %v2409 = vsel %vm240, %v2404, %v2408
  %v2411 = vshrl.u32 %v2234, 16
  %v2413 = vrot.slane %v2411, 4
  %v2414 = vshll.u32 %v2234, 16
  %v2416 = vrot.slane %v2414, 5
  %v2417 = vor.u32 %v2413, %v2416
  %v2418 = vrot.slane %v2417, 4
  %v2420 = vshll.u32 %v2235, 16
  %v2422 = vrot.slane %v2420, 5
  %v2423 = vsel %vm240, %v2418, %v2422
  %v2425 = vshrl.u32 %v2236, 16
  %v2427 = vrot.slane %v2425, 4
  %v2428 = vshll.u32 %v2236, 16
  %v2430 = vrot.slane %v2428, 5
  %v2431 = vor.u32 %v2427, %v2430
  %v2432 = vrot.slane %v2431, 4
  %v2434 = vshll.u32 %v2237, 16
  %v2436 = vrot.slane %v2434, 5
  %v2437 = vsel %vm240, %v2432, %v2436
  %v2439 = vshrl.u32 %v2238, 16
  %v2441 = vrot.slane %v2439, 4
  %v2442 = vshll.u32 %v2238, 16
  %v2444 = vrot.slane %v2442, 5
  %v2445 = vor.u32 %v2441, %v2444
  %v2446 = vrot.slane %v2445, 4
  %v2448 = vshll.u32 %v2239, 16
  %v2450 = vrot.slane %v2448, 5
  %v2451 = vsel %vm240, %v2446, %v2450
  %v2453 = vshrl.u32 %v2240, 16
  %v2455 = vrot.slane %v2453, 4
  %v2456 = vshll.u32 %v2240, 16
  %v2458 = vrot.slane %v2456, 5
  %v2459 = vor.u32 %v2455, %v2458
  %v2460 = vrot.slane %v2459, 4
  %v2462 = vshll.u32 %v2241, 16
  %v2464 = vrot.slane %v2462, 5
  %v2465 = vsel %vm240, %v2460, %v2464
  %s2466 = scalar_lea.vmem %s1, 448
  %v2467 = vld [vmem:[%s2466] sm:$0xf]
  %v2468 = vld [vmem:[%s2466 + $0x4] sm:$0xf]
  %v2469 = vld [vmem:[%s2466 + $0x8] sm:$0xf]
  %v2470 = vld [vmem:[%s2466 + $0xc] sm:$0xf]
  %v2471 = vld [vmem:[%s2466 + $0x10] sm:$0xf]
  %v2472 = vld [vmem:[%s2466 + $0x14] sm:$0xf]
  %v2473 = vld [vmem:[%s2466 + $0x18] sm:$0xf]
  %v2474 = vld [vmem:[%s2466 + $0x1c] sm:$0xf]
  %v2475 = vld [vmem:[%s2466 + $0x20] sm:$0xf]
  %v2476 = vld [vmem:[%s2466 + $0x24] sm:$0xf]
  %v2477 = vld [vmem:[%s2466 + $0x28] sm:$0xf]
  %v2478 = vld [vmem:[%s2466 + $0x2c] sm:$0xf]
  %v2479 = vld [vmem:[%s2466 + $0x30] sm:$0xf]
  %v2480 = vld [vmem:[%s2466 + $0x34] sm:$0xf]
  %v2481 = vld [vmem:[%s2466 + $0x38] sm:$0xf]
  %v2482 = vld [vmem:[%s2466 + $0x3c] sm:$0xf]
  %v2483 = vunpack.c.l.b16 %v2255
  %v2484 = vunpack.c.l.b16 %v2269
  %v2485 = vunpack.c.l.b16 %v2283
  %v2486 = vunpack.c.l.b16 %v2297
  %v2487 = vunpack.c.l.b16 %v2311
  %v2488 = vunpack.c.l.b16 %v2325
  %v2489 = vunpack.c.l.b16 %v2339
  %v2490 = vunpack.c.l.b16 %v2353
  %v2491 = vunpack.c.l.b16 %v2367
  %v2492 = vunpack.c.l.b16 %v2381
  %v2493 = vunpack.c.l.b16 %v2395
  %v2494 = vunpack.c.l.b16 %v2409
  %v2495 = vunpack.c.l.b16 %v2423
  %v2496 = vunpack.c.l.b16 %v2437
  %v2497 = vunpack.c.l.b16 %v2451
  %v2498 = vunpack.c.l.b16 %v2465
  %v2499 = vpack.c.b16 %v2484, %v2483
  %v2500 = vpack.c.b16 %v2486, %v2485
  %v2501 = vpack.c.b16 %v2488, %v2487
  %v2502 = vpack.c.b16 %v2490, %v2489
  %v2503 = vpack.c.b16 %v2492, %v2491
  %v2504 = vpack.c.b16 %v2494, %v2493
  %v2505 = vpack.c.b16 %v2496, %v2495
  %v2506 = vpack.c.b16 %v2498, %v2497
  %v2531 = vunpack.c.l.b16 %v2467
  %v2532 = vunpack.c.l.b16 %v2468
  %v2533 = vunpack.c.l.b16 %v2469
  %v2534 = vunpack.c.l.b16 %v2470
  %v2535 = vunpack.c.l.b16 %v2471
  %v2536 = vunpack.c.l.b16 %v2472
  %v2537 = vunpack.c.l.b16 %v2473
  %v2538 = vunpack.c.l.b16 %v2474
  %v2539 = vunpack.c.l.b16 %v2475
  %v2540 = vunpack.c.l.b16 %v2476
  %v2541 = vunpack.c.l.b16 %v2477
  %v2542 = vunpack.c.l.b16 %v2478
  %v2543 = vunpack.c.l.b16 %v2479
  %v2544 = vunpack.c.l.b16 %v2480
  %v2545 = vunpack.c.l.b16 %v2481
  %v2546 = vunpack.c.l.b16 %v2482
  %v2547 = vpack.c.b16 %v2532, %v2531
  %v2548 = vpack.c.b16 %v2534, %v2533
  %v2549 = vpack.c.b16 %v2536, %v2535
  %v2550 = vpack.c.b16 %v2538, %v2537
  %v2551 = vpack.c.b16 %v2540, %v2539
  %v2552 = vpack.c.b16 %v2542, %v2541
  %v2553 = vpack.c.b16 %v2544, %v2543
  %v2554 = vpack.c.b16 %v2546, %v2545
  %2563 = vmatpush.bf16.msra.mxu0 %v2554
  %2564 = vmatpush.bf16.msra.mxu0 %v2553
  %2565 = vmatpush.bf16.msra.mxu0 %v2552
  %2566 = vmatpush.bf16.msra.mxu0 %v2551
  %2567 = vmatpush.bf16.msra.mxu0 %v2550
  %2568 = vmatpush.bf16.msra.mxu0 %v2549
  %2569 = vmatpush.bf16.msra.mxu0 %v2548
  %2570 = vmatpush.bf16.msra.mxu0 %v2547
  %2571 = vmatmul.bf16.gmra.mxu0 %v2499
  %v2572 = vpop.f32.mrf.mxu0
  %v2573 = vadd.f32 0.0, %v2572
  %v2574 = vpop.f32.mrf.mxu0
  %v2575 = vadd.f32 0.0, %v2574
  %2576 = vmatmul.bf16.gmra.mxu0 %v2500
  %v2577 = vpop.f32.mrf.mxu0
  %v2578 = vadd.f32 0.0, %v2577
  %v2579 = vpop.f32.mrf.mxu0
  %v2580 = vadd.f32 0.0, %v2579
  %2581 = vmatmul.bf16.gmra.mxu0 %v2501
  %v2582 = vpop.f32.mrf.mxu0
  %v2583 = vadd.f32 0.0, %v2582
  %v2584 = vpop.f32.mrf.mxu0
  %v2585 = vadd.f32 0.0, %v2584
  %2586 = vmatmul.bf16.gmra.mxu0 %v2502
  %v2587 = vpop.f32.mrf.mxu0
  %v2588 = vadd.f32 0.0, %v2587
  %v2589 = vpop.f32.mrf.mxu0
  %v2590 = vadd.f32 0.0, %v2589
  %2591 = vmatmul.bf16.gmra.mxu0 %v2503
  %v2592 = vpop.f32.mrf.mxu0
  %v2593 = vadd.f32 0.0, %v2592
  %v2594 = vpop.f32.mrf.mxu0
  %v2595 = vadd.f32 0.0, %v2594
  %2596 = vmatmul.bf16.gmra.mxu0 %v2504
  %v2597 = vpop.f32.mrf.mxu0
  %v2598 = vadd.f32 0.0, %v2597
  %v2599 = vpop.f32.mrf.mxu0
  %v2600 = vadd.f32 0.0, %v2599
  %2601 = vmatmul.bf16.gmra.mxu0 %v2505
  %v2602 = vpop.f32.mrf.mxu0
  %v2603 = vadd.f32 0.0, %v2602
  %v2604 = vpop.f32.mrf.mxu0
  %v2605 = vadd.f32 0.0, %v2604
  %2606 = vmatmul.bf16.gmra.mxu0 %v2506
  %v2607 = vpop.f32.mrf.mxu0
  %v2608 = vadd.f32 0.0, %v2607
  %v2609 = vpop.f32.mrf.mxu0
  %v2610 = vadd.f32 0.0, %v2609
  %2611 = vdwg.mxu0
  %v2612 = vld [vmem:[%s2] sm:$0xff]
  %v2613 = vld [vmem:[%s2 + $0x8] sm:$0xff]
  %v2614 = vld [vmem:[%s2 + $0x10] sm:$0xff]
  %v2615 = vld [vmem:[%s2 + $0x18] sm:$0xff]
  %v2616 = vld [vmem:[%s2 + $0x20] sm:$0xff]
  %v2617 = vld [vmem:[%s2 + $0x28] sm:$0xff]
  %v2618 = vld [vmem:[%s2 + $0x30] sm:$0xff]
  %v2619 = vld [vmem:[%s2 + $0x38] sm:$0xff]
  %v2620 = vld [vmem:[%s2 + $0x40] sm:$0xff]
  %v2621 = vld [vmem:[%s2 + $0x48] sm:$0xff]
  %v2622 = vld [vmem:[%s2 + $0x50] sm:$0xff]
  %v2623 = vld [vmem:[%s2 + $0x58] sm:$0xff]
  %v2624 = vld [vmem:[%s2 + $0x60] sm:$0xff]
  %v2625 = vld [vmem:[%s2 + $0x68] sm:$0xff]
  %v2626 = vld [vmem:[%s2 + $0x70] sm:$0xff]
  %v2627 = vld [vmem:[%s2 + $0x78] sm:$0xff]
  %v2628 = vadd.f32 %v2612, %v2573
  %v2629 = vadd.f32 %v2613, %v2575
  %v2630 = vadd.f32 %v2614, %v2578
  %v2631 = vadd.f32 %v2615, %v2580
  %v2632 = vadd.f32 %v2616, %v2583
  %v2633 = vadd.f32 %v2617, %v2585
  %v2634 = vadd.f32 %v2618, %v2588
  %v2635 = vadd.f32 %v2619, %v2590
  %v2636 = vadd.f32 %v2620, %v2593
  %v2637 = vadd.f32 %v2621, %v2595
  %v2638 = vadd.f32 %v2622, %v2598
  %v2639 = vadd.f32 %v2623, %v2600
  %v2640 = vadd.f32 %v2624, %v2603
  %v2641 = vadd.f32 %v2625, %v2605
  %v2642 = vadd.f32 %v2626, %v2608
  %v2643 = vadd.f32 %v2627, %v2610
  %2644 = vst [vmem:[%s2] sm:$0xff] %v2628
  %2645 = vst [vmem:[%s2 + $0x8] sm:$0xff] %v2629
  %2646 = vst [vmem:[%s2 + $0x10] sm:$0xff] %v2630
  %2647 = vst [vmem:[%s2 + $0x18] sm:$0xff] %v2631
  %2648 = vst [vmem:[%s2 + $0x20] sm:$0xff] %v2632
  %2649 = vst [vmem:[%s2 + $0x28] sm:$0xff] %v2633
  %2650 = vst [vmem:[%s2 + $0x30] sm:$0xff] %v2634
  %2651 = vst [vmem:[%s2 + $0x38] sm:$0xff] %v2635
  %2652 = vst [vmem:[%s2 + $0x40] sm:$0xff] %v2636
  %2653 = vst [vmem:[%s2 + $0x48] sm:$0xff] %v2637
  %2654 = vst [vmem:[%s2 + $0x50] sm:$0xff] %v2638
  %2655 = vst [vmem:[%s2 + $0x58] sm:$0xff] %v2639
  %2656 = vst [vmem:[%s2 + $0x60] sm:$0xff] %v2640
  %2657 = vst [vmem:[%s2 + $0x68] sm:$0xff] %v2641
  %2658 = vst [vmem:[%s2 + $0x70] sm:$0xff] %v2642
  %2659 = vst [vmem:[%s2 + $0x78] sm:$0xff] %v2643
  %v2660 = vld [vmem:[%s1983] sm:$0xe]
  %v2661 = vld [vmem:[%s1983 + $0x4] sm:$0x1]
  %v2662 = vld [vmem:[%s1983 + $0x8] sm:$0xe]
  %v2663 = vld [vmem:[%s1983 + $0xc] sm:$0x1]
  %v2664 = vld [vmem:[%s1983 + $0x10] sm:$0xe]
  %v2665 = vld [vmem:[%s1983 + $0x14] sm:$0x1]
  %v2666 = vld [vmem:[%s1983 + $0x18] sm:$0xe]
  %v2667 = vld [vmem:[%s1983 + $0x1c] sm:$0x1]
  %v2668 = vld [vmem:[%s1983 + $0x20] sm:$0xe]
  %v2669 = vld [vmem:[%s1983 + $0x24] sm:$0x1]
  %v2670 = vld [vmem:[%s1983 + $0x28] sm:$0xe]
  %v2671 = vld [vmem:[%s1983 + $0x2c] sm:$0x1]
  %v2672 = vld [vmem:[%s1983 + $0x30] sm:$0xe]
  %v2673 = vld [vmem:[%s1983 + $0x34] sm:$0x1]
  %v2674 = vld [vmem:[%s1983 + $0x38] sm:$0xe]
  %v2675 = vld [vmem:[%s1983 + $0x3c] sm:$0x1]
  %v2676 = vld [vmem:[%s1983 + $0x50] sm:$0xe]
  %v2677 = vld [vmem:[%s1983 + $0x54] sm:$0x1]
  %v2678 = vld [vmem:[%s1983 + $0x58] sm:$0xe]
  %v2679 = vld [vmem:[%s1983 + $0x5c] sm:$0x1]
  %v2680 = vld [vmem:[%s1983 + $0x60] sm:$0xe]
  %v2681 = vld [vmem:[%s1983 + $0x64] sm:$0x1]
  %v2682 = vld [vmem:[%s1983 + $0x68] sm:$0xe]
  %v2683 = vld [vmem:[%s1983 + $0x6c] sm:$0x1]
  %v2684 = vld [vmem:[%s1983 + $0x70] sm:$0xe]
  %v2685 = vld [vmem:[%s1983 + $0x74] sm:$0x1]
  %v2686 = vld [vmem:[%s1983 + $0x78] sm:$0xe]
  %v2687 = vld [vmem:[%s1983 + $0x7c] sm:$0x1]
  %v2688 = vld [vmem:[%s1983 + $0x80] sm:$0xe]
  %v2689 = vld [vmem:[%s1983 + $0x84] sm:$0x1]
  %v2690 = vld [vmem:[%s1983 + $0x88] sm:$0xe]
  %v2691 = vld [vmem:[%s1983 + $0x8c] sm:$0x1]
  %v2724 = vrot.slane %v2660, 5
  %v2725 = vrot.slane %v2724, 4
  %v2726 = vrot.slane %v2661, 5
  %v2727 = vsel %vm725, %v2725, %v2726
  %v2728 = vrot.slane %v2662, 5
  %v2729 = vrot.slane %v2728, 4
  %v2730 = vrot.slane %v2663, 5
  %v2731 = vsel %vm725, %v2729, %v2730
  %v2732 = vrot.slane %v2664, 5
  %v2733 = vrot.slane %v2732, 4
  %v2734 = vrot.slane %v2665, 5
  %v2735 = vsel %vm725, %v2733, %v2734
  %v2736 = vrot.slane %v2666, 5
  %v2737 = vrot.slane %v2736, 4
  %v2738 = vrot.slane %v2667, 5
  %v2739 = vsel %vm725, %v2737, %v2738
  %v2740 = vrot.slane %v2668, 5
  %v2741 = vrot.slane %v2740, 4
  %v2742 = vrot.slane %v2669, 5
  %v2743 = vsel %vm725, %v2741, %v2742
  %v2744 = vrot.slane %v2670, 5
  %v2745 = vrot.slane %v2744, 4
  %v2746 = vrot.slane %v2671, 5
  %v2747 = vsel %vm725, %v2745, %v2746
  %v2748 = vrot.slane %v2672, 5
  %v2749 = vrot.slane %v2748, 4
  %v2750 = vrot.slane %v2673, 5
  %v2751 = vsel %vm725, %v2749, %v2750
  %v2752 = vrot.slane %v2674, 5
  %v2753 = vrot.slane %v2752, 4
  %v2754 = vrot.slane %v2675, 5
  %v2755 = vsel %vm725, %v2753, %v2754
  %v2756 = vrot.slane %v2676, 5
  %v2757 = vrot.slane %v2756, 4
  %v2758 = vrot.slane %v2677, 5
  %v2759 = vsel %vm725, %v2757, %v2758
  %v2760 = vrot.slane %v2678, 5
  %v2761 = vrot.slane %v2760, 4
  %v2762 = vrot.slane %v2679, 5
  %v2763 = vsel %vm725, %v2761, %v2762
  %v2764 = vrot.slane %v2680, 5
  %v2765 = vrot.slane %v2764, 4
  %v2766 = vrot.slane %v2681, 5
  %v2767 = vsel %vm725, %v2765, %v2766
  %v2768 = vrot.slane %v2682, 5
  %v2769 = vrot.slane %v2768, 4
  %v2770 = vrot.slane %v2683, 5
  %v2771 = vsel %vm725, %v2769, %v2770
  %v2772 = vrot.slane %v2684, 5
  %v2773 = vrot.slane %v2772, 4
  %v2774 = vrot.slane %v2685, 5
  %v2775 = vsel %vm725, %v2773, %v2774
  %v2776 = vrot.slane %v2686, 5
  %v2777 = vrot.slane %v2776, 4
  %v2778 = vrot.slane %v2687, 5
  %v2779 = vsel %vm725, %v2777, %v2778
  %v2780 = vrot.slane %v2688, 5
  %v2781 = vrot.slane %v2780, 4
  %v2782 = vrot.slane %v2689, 5
  %v2783 = vsel %vm725, %v2781, %v2782
  %v2784 = vrot.slane %v2690, 5
  %v2785 = vrot.slane %v2784, 4
  %v2786 = vrot.slane %v2691, 5
  %v2787 = vsel %vm725, %v2785, %v2786
  %s2788 = scalar_lea.vmem %s1, 512
  %v2789 = vld [vmem:[%s2788] sm:$0xf]
  %v2790 = vld [vmem:[%s2788 + $0x4] sm:$0xf]
  %v2791 = vld [vmem:[%s2788 + $0x8] sm:$0xf]
  %v2792 = vld [vmem:[%s2788 + $0xc] sm:$0xf]
  %v2793 = vld [vmem:[%s2788 + $0x10] sm:$0xf]
  %v2794 = vld [vmem:[%s2788 + $0x14] sm:$0xf]
  %v2795 = vld [vmem:[%s2788 + $0x18] sm:$0xf]
  %v2796 = vld [vmem:[%s2788 + $0x1c] sm:$0xf]
  %v2797 = vld [vmem:[%s2788 + $0x20] sm:$0xf]
  %v2798 = vld [vmem:[%s2788 + $0x24] sm:$0xf]
  %v2799 = vld [vmem:[%s2788 + $0x28] sm:$0xf]
  %v2800 = vld [vmem:[%s2788 + $0x2c] sm:$0xf]
  %v2801 = vld [vmem:[%s2788 + $0x30] sm:$0xf]
  %v2802 = vld [vmem:[%s2788 + $0x34] sm:$0xf]
  %v2803 = vld [vmem:[%s2788 + $0x38] sm:$0xf]
  %v2804 = vld [vmem:[%s2788 + $0x3c] sm:$0xf]
  %v2805 = vunpack.c.l.b16 %v2727
  %v2806 = vunpack.c.l.b16 %v2731
  %v2807 = vunpack.c.l.b16 %v2735
  %v2808 = vunpack.c.l.b16 %v2739
  %v2809 = vunpack.c.l.b16 %v2743
  %v2810 = vunpack.c.l.b16 %v2747
  %v2811 = vunpack.c.l.b16 %v2751
  %v2812 = vunpack.c.l.b16 %v2755
  %v2813 = vunpack.c.l.b16 %v2759
  %v2814 = vunpack.c.l.b16 %v2763
  %v2815 = vunpack.c.l.b16 %v2767
  %v2816 = vunpack.c.l.b16 %v2771
  %v2817 = vunpack.c.l.b16 %v2775
  %v2818 = vunpack.c.l.b16 %v2779
  %v2819 = vunpack.c.l.b16 %v2783
  %v2820 = vunpack.c.l.b16 %v2787
  %v2821 = vpack.c.b16 %v2806, %v2805
  %v2822 = vpack.c.b16 %v2808, %v2807
  %v2823 = vpack.c.b16 %v2810, %v2809
  %v2824 = vpack.c.b16 %v2812, %v2811
  %v2825 = vpack.c.b16 %v2814, %v2813
  %v2826 = vpack.c.b16 %v2816, %v2815
  %v2827 = vpack.c.b16 %v2818, %v2817
  %v2828 = vpack.c.b16 %v2820, %v2819
  %v2853 = vunpack.c.l.b16 %v2789
  %v2854 = vunpack.c.l.b16 %v2790
  %v2855 = vunpack.c.l.b16 %v2791
  %v2856 = vunpack.c.l.b16 %v2792
  %v2857 = vunpack.c.l.b16 %v2793
  %v2858 = vunpack.c.l.b16 %v2794
  %v2859 = vunpack.c.l.b16 %v2795
  %v2860 = vunpack.c.l.b16 %v2796
  %v2861 = vunpack.c.l.b16 %v2797
  %v2862 = vunpack.c.l.b16 %v2798
  %v2863 = vunpack.c.l.b16 %v2799
  %v2864 = vunpack.c.l.b16 %v2800
  %v2865 = vunpack.c.l.b16 %v2801
  %v2866 = vunpack.c.l.b16 %v2802
  %v2867 = vunpack.c.l.b16 %v2803
  %v2868 = vunpack.c.l.b16 %v2804
  %v2869 = vpack.c.b16 %v2854, %v2853
  %v2870 = vpack.c.b16 %v2856, %v2855
  %v2871 = vpack.c.b16 %v2858, %v2857
  %v2872 = vpack.c.b16 %v2860, %v2859
  %v2873 = vpack.c.b16 %v2862, %v2861
  %v2874 = vpack.c.b16 %v2864, %v2863
  %v2875 = vpack.c.b16 %v2866, %v2865
  %v2876 = vpack.c.b16 %v2868, %v2867
  %2885 = vmatpush.bf16.msra.mxu0 %v2876
  %2886 = vmatpush.bf16.msra.mxu0 %v2875
  %2887 = vmatpush.bf16.msra.mxu0 %v2874
  %2888 = vmatpush.bf16.msra.mxu0 %v2873
  %2889 = vmatpush.bf16.msra.mxu0 %v2872
  %2890 = vmatpush.bf16.msra.mxu0 %v2871
  %2891 = vmatpush.bf16.msra.mxu0 %v2870
  %2892 = vmatpush.bf16.msra.mxu0 %v2869
  %2893 = vmatmul.bf16.gmra.mxu0 %v2821
  %v2894 = vpop.f32.mrf.mxu0
  %v2895 = vadd.f32 0.0, %v2894
  %v2896 = vpop.f32.mrf.mxu0
  %v2897 = vadd.f32 0.0, %v2896
  %2898 = vmatmul.bf16.gmra.mxu0 %v2822
  %v2899 = vpop.f32.mrf.mxu0
  %v2900 = vadd.f32 0.0, %v2899
  %v2901 = vpop.f32.mrf.mxu0
  %v2902 = vadd.f32 0.0, %v2901
  %2903 = vmatmul.bf16.gmra.mxu0 %v2823
  %v2904 = vpop.f32.mrf.mxu0
  %v2905 = vadd.f32 0.0, %v2904
  %v2906 = vpop.f32.mrf.mxu0
  %v2907 = vadd.f32 0.0, %v2906
  %2908 = vmatmul.bf16.gmra.mxu0 %v2824
  %v2909 = vpop.f32.mrf.mxu0
  %v2910 = vadd.f32 0.0, %v2909
  %v2911 = vpop.f32.mrf.mxu0
  %v2912 = vadd.f32 0.0, %v2911
  %2913 = vmatmul.bf16.gmra.mxu0 %v2825
  %v2914 = vpop.f32.mrf.mxu0
  %v2915 = vadd.f32 0.0, %v2914
  %v2916 = vpop.f32.mrf.mxu0
  %v2917 = vadd.f32 0.0, %v2916
  %2918 = vmatmul.bf16.gmra.mxu0 %v2826
  %v2919 = vpop.f32.mrf.mxu0
  %v2920 = vadd.f32 0.0, %v2919
  %v2921 = vpop.f32.mrf.mxu0
  %v2922 = vadd.f32 0.0, %v2921
  %2923 = vmatmul.bf16.gmra.mxu0 %v2827
  %v2924 = vpop.f32.mrf.mxu0
  %v2925 = vadd.f32 0.0, %v2924
  %v2926 = vpop.f32.mrf.mxu0
  %v2927 = vadd.f32 0.0, %v2926
  %2928 = vmatmul.bf16.gmra.mxu0 %v2828
  %v2929 = vpop.f32.mrf.mxu0
  %v2930 = vadd.f32 0.0, %v2929
  %v2931 = vpop.f32.mrf.mxu0
  %v2932 = vadd.f32 0.0, %v2931
  %2933 = vdwg.mxu0
  %v2934 = vld [vmem:[%s2] sm:$0xff]
  %v2935 = vld [vmem:[%s2 + $0x8] sm:$0xff]
  %v2936 = vld [vmem:[%s2 + $0x10] sm:$0xff]
  %v2937 = vld [vmem:[%s2 + $0x18] sm:$0xff]
  %v2938 = vld [vmem:[%s2 + $0x20] sm:$0xff]
  %v2939 = vld [vmem:[%s2 + $0x28] sm:$0xff]
  %v2940 = vld [vmem:[%s2 + $0x30] sm:$0xff]
  %v2941 = vld [vmem:[%s2 + $0x38] sm:$0xff]
  %v2942 = vld [vmem:[%s2 + $0x40] sm:$0xff]
  %v2943 = vld [vmem:[%s2 + $0x48] sm:$0xff]
  %v2944 = vld [vmem:[%s2 + $0x50] sm:$0xff]
  %v2945 = vld [vmem:[%s2 + $0x58] sm:$0xff]
  %v2946 = vld [vmem:[%s2 + $0x60] sm:$0xff]
  %v2947 = vld [vmem:[%s2 + $0x68] sm:$0xff]
  %v2948 = vld [vmem:[%s2 + $0x70] sm:$0xff]
  %v2949 = vld [vmem:[%s2 + $0x78] sm:$0xff]
  %v2950 = vadd.f32 %v2934, %v2895
  %v2951 = vadd.f32 %v2935, %v2897
  %v2952 = vadd.f32 %v2936, %v2900
  %v2953 = vadd.f32 %v2937, %v2902
  %v2954 = vadd.f32 %v2938, %v2905
  %v2955 = vadd.f32 %v2939, %v2907
  %v2956 = vadd.f32 %v2940, %v2910
  %v2957 = vadd.f32 %v2941, %v2912
  %v2958 = vadd.f32 %v2942, %v2915
  %v2959 = vadd.f32 %v2943, %v2917
  %v2960 = vadd.f32 %v2944, %v2920
  %v2961 = vadd.f32 %v2945, %v2922
  %v2962 = vadd.f32 %v2946, %v2925
  %v2963 = vadd.f32 %v2947, %v2927
  %v2964 = vadd.f32 %v2948, %v2930
  %v2965 = vadd.f32 %v2949, %v2932
  %2966 = vst [vmem:[%s2] sm:$0xff] %v2950
  %2967 = vst [vmem:[%s2 + $0x8] sm:$0xff] %v2951
  %2968 = vst [vmem:[%s2 + $0x10] sm:$0xff] %v2952
  %2969 = vst [vmem:[%s2 + $0x18] sm:$0xff] %v2953
  %2970 = vst [vmem:[%s2 + $0x20] sm:$0xff] %v2954
  %2971 = vst [vmem:[%s2 + $0x28] sm:$0xff] %v2955
  %2972 = vst [vmem:[%s2 + $0x30] sm:$0xff] %v2956
  %2973 = vst [vmem:[%s2 + $0x38] sm:$0xff] %v2957
  %2974 = vst [vmem:[%s2 + $0x40] sm:$0xff] %v2958
  %2975 = vst [vmem:[%s2 + $0x48] sm:$0xff] %v2959
  %2976 = vst [vmem:[%s2 + $0x50] sm:$0xff] %v2960
  %2977 = vst [vmem:[%s2 + $0x58] sm:$0xff] %v2961
  %2978 = vst [vmem:[%s2 + $0x60] sm:$0xff] %v2962
  %2979 = vst [vmem:[%s2 + $0x68] sm:$0xff] %v2963
  %2980 = vst [vmem:[%s2 + $0x70] sm:$0xff] %v2964
  %2981 = vst [vmem:[%s2 + $0x78] sm:$0xff] %v2965
  %v2982 = vld [vmem:[%s2] sm:$0xff]
  %v2983 = vld [vmem:[%s2 + $0x8] sm:$0xff]
  %v2984 = vld [vmem:[%s2 + $0x10] sm:$0xff]
  %v2985 = vld [vmem:[%s2 + $0x18] sm:$0xff]
  %v2986 = vld [vmem:[%s2 + $0x20] sm:$0xff]
  %v2987 = vld [vmem:[%s2 + $0x28] sm:$0xff]
  %v2988 = vld [vmem:[%s2 + $0x30] sm:$0xff]
  %v2989 = vld [vmem:[%s2 + $0x38] sm:$0xff]
  %v2990 = vld [vmem:[%s2 + $0x40] sm:$0xff]
  %v2991 = vld [vmem:[%s2 + $0x48] sm:$0xff]
  %v2992 = vld [vmem:[%s2 + $0x50] sm:$0xff]
  %v2993 = vld [vmem:[%s2 + $0x58] sm:$0xff]
  %v2994 = vld [vmem:[%s2 + $0x60] sm:$0xff]
  %v2995 = vld [vmem:[%s2 + $0x68] sm:$0xff]
  %v2996 = vld [vmem:[%s2 + $0x70] sm:$0xff]
  %v2997 = vld [vmem:[%s2 + $0x78] sm:$0xff]
  %v2998 = vadd.f32 %v2982, %v2983
  %v2999 = vadd.f32 %v2998, %v2984
  %v3000 = vadd.f32 %v2999, %v2985
  %v3001 = vadd.f32 %v3000, %v2986
  %v3002 = vadd.f32 %v3001, %v2987
  %v3003 = vadd.f32 %v3002, %v2988
  %v3004 = vadd.f32 %v3003, %v2989
  %v3005 = vadd.f32 %v3004, %v2990
  %v3006 = vadd.f32 %v3005, %v2991
  %v3007 = vadd.f32 %v3006, %v2992
  %v3008 = vadd.f32 %v3007, %v2993
  %v3009 = vadd.f32 %v3008, %v2994
  %v3010 = vadd.f32 %v3009, %v2995
  %v3011 = vadd.f32 %v3010, %v2996
  %v3012 = vadd.f32 %v3011, %v2997
  %v3013 = vrot.slane %v3012, 4
  %v3014 = vadd.f32 %v3012, %v3013
  %v3015 = vrot.slane %v3014, 2
  %v3016 = vadd.f32 %v3014, %v3015
  %v3017 = vrot.slane %v3016, 1
  %v3018 = vadd.f32 %v3016, %v3017
  %v3019 = vmul.f32 %v2982, %v2982
  %v3020 = vmul.f32 %v2983, %v2983
  %v3021 = vmul.f32 %v2984, %v2984
  %v3022 = vmul.f32 %v2985, %v2985
  %v3023 = vmul.f32 %v2986, %v2986
  %v3024 = vmul.f32 %v2987, %v2987
  %v3025 = vmul.f32 %v2988, %v2988
  %v3026 = vmul.f32 %v2989, %v2989
  %v3027 = vmul.f32 %v2990, %v2990
  %v3028 = vmul.f32 %v2991, %v2991
  %v3029 = vmul.f32 %v2992, %v2992
  %v3030 = vmul.f32 %v2993, %v2993
  %v3031 = vmul.f32 %v2994, %v2994
  %v3032 = vmul.f32 %v2995, %v2995
  %v3033 = vmul.f32 %v2996, %v2996
  %v3034 = vmul.f32 %v2997, %v2997
  %v3035 = vadd.f32 %v3019, %v3020
  %v3036 = vadd.f32 %v3035, %v3021
  %v3037 = vadd.f32 %v3036, %v3022
  %v3038 = vadd.f32 %v3037, %v3023
  %v3039 = vadd.f32 %v3038, %v3024
  %v3040 = vadd.f32 %v3039, %v3025
  %v3041 = vadd.f32 %v3040, %v3026
  %v3042 = vadd.f32 %v3041, %v3027
  %v3043 = vadd.f32 %v3042, %v3028
  %v3044 = vadd.f32 %v3043, %v3029
  %v3045 = vadd.f32 %v3044, %v3030
  %v3046 = vadd.f32 %v3045, %v3031
  %v3047 = vadd.f32 %v3046, %v3032
  %v3048 = vadd.f32 %v3047, %v3033
  %v3049 = vadd.f32 %v3048, %v3034
  %v3050 = vrot.slane %v3049, 4
  %v3051 = vadd.f32 %v3049, %v3050
  %v3052 = vrot.slane %v3051, 2
  %v3053 = vadd.f32 %v3051, %v3052
  %v3054 = vrot.slane %v3053, 1
  %v3055 = vadd.f32 %v3053, %v3054
  %vm3056 = vcmask 1040384
  %v3057 = vsel %vm3056, %v3018, %v3055
  %3058 = vst [vmem:[%s3] sm:$0x3] %v3057
  // Predicated region
  $region10: #{basic_block_forward.6} parent=0 // pred_check
    _
  $region11: #{basic_block_forward.6} parent=0 // pred_check_branch
    %3060 = sbr.rel (0) target = $region13
  $region12: #{basic_block_forward.6} parent=0 // pred_region
    _
  $region13: #{basic_block_forward.6} parent=0 // pred_fallthru
    _
  // Predicated region
  $region14: #{basic_block_forward.6} parent=0 // pred_check
    _
  $region15: #{basic_block_forward.6} parent=0 // pred_check_branch
    %3062 = sbr.rel (0) target = $region17
  $region16: #{basic_block_forward.6} parent=0 // pred_region
    _
  $region17: #{basic_block_forward.6} parent=0 // pred_fallthru
    _
  // Predicated region
  $region18: #{basic_block_forward.6} parent=0 // pred_check
    _
  $region19: #{basic_block_forward.6} parent=0 // pred_check_branch
    %3064 = sbr.rel (0) target = $region21
  $region20: #{basic_block_forward.6} parent=0 // pred_region
    _
  $region21: #{basic_block_forward.6} parent=0 // pred_fallthru
    _
  // Predicated region
  $region22: #{basic_block_forward.6} parent=0 // pred_check
    _
  $region23: #{basic_block_forward.6} parent=0 // pred_check_branch
    %3066 = sbr.rel (0) target = $region25
  $region24: #{basic_block_forward.6} parent=0 // pred_region
    _
  $region25: #{basic_block_forward.6} parent=0 // pred_fallthru
    _

</llo_original>
